<compile_context>
chip_gen: v6e
topology: v6e:2x2x1
jax: 0.10.0
libtpu: 0.0.40
codegen_flags: <defaults>
</compile_context>

<pallas_src>
import jax
import jax.numpy as jnp
from jax.experimental import pallas as pl
from jax.experimental.pallas import tpu as pltpu

DIMENSION = 8          # input feature dimension
HIDDEN = 50            # hidden width of every prop / lateral layer
N_PROP = 9             # number of prop/lateral blocks
BLOCK = 64             # per-sub-tile lane block: [hidden(50) | x0(8) | pad(6)]
X0_OFF = HIDDEN        # x0 lanes start inside a block
LANES = 2 * BLOCK      # 128: two batch sub-tiles per vreg row


def _softplus(x):
    # numerically stable softplus, elementwise (VPU + EUP)
    return jnp.maximum(x, 0.0) + jnp.log1p(jnp.exp(-jnp.abs(x)))


def _round_up(n, m):
    return ((n + m - 1) // m) * m


def entropy_kernel(x0_ref, w_in_ref, b_in_ref, wp_ref, bp_ref,
                   w_out_ref, b_out_ref, s_ref):
    """One batch tile; all weights VMEM-resident.

    Lane layout of every activation row (two batch sub-tiles A|B):
      [ h_A(50) | x0_A(8) | 0(6) | h_B(50) | x0_B(8) | 0(6) ]

    x0_ref:    (BT2, 16)      packed input tile (A in lanes 0..7, B in 8..15), f32
    w_in_ref:  (16, 128)      block-diag input weight + x0 pass-through identity
    b_in_ref:  (1, 128)       input bias (0 on x0/pad lanes), f32
    wp_ref:    (9, 128, 128)  block-diag [wp; wl] + identity on x0 lanes
    bp_ref:    (9, 1, 128)    fused prop+lateral biases (0 on x0/pad lanes), f32
    w_out_ref: (128, 2)       [w_out; wl_out; 0] per sub-tile column
    b_out_ref: (1, 2)         fused output bias, f32
    s_ref:     (BT2, 2)       output tile (col 0 = sub-tile A, col 1 = sub-tile B)
    """
    w_dt = w_in_ref.dtype
    bt2 = x0_ref.shape[0]

    lane = jax.lax.broadcasted_iota(jnp.int32, (bt2, LANES), 1)
    # hidden lanes get -softplus; x0 / pad lanes pass straight through
    is_hid = (lane & (BLOCK - 1)) < HIDDEN

    # input layer (K=16): hidden lanes get w_in @ x0, x0 lanes get x0 via identity
    z = jnp.dot(x0_ref[...].astype(w_dt), w_in_ref[...],
                preferred_element_type=jnp.float32) + b_in_ref[...]
    x = jnp.where(is_hid, -_softplus(z), z)

    # nine fused prop+lateral blocks: one full 128x128 matmul each (static unroll
    # keeps MXU / EUP pushes interleavable by the scheduler)
    for i in range(N_PROP):
        z = jnp.dot(x.astype(w_dt), wp_ref[i],
                    preferred_element_type=jnp.float32) + bp_ref[i]
        x = jnp.where(is_hid, -_softplus(z), z)

    # output layer: one K=128, N=2 matmul (one column per batch sub-tile)
    z_out = jnp.dot(x.astype(w_dt), w_out_ref[...],
                    preferred_element_type=jnp.float32) + b_out_ref[...]
    s_ref[...] = -_softplus(z_out)


def _pack_params(p, weight_dtype):
    """Pad / fuse the natural-shape parameters into the packed kernel layout."""
    f32 = jnp.float32
    eye = jnp.eye(DIMENSION, dtype=f32)

    def block_diag2(m):
        a, b = m.shape
        z = jnp.zeros((2 * a, 2 * b), f32)
        return z.at[:a, :b].set(m).at[a:, b:].set(m)

    def tile2(v):                                   # (BLOCK,) -> (1, 128)
        return jnp.tile(v, 2).reshape(1, LANES)

    # input layer block: x0(8) -> [hidden(50) | x0 identity(8) | pad(6)]
    w_in_blk = jnp.zeros((DIMENSION, BLOCK), f32)
    w_in_blk = w_in_blk.at[:, :HIDDEN].set(p["w_in"])
    w_in_blk = w_in_blk.at[:, X0_OFF:X0_OFF + DIMENSION].set(eye)
    w_in = block_diag2(w_in_blk).astype(weight_dtype)                     # (16, 128)
    b_in = tile2(jnp.zeros((BLOCK,), f32).at[:HIDDEN].set(p["b_in"]))     # (1, 128)

    wp_blocks, bp_rows = [], []
    for i in range(N_PROP):
        blk = jnp.zeros((BLOCK, BLOCK), f32)
        blk = blk.at[:HIDDEN, :HIDDEN].set(p["wp"][i])                    # prop
        blk = blk.at[X0_OFF:X0_OFF + DIMENSION, :HIDDEN].set(p["wl"][i])  # lateral
        blk = blk.at[X0_OFF:X0_OFF + DIMENSION,
                     X0_OFF:X0_OFF + DIMENSION].set(eye)                  # keep x0
        wp_blocks.append(block_diag2(blk))
        bias = jnp.zeros((BLOCK,), f32).at[:HIDDEN].set(p["bp"][i] + p["bl"][i])
        bp_rows.append(jnp.tile(bias, 2))
    wp = jnp.stack(wp_blocks).astype(weight_dtype)                        # (9, 128, 128)
    bp = jnp.stack(bp_rows).reshape(N_PROP, 1, LANES)                     # (9, 1, 128)

    out_col = jnp.zeros((BLOCK,), f32)
    out_col = out_col.at[:HIDDEN].set(p["w_out"][:, 0])
    out_col = out_col.at[X0_OFF:X0_OFF + DIMENSION].set(p["wl_out"][:, 0])
    w_out = jnp.zeros((LANES, 2), f32)
    w_out = w_out.at[:BLOCK, 0].set(out_col).at[BLOCK:, 1].set(out_col)
    w_out = w_out.astype(weight_dtype)                                    # (128, 2)
    b_out = jnp.tile((p["b_out"] + p["bl_out"]).reshape(1, 1), (1, 2))    # (1, 2)

    return (w_in, b_in, wp, bp, w_out, b_out)


def entropy_network(x0, params, *, b_tile=2048, weight_dtype=jnp.bfloat16):
    """Forward pass.  b_tile = original batch rows per grid step (two sub-tiles/step).

    weight_dtype=jnp.bfloat16 feeds the MXU bf16 operands with f32 accumulation at
    default precision; pass jnp.float32 for an f32-operand path (still no HIGHEST).
    On single-TC parts (v5e/v6e) raise b_tile for very large batches to amortize
    per-grid-step overhead; weights are resident so larger tiles only cost
    activation VMEM.
    """
    B = x0.shape[0]
    assert x0.shape[1] == DIMENSION
    x0 = x0.astype(jnp.float32)

    # 2-way lane packing: original row r pairs with row (B_pad//2 + r).
    n_half = pl.cdiv(B, 2)
    # keep >= 2 grid steps when the batch allows it (v7x shards the "parallel"
    # batch axis across its 2 TensorCores)
    bt2 = max(8, min(b_tile // 2, _round_up(pl.cdiv(n_half, 2), 8)))
    Bh = _round_up(n_half, bt2)
    num_tiles = Bh // bt2
    B_pad = 2 * Bh

    x0p = jnp.pad(x0, ((0, B_pad - B), (0, 0)))
    x0_packed = jnp.concatenate([x0p[:Bh], x0p[Bh:]], axis=1)            # (Bh, 16)

    packed = _pack_params(params, weight_dtype)

    # Constant index maps keep every weight VMEM-resident across grid steps.
    def resident(shape):
        return pl.BlockSpec(shape, lambda i: (0,) * len(shape))

    in_specs = [
        pl.BlockSpec((bt2, 2 * DIMENSION), lambda i: (i, 0)),   # packed x0 tile
        resident((2 * DIMENSION, LANES)),                       # w_in (+identity)
        resident((1, LANES)),                                   # b_in
        resident((N_PROP, LANES, LANES)),                       # wp (+wl, +identity)
        resident((N_PROP, 1, LANES)),                           # bp + bl
        resident((LANES, 2)),                                   # w_out (+wl_out)
        resident((1, 2)),                                       # b_out + bl_out
    ]
    out_specs = pl.BlockSpec((bt2, 2), lambda i: (i, 0))

    flops_row = (2 * (2 * DIMENSION) * LANES
                 + N_PROP * 2 * LANES * LANES
                 + 2 * LANES * 2)
    transc_row = 2 * ((N_PROP + 1) * LANES + 2)
    weight_bytes = sum(int(a.size) * a.dtype.itemsize for a in packed)
    cost = pl.CostEstimate(
        flops=Bh * flops_row,
        transcendentals=Bh * transc_row,
        bytes_accessed=Bh * (2 * DIMENSION + 2) * 4 + weight_bytes,
    )

    s_packed = pl.pallas_call(
        entropy_kernel,
        out_shape=jax.ShapeDtypeStruct((Bh, 2), jnp.float32),
        grid=(num_tiles,),
        in_specs=in_specs,
        out_specs=out_specs,
        compiler_params=pltpu.CompilerParams(
            dimension_semantics=("parallel",)),
        cost_estimate=cost,
    )(x0_packed, *packed)

    # unpack the two sub-tiles back into one (B, 1) column
    s = jnp.concatenate([s_packed[:, 0:1], s_packed[:, 1:2]], axis=0)    # (B_pad, 1)
    return s[:B]


# ---------------- parameter init (natural PyTorch-like shapes) ----------------

def _xavier_normal(key, fan_in, fan_out):
    std = (2.0 / (fan_in + fan_out)) ** 0.5
    # stored pre-transposed: (in_features, out_features)
    return std * jax.random.normal(key, (fan_in, fan_out), dtype=jnp.float32)


def _uniform_bias(key, fan_in, fan_out):
    bound = 1.0 / (fan_in ** 0.5)
    return jax.random.uniform(key, (fan_out,), minval=-bound, maxval=bound,
                              dtype=jnp.float32)


def init_params(key):
    keys = jax.random.split(key, 4 * N_PROP + 6)
    k = iter(keys)
    p = {}
    p["w_in"] = _xavier_normal(next(k), DIMENSION, HIDDEN)
    p["b_in"] = _uniform_bias(next(k), DIMENSION, HIDDEN)
    wp, bp, wl, bl = [], [], [], []
    for _ in range(N_PROP):
        wp.append(_xavier_normal(next(k), HIDDEN, HIDDEN))
        bp.append(_uniform_bias(next(k), HIDDEN, HIDDEN))
        wl.append(_xavier_normal(next(k), DIMENSION, HIDDEN))
        bl.append(_uniform_bias(next(k), DIMENSION, HIDDEN))
    p["wp"] = jnp.stack(wp)        # (9, 50, 50)
    p["bp"] = jnp.stack(bp)        # (9, 50)
    p["wl"] = jnp.stack(wl)        # (9, 8, 50)
    p["bl"] = jnp.stack(bl)        # (9, 50)
    p["w_out"] = _xavier_normal(next(k), HIDDEN, 1)        # (50, 1)
    p["b_out"] = _uniform_bias(next(k), HIDDEN, 1)         # (1,)
    p["wl_out"] = _xavier_normal(next(k), DIMENSION, 1)    # (8, 1)
    p["bl_out"] = _uniform_bias(next(k), DIMENSION, 1)     # (1,)
    return p


def _reference(x0, p, weight_dtype=jnp.bfloat16):
    """Plain-JAX reference of the same single forward pass at matching matmul precision."""
    def mm(a, w):
        return jnp.dot(a.astype(weight_dtype), w.astype(weight_dtype),
                       preferred_element_type=jnp.float32)

    x0 = x0.astype(jnp.float32)
    x = -_softplus(mm(x0, p["w_in"]) + p["b_in"])
    for i in range(N_PROP):
        x = -_softplus(mm(x, p["wp"][i]) + p["bp"][i]
                       + mm(x0, p["wl"][i]) + p["bl"][i])
    return -_softplus(mm(x, p["w_out"]) + p["b_out"]
                      + mm(x0, p["wl_out"]) + p["bl_out"])


if __name__ == "__main__":
    key = jax.random.PRNGKey(0)
    k_param, k_x = jax.random.split(key)
    params = init_params(k_param)

    # Small but non-trivial batch: pads 300 -> 320 and exercises a 2-step
    # "parallel" grid (keeps both v7x TensorCores busy).
    B = 300
    x0 = jax.random.normal(k_x, (B, DIMENSION), dtype=jnp.float32)

    S = entropy_network(x0, params)
    S = jax.block_until_ready(S)
    assert S.shape == (B, 1)

    S_ref = _reference(x0, params)
    max_err = float(jnp.max(jnp.abs(S - S_ref)))
    # bf16-operand / f32-accumulation path: compare against the matching-precision
    # reference (only accumulation-order differences remain).
    assert jnp.allclose(S, S_ref, atol=2e-2, rtol=2e-2), max_err

    print("KERNEL_OK")
</pallas_src>

<mosaic_0001>
module attributes {stable_mosaic.version = 11 : i64} {
  func.func @entropy_kernel(%arg0: i32, %arg1: memref<80x16xf32, #tpu.memory_space<vmem>>, %arg2: memref<16x128xbf16, #tpu.memory_space<vmem>>, %arg3: memref<1x128xf32, #tpu.memory_space<vmem>>, %arg4: memref<9x128x128xbf16, #tpu.memory_space<vmem>>, %arg5: memref<9x1x128xf32, #tpu.memory_space<vmem>>, %arg6: memref<128x2xbf16, #tpu.memory_space<vmem>>, %arg7: memref<1x2xf32, #tpu.memory_space<vmem>>, %arg8: memref<80x2xf32, #tpu.memory_space<vmem>>) attributes {dimension_semantics = [#tpu.dimension_semantics<parallel>], iteration_bounds = array<i64: 2>, scalar_prefetch = 0 : i64, scratch_operands = 0 : i64, tpu.core_type = #tpu.core_type<tc>, window_params = [{transform_indices = @transform_0, window_bounds = array<i64: 80, 16>}, {pipeline_mode = #tpu.pipeline_mode<synchronous>, transform_indices = @transform_1, window_bounds = array<i64: 16, 128>}, {pipeline_mode = #tpu.pipeline_mode<synchronous>, transform_indices = @transform_2, window_bounds = array<i64: 1, 128>}, {pipeline_mode = #tpu.pipeline_mode<synchronous>, transform_indices = @transform_3, window_bounds = array<i64: 9, 128, 128>}, {pipeline_mode = #tpu.pipeline_mode<synchronous>, transform_indices = @transform_4, window_bounds = array<i64: 9, 1, 128>}, {pipeline_mode = #tpu.pipeline_mode<synchronous>, transform_indices = @transform_5, window_bounds = array<i64: 128, 2>}, {pipeline_mode = #tpu.pipeline_mode<synchronous>, transform_indices = @transform_6, window_bounds = array<i64: 1, 2>}, {transform_indices = @transform_7, window_bounds = array<i64: 80, 2>}]} {
    %0 = tpu.iota {dimensions = array<i32: 1>} : vector<80x128xi32>
    %c63_i32 = arith.constant 63 : i32
    %1 = vector.broadcast %c63_i32 : i32 to vector<80x128xi32>
    %2 = arith.andi %0, %1 : vector<80x128xi32>
    %c50_i32 = arith.constant 50 : i32
    %3 = vector.broadcast %c50_i32 : i32 to vector<80x128xi32>
    %4 = arith.cmpi slt, %2, %3 : vector<80x128xi32>
    %c0 = arith.constant 0 : index
    %c0_0 = arith.constant 0 : index
    %5 = vector.load %arg1[%c0, %c0_0] : memref<80x16xf32, #tpu.memory_space<vmem>>, vector<80x16xf32>
    %6 = arith.truncf %5 : vector<80x16xf32> to vector<80x16xbf16>
    %c0_1 = arith.constant 0 : index
    %c0_2 = arith.constant 0 : index
    %7 = vector.load %arg2[%c0_1, %c0_2] : memref<16x128xbf16, #tpu.memory_space<vmem>>, vector<16x128xbf16>
    %cst = arith.constant dense<0.000000e+00> : vector<80x128xf32>
    %8 = tpu.matmul %6, %7, %cst {dimension_numbers = #tpu.dot_dimension_numbers<[1], [0], [0], [1], [0, 0, 1, 1], [], []>} : vector<80x16xbf16>, vector<16x128xbf16>, vector<80x128xf32> -> vector<80x128xf32>
    %c0_3 = arith.constant 0 : index
    %c0_4 = arith.constant 0 : index
    %9 = vector.load %arg3[%c0_3, %c0_4] : memref<1x128xf32, #tpu.memory_space<vmem>>, vector<1x128xf32>
    %10 = vector.broadcast %9 : vector<1x128xf32> to vector<80x128xf32>
    %11 = arith.addf %8, %10 : vector<80x128xf32>
    %cst_5 = arith.constant 0.000000e+00 : f32
    %12 = vector.broadcast %cst_5 : f32 to vector<80x128xf32>
    %13 = arith.maximumf %11, %12 : vector<80x128xf32>
    %14 = math.absf %11 : vector<80x128xf32>
    %cst_6 = arith.constant 0.000000e+00 : f32
    %15 = vector.broadcast %cst_6 : f32 to vector<80x128xf32>
    %16 = arith.subf %15, %14 : vector<80x128xf32>
    %17 = math.exp %16 : vector<80x128xf32>
    %18 = math.log1p %17 : vector<80x128xf32>
    %19 = arith.addf %13, %18 : vector<80x128xf32>
    %cst_7 = arith.constant 0.000000e+00 : f32
    %20 = vector.broadcast %cst_7 : f32 to vector<80x128xf32>
    %21 = arith.subf %20, %19 : vector<80x128xf32>
    %22 = arith.select %4, %21, %11 : vector<80x128xi1>, vector<80x128xf32>
    %23 = arith.truncf %22 : vector<80x128xf32> to vector<80x128xbf16>
    %c0_8 = arith.constant 0 : index
    %c0_9 = arith.constant 0 : index
    %c0_10 = arith.constant 0 : index
    %24 = vector.load %arg4[%c0_8, %c0_9, %c0_10] : memref<9x128x128xbf16, #tpu.memory_space<vmem>>, vector<1x128x128xbf16>
    %25 = vector.shape_cast %24 : vector<1x128x128xbf16> to vector<128x128xbf16>
    %cst_11 = arith.constant dense<0.000000e+00> : vector<80x128xf32>
    %26 = tpu.matmul %23, %25, %cst_11 {dimension_numbers = #tpu.dot_dimension_numbers<[1], [0], [0], [1], [0, 0, 1, 1], [], []>} : vector<80x128xbf16>, vector<128x128xbf16>, vector<80x128xf32> -> vector<80x128xf32>
    %c0_12 = arith.constant 0 : index
    %c0_13 = arith.constant 0 : index
    %c0_14 = arith.constant 0 : index
    %27 = vector.load %arg5[%c0_12, %c0_13, %c0_14] : memref<9x1x128xf32, #tpu.memory_space<vmem>>, vector<1x1x128xf32>
    %28 = vector.shape_cast %27 : vector<1x1x128xf32> to vector<1x128xf32>
    %29 = vector.broadcast %28 : vector<1x128xf32> to vector<80x128xf32>
    %30 = arith.addf %26, %29 : vector<80x128xf32>
    %cst_15 = arith.constant 0.000000e+00 : f32
    %31 = vector.broadcast %cst_15 : f32 to vector<80x128xf32>
    %32 = arith.maximumf %30, %31 : vector<80x128xf32>
    %33 = math.absf %30 : vector<80x128xf32>
    %cst_16 = arith.constant 0.000000e+00 : f32
    %34 = vector.broadcast %cst_16 : f32 to vector<80x128xf32>
    %35 = arith.subf %34, %33 : vector<80x128xf32>
    %36 = math.exp %35 : vector<80x128xf32>
    %37 = math.log1p %36 : vector<80x128xf32>
    %38 = arith.addf %32, %37 : vector<80x128xf32>
    %cst_17 = arith.constant 0.000000e+00 : f32
    %39 = vector.broadcast %cst_17 : f32 to vector<80x128xf32>
    %40 = arith.subf %39, %38 : vector<80x128xf32>
    %41 = arith.select %4, %40, %30 : vector<80x128xi1>, vector<80x128xf32>
    %42 = arith.truncf %41 : vector<80x128xf32> to vector<80x128xbf16>
    %c1 = arith.constant 1 : index
    %c0_18 = arith.constant 0 : index
    %c0_19 = arith.constant 0 : index
    %43 = vector.load %arg4[%c1, %c0_18, %c0_19] : memref<9x128x128xbf16, #tpu.memory_space<vmem>>, vector<1x128x128xbf16>
    %44 = vector.shape_cast %43 : vector<1x128x128xbf16> to vector<128x128xbf16>
    %cst_20 = arith.constant dense<0.000000e+00> : vector<80x128xf32>
    %45 = tpu.matmul %42, %44, %cst_20 {dimension_numbers = #tpu.dot_dimension_numbers<[1], [0], [0], [1], [0, 0, 1, 1], [], []>} : vector<80x128xbf16>, vector<128x128xbf16>, vector<80x128xf32> -> vector<80x128xf32>
    %c1_21 = arith.constant 1 : index
    %c0_22 = arith.constant 0 : index
    %c0_23 = arith.constant 0 : index
    %46 = vector.load %arg5[%c1_21, %c0_22, %c0_23] : memref<9x1x128xf32, #tpu.memory_space<vmem>>, vector<1x1x128xf32>
    %47 = vector.shape_cast %46 : vector<1x1x128xf32> to vector<1x128xf32>
    %48 = vector.broadcast %47 : vector<1x128xf32> to vector<80x128xf32>
    %49 = arith.addf %45, %48 : vector<80x128xf32>
    %cst_24 = arith.constant 0.000000e+00 : f32
    %50 = vector.broadcast %cst_24 : f32 to vector<80x128xf32>
    %51 = arith.maximumf %49, %50 : vector<80x128xf32>
    %52 = math.absf %49 : vector<80x128xf32>
    %cst_25 = arith.constant 0.000000e+00 : f32
    %53 = vector.broadcast %cst_25 : f32 to vector<80x128xf32>
    %54 = arith.subf %53, %52 : vector<80x128xf32>
    %55 = math.exp %54 : vector<80x128xf32>
    %56 = math.log1p %55 : vector<80x128xf32>
    %57 = arith.addf %51, %56 : vector<80x128xf32>
    %cst_26 = arith.constant 0.000000e+00 : f32
    %58 = vector.broadcast %cst_26 : f32 to vector<80x128xf32>
    %59 = arith.subf %58, %57 : vector<80x128xf32>
    %60 = arith.select %4, %59, %49 : vector<80x128xi1>, vector<80x128xf32>
    %61 = arith.truncf %60 : vector<80x128xf32> to vector<80x128xbf16>
    %c2 = arith.constant 2 : index
    %c0_27 = arith.constant 0 : index
    %c0_28 = arith.constant 0 : index
    %62 = vector.load %arg4[%c2, %c0_27, %c0_28] : memref<9x128x128xbf16, #tpu.memory_space<vmem>>, vector<1x128x128xbf16>
    %63 = vector.shape_cast %62 : vector<1x128x128xbf16> to vector<128x128xbf16>
    %cst_29 = arith.constant dense<0.000000e+00> : vector<80x128xf32>
    %64 = tpu.matmul %61, %63, %cst_29 {dimension_numbers = #tpu.dot_dimension_numbers<[1], [0], [0], [1], [0, 0, 1, 1], [], []>} : vector<80x128xbf16>, vector<128x128xbf16>, vector<80x128xf32> -> vector<80x128xf32>
    %c2_30 = arith.constant 2 : index
    %c0_31 = arith.constant 0 : index
    %c0_32 = arith.constant 0 : index
    %65 = vector.load %arg5[%c2_30, %c0_31, %c0_32] : memref<9x1x128xf32, #tpu.memory_space<vmem>>, vector<1x1x128xf32>
    %66 = vector.shape_cast %65 : vector<1x1x128xf32> to vector<1x128xf32>
    %67 = vector.broadcast %66 : vector<1x128xf32> to vector<80x128xf32>
    %68 = arith.addf %64, %67 : vector<80x128xf32>
    %cst_33 = arith.constant 0.000000e+00 : f32
    %69 = vector.broadcast %cst_33 : f32 to vector<80x128xf32>
    %70 = arith.maximumf %68, %69 : vector<80x128xf32>
    %71 = math.absf %68 : vector<80x128xf32>
    %cst_34 = arith.constant 0.000000e+00 : f32
    %72 = vector.broadcast %cst_34 : f32 to vector<80x128xf32>
    %73 = arith.subf %72, %71 : vector<80x128xf32>
    %74 = math.exp %73 : vector<80x128xf32>
    %75 = math.log1p %74 : vector<80x128xf32>
    %76 = arith.addf %70, %75 : vector<80x128xf32>
    %cst_35 = arith.constant 0.000000e+00 : f32
    %77 = vector.broadcast %cst_35 : f32 to vector<80x128xf32>
    %78 = arith.subf %77, %76 : vector<80x128xf32>
    %79 = arith.select %4, %78, %68 : vector<80x128xi1>, vector<80x128xf32>
    %80 = arith.truncf %79 : vector<80x128xf32> to vector<80x128xbf16>
    %c3 = arith.constant 3 : index
    %c0_36 = arith.constant 0 : index
    %c0_37 = arith.constant 0 : index
    %81 = vector.load %arg4[%c3, %c0_36, %c0_37] : memref<9x128x128xbf16, #tpu.memory_space<vmem>>, vector<1x128x128xbf16>
    %82 = vector.shape_cast %81 : vector<1x128x128xbf16> to vector<128x128xbf16>
    %cst_38 = arith.constant dense<0.000000e+00> : vector<80x128xf32>
    %83 = tpu.matmul %80, %82, %cst_38 {dimension_numbers = #tpu.dot_dimension_numbers<[1], [0], [0], [1], [0, 0, 1, 1], [], []>} : vector<80x128xbf16>, vector<128x128xbf16>, vector<80x128xf32> -> vector<80x128xf32>
    %c3_39 = arith.constant 3 : index
    %c0_40 = arith.constant 0 : index
    %c0_41 = arith.constant 0 : index
    %84 = vector.load %arg5[%c3_39, %c0_40, %c0_41] : memref<9x1x128xf32, #tpu.memory_space<vmem>>, vector<1x1x128xf32>
    %85 = vector.shape_cast %84 : vector<1x1x128xf32> to vector<1x128xf32>
    %86 = vector.broadcast %85 : vector<1x128xf32> to vector<80x128xf32>
    %87 = arith.addf %83, %86 : vector<80x128xf32>
    %cst_42 = arith.constant 0.000000e+00 : f32
    %88 = vector.broadcast %cst_42 : f32 to vector<80x128xf32>
    %89 = arith.maximumf %87, %88 : vector<80x128xf32>
    %90 = math.absf %87 : vector<80x128xf32>
    %cst_43 = arith.constant 0.000000e+00 : f32
    %91 = vector.broadcast %cst_43 : f32 to vector<80x128xf32>
    %92 = arith.subf %91, %90 : vector<80x128xf32>
    %93 = math.exp %92 : vector<80x128xf32>
    %94 = math.log1p %93 : vector<80x128xf32>
    %95 = arith.addf %89, %94 : vector<80x128xf32>
    %cst_44 = arith.constant 0.000000e+00 : f32
    %96 = vector.broadcast %cst_44 : f32 to vector<80x128xf32>
    %97 = arith.subf %96, %95 : vector<80x128xf32>
    %98 = arith.select %4, %97, %87 : vector<80x128xi1>, vector<80x128xf32>
    %99 = arith.truncf %98 : vector<80x128xf32> to vector<80x128xbf16>
    %c4 = arith.constant 4 : index
    %c0_45 = arith.constant 0 : index
    %c0_46 = arith.constant 0 : index
    %100 = vector.load %arg4[%c4, %c0_45, %c0_46] : memref<9x128x128xbf16, #tpu.memory_space<vmem>>, vector<1x128x128xbf16>
    %101 = vector.shape_cast %100 : vector<1x128x128xbf16> to vector<128x128xbf16>
    %cst_47 = arith.constant dense<0.000000e+00> : vector<80x128xf32>
    %102 = tpu.matmul %99, %101, %cst_47 {dimension_numbers = #tpu.dot_dimension_numbers<[1], [0], [0], [1], [0, 0, 1, 1], [], []>} : vector<80x128xbf16>, vector<128x128xbf16>, vector<80x128xf32> -> vector<80x128xf32>
    %c4_48 = arith.constant 4 : index
    %c0_49 = arith.constant 0 : index
    %c0_50 = arith.constant 0 : index
    %103 = vector.load %arg5[%c4_48, %c0_49, %c0_50] : memref<9x1x128xf32, #tpu.memory_space<vmem>>, vector<1x1x128xf32>
    %104 = vector.shape_cast %103 : vector<1x1x128xf32> to vector<1x128xf32>
    %105 = vector.broadcast %104 : vector<1x128xf32> to vector<80x128xf32>
    %106 = arith.addf %102, %105 : vector<80x128xf32>
    %cst_51 = arith.constant 0.000000e+00 : f32
    %107 = vector.broadcast %cst_51 : f32 to vector<80x128xf32>
    %108 = arith.maximumf %106, %107 : vector<80x128xf32>
    %109 = math.absf %106 : vector<80x128xf32>
    %cst_52 = arith.constant 0.000000e+00 : f32
    %110 = vector.broadcast %cst_52 : f32 to vector<80x128xf32>
    %111 = arith.subf %110, %109 : vector<80x128xf32>
    %112 = math.exp %111 : vector<80x128xf32>
    %113 = math.log1p %112 : vector<80x128xf32>
    %114 = arith.addf %108, %113 : vector<80x128xf32>
    %cst_53 = arith.constant 0.000000e+00 : f32
    %115 = vector.broadcast %cst_53 : f32 to vector<80x128xf32>
    %116 = arith.subf %115, %114 : vector<80x128xf32>
    %117 = arith.select %4, %116, %106 : vector<80x128xi1>, vector<80x128xf32>
    %118 = arith.truncf %117 : vector<80x128xf32> to vector<80x128xbf16>
    %c5 = arith.constant 5 : index
    %c0_54 = arith.constant 0 : index
    %c0_55 = arith.constant 0 : index
    %119 = vector.load %arg4[%c5, %c0_54, %c0_55] : memref<9x128x128xbf16, #tpu.memory_space<vmem>>, vector<1x128x128xbf16>
    %120 = vector.shape_cast %119 : vector<1x128x128xbf16> to vector<128x128xbf16>
    %cst_56 = arith.constant dense<0.000000e+00> : vector<80x128xf32>
    %121 = tpu.matmul %118, %120, %cst_56 {dimension_numbers = #tpu.dot_dimension_numbers<[1], [0], [0], [1], [0, 0, 1, 1], [], []>} : vector<80x128xbf16>, vector<128x128xbf16>, vector<80x128xf32> -> vector<80x128xf32>
    %c5_57 = arith.constant 5 : index
    %c0_58 = arith.constant 0 : index
    %c0_59 = arith.constant 0 : index
    %122 = vector.load %arg5[%c5_57, %c0_58, %c0_59] : memref<9x1x128xf32, #tpu.memory_space<vmem>>, vector<1x1x128xf32>
    %123 = vector.shape_cast %122 : vector<1x1x128xf32> to vector<1x128xf32>
    %124 = vector.broadcast %123 : vector<1x128xf32> to vector<80x128xf32>
    %125 = arith.addf %121, %124 : vector<80x128xf32>
    %cst_60 = arith.constant 0.000000e+00 : f32
    %126 = vector.broadcast %cst_60 : f32 to vector<80x128xf32>
    %127 = arith.maximumf %125, %126 : vector<80x128xf32>
    %128 = math.absf %125 : vector<80x128xf32>
    %cst_61 = arith.constant 0.000000e+00 : f32
    %129 = vector.broadcast %cst_61 : f32 to vector<80x128xf32>
    %130 = arith.subf %129, %128 : vector<80x128xf32>
    %131 = math.exp %130 : vector<80x128xf32>
    %132 = math.log1p %131 : vector<80x128xf32>
    %133 = arith.addf %127, %132 : vector<80x128xf32>
    %cst_62 = arith.constant 0.000000e+00 : f32
    %134 = vector.broadcast %cst_62 : f32 to vector<80x128xf32>
    %135 = arith.subf %134, %133 : vector<80x128xf32>
    %136 = arith.select %4, %135, %125 : vector<80x128xi1>, vector<80x128xf32>
    %137 = arith.truncf %136 : vector<80x128xf32> to vector<80x128xbf16>
    %c6 = arith.constant 6 : index
    %c0_63 = arith.constant 0 : index
    %c0_64 = arith.constant 0 : index
    %138 = vector.load %arg4[%c6, %c0_63, %c0_64] : memref<9x128x128xbf16, #tpu.memory_space<vmem>>, vector<1x128x128xbf16>
    %139 = vector.shape_cast %138 : vector<1x128x128xbf16> to vector<128x128xbf16>
    %cst_65 = arith.constant dense<0.000000e+00> : vector<80x128xf32>
    %140 = tpu.matmul %137, %139, %cst_65 {dimension_numbers = #tpu.dot_dimension_numbers<[1], [0], [0], [1], [0, 0, 1, 1], [], []>} : vector<80x128xbf16>, vector<128x128xbf16>, vector<80x128xf32> -> vector<80x128xf32>
    %c6_66 = arith.constant 6 : index
    %c0_67 = arith.constant 0 : index
    %c0_68 = arith.constant 0 : index
    %141 = vector.load %arg5[%c6_66, %c0_67, %c0_68] : memref<9x1x128xf32, #tpu.memory_space<vmem>>, vector<1x1x128xf32>
    %142 = vector.shape_cast %141 : vector<1x1x128xf32> to vector<1x128xf32>
    %143 = vector.broadcast %142 : vector<1x128xf32> to vector<80x128xf32>
    %144 = arith.addf %140, %143 : vector<80x128xf32>
    %cst_69 = arith.constant 0.000000e+00 : f32
    %145 = vector.broadcast %cst_69 : f32 to vector<80x128xf32>
    %146 = arith.maximumf %144, %145 : vector<80x128xf32>
    %147 = math.absf %144 : vector<80x128xf32>
    %cst_70 = arith.constant 0.000000e+00 : f32
    %148 = vector.broadcast %cst_70 : f32 to vector<80x128xf32>
    %149 = arith.subf %148, %147 : vector<80x128xf32>
    %150 = math.exp %149 : vector<80x128xf32>
    %151 = math.log1p %150 : vector<80x128xf32>
    %152 = arith.addf %146, %151 : vector<80x128xf32>
    %cst_71 = arith.constant 0.000000e+00 : f32
    %153 = vector.broadcast %cst_71 : f32 to vector<80x128xf32>
    %154 = arith.subf %153, %152 : vector<80x128xf32>
    %155 = arith.select %4, %154, %144 : vector<80x128xi1>, vector<80x128xf32>
    %156 = arith.truncf %155 : vector<80x128xf32> to vector<80x128xbf16>
    %c7 = arith.constant 7 : index
    %c0_72 = arith.constant 0 : index
    %c0_73 = arith.constant 0 : index
    %157 = vector.load %arg4[%c7, %c0_72, %c0_73] : memref<9x128x128xbf16, #tpu.memory_space<vmem>>, vector<1x128x128xbf16>
    %158 = vector.shape_cast %157 : vector<1x128x128xbf16> to vector<128x128xbf16>
    %cst_74 = arith.constant dense<0.000000e+00> : vector<80x128xf32>
    %159 = tpu.matmul %156, %158, %cst_74 {dimension_numbers = #tpu.dot_dimension_numbers<[1], [0], [0], [1], [0, 0, 1, 1], [], []>} : vector<80x128xbf16>, vector<128x128xbf16>, vector<80x128xf32> -> vector<80x128xf32>
    %c7_75 = arith.constant 7 : index
    %c0_76 = arith.constant 0 : index
    %c0_77 = arith.constant 0 : index
    %160 = vector.load %arg5[%c7_75, %c0_76, %c0_77] : memref<9x1x128xf32, #tpu.memory_space<vmem>>, vector<1x1x128xf32>
    %161 = vector.shape_cast %160 : vector<1x1x128xf32> to vector<1x128xf32>
    %162 = vector.broadcast %161 : vector<1x128xf32> to vector<80x128xf32>
    %163 = arith.addf %159, %162 : vector<80x128xf32>
    %cst_78 = arith.constant 0.000000e+00 : f32
    %164 = vector.broadcast %cst_78 : f32 to vector<80x128xf32>
    %165 = arith.maximumf %163, %164 : vector<80x128xf32>
    %166 = math.absf %163 : vector<80x128xf32>
    %cst_79 = arith.constant 0.000000e+00 : f32
    %167 = vector.broadcast %cst_79 : f32 to vector<80x128xf32>
    %168 = arith.subf %167, %166 : vector<80x128xf32>
    %169 = math.exp %168 : vector<80x128xf32>
    %170 = math.log1p %169 : vector<80x128xf32>
    %171 = arith.addf %165, %170 : vector<80x128xf32>
    %cst_80 = arith.constant 0.000000e+00 : f32
    %172 = vector.broadcast %cst_80 : f32 to vector<80x128xf32>
    %173 = arith.subf %172, %171 : vector<80x128xf32>
    %174 = arith.select %4, %173, %163 : vector<80x128xi1>, vector<80x128xf32>
    %175 = arith.truncf %174 : vector<80x128xf32> to vector<80x128xbf16>
    %c8 = arith.constant 8 : index
    %c0_81 = arith.constant 0 : index
    %c0_82 = arith.constant 0 : index
    %176 = vector.load %arg4[%c8, %c0_81, %c0_82] : memref<9x128x128xbf16, #tpu.memory_space<vmem>>, vector<1x128x128xbf16>
    %177 = vector.shape_cast %176 : vector<1x128x128xbf16> to vector<128x128xbf16>
    %cst_83 = arith.constant dense<0.000000e+00> : vector<80x128xf32>
    %178 = tpu.matmul %175, %177, %cst_83 {dimension_numbers = #tpu.dot_dimension_numbers<[1], [0], [0], [1], [0, 0, 1, 1], [], []>} : vector<80x128xbf16>, vector<128x128xbf16>, vector<80x128xf32> -> vector<80x128xf32>
    %c8_84 = arith.constant 8 : index
    %c0_85 = arith.constant 0 : index
    %c0_86 = arith.constant 0 : index
    %179 = vector.load %arg5[%c8_84, %c0_85, %c0_86] : memref<9x1x128xf32, #tpu.memory_space<vmem>>, vector<1x1x128xf32>
    %180 = vector.shape_cast %179 : vector<1x1x128xf32> to vector<1x128xf32>
    %181 = vector.broadcast %180 : vector<1x128xf32> to vector<80x128xf32>
    %182 = arith.addf %178, %181 : vector<80x128xf32>
    %cst_87 = arith.constant 0.000000e+00 : f32
    %183 = vector.broadcast %cst_87 : f32 to vector<80x128xf32>
    %184 = arith.maximumf %182, %183 : vector<80x128xf32>
    %185 = math.absf %182 : vector<80x128xf32>
    %cst_88 = arith.constant 0.000000e+00 : f32
    %186 = vector.broadcast %cst_88 : f32 to vector<80x128xf32>
    %187 = arith.subf %186, %185 : vector<80x128xf32>
    %188 = math.exp %187 : vector<80x128xf32>
    %189 = math.log1p %188 : vector<80x128xf32>
    %190 = arith.addf %184, %189 : vector<80x128xf32>
    %cst_89 = arith.constant 0.000000e+00 : f32
    %191 = vector.broadcast %cst_89 : f32 to vector<80x128xf32>
    %192 = arith.subf %191, %190 : vector<80x128xf32>
    %193 = arith.select %4, %192, %182 : vector<80x128xi1>, vector<80x128xf32>
    %194 = arith.truncf %193 : vector<80x128xf32> to vector<80x128xbf16>
    %c0_90 = arith.constant 0 : index
    %c0_91 = arith.constant 0 : index
    %195 = vector.load %arg6[%c0_90, %c0_91] : memref<128x2xbf16, #tpu.memory_space<vmem>>, vector<128x2xbf16>
    %cst_92 = arith.constant dense<0.000000e+00> : vector<80x2xf32>
    %196 = tpu.matmul %194, %195, %cst_92 {dimension_numbers = #tpu.dot_dimension_numbers<[1], [0], [0], [1], [0, 0, 1, 1], [], []>} : vector<80x128xbf16>, vector<128x2xbf16>, vector<80x2xf32> -> vector<80x2xf32>
    %c0_93 = arith.constant 0 : index
    %c0_94 = arith.constant 0 : index
    %197 = vector.load %arg7[%c0_93, %c0_94] : memref<1x2xf32, #tpu.memory_space<vmem>>, vector<1x2xf32>
    %198 = vector.broadcast %197 : vector<1x2xf32> to vector<80x2xf32>
    %199 = arith.addf %196, %198 : vector<80x2xf32>
    %cst_95 = arith.constant 0.000000e+00 : f32
    %200 = vector.broadcast %cst_95 : f32 to vector<80x2xf32>
    %201 = arith.maximumf %199, %200 : vector<80x2xf32>
    %202 = math.absf %199 : vector<80x2xf32>
    %cst_96 = arith.constant 0.000000e+00 : f32
    %203 = vector.broadcast %cst_96 : f32 to vector<80x2xf32>
    %204 = arith.subf %203, %202 : vector<80x2xf32>
    %205 = math.exp %204 : vector<80x2xf32>
    %206 = math.log1p %205 : vector<80x2xf32>
    %207 = arith.addf %201, %206 : vector<80x2xf32>
    %cst_97 = arith.constant 0.000000e+00 : f32
    %208 = vector.broadcast %cst_97 : f32 to vector<80x2xf32>
    %209 = arith.subf %208, %207 : vector<80x2xf32>
    %c0_98 = arith.constant 0 : index
    %c0_99 = arith.constant 0 : index
    %210 = vector.load %arg8[%c0_98, %c0_99] : memref<80x2xf32, #tpu.memory_space<vmem>>, vector<80x2xf32>
    tpu.vector_store %arg8[%c0_98, %c0_99], %209 {strides = array<i32>} : memref<80x2xf32, #tpu.memory_space<vmem>>, vector<80x2xf32>,
    return
  }
  func.func @transform_0(%arg0: i32) -> (i32, i32) {
    %c0_i32 = arith.constant 0 : i32
    %c0_i32_0 = arith.constant 0 : i32
    return %arg0, %c0_i32 : i32, i32
  }
  func.func @transform_1(%arg0: i32) -> (i32, i32) {
    %c0_i32 = arith.constant 0 : i32
    %c0_i32_0 = arith.constant 0 : i32
    %c0_i32_1 = arith.constant 0 : i32
    return %c0_i32, %c0_i32_0 : i32, i32
  }
  func.func @transform_2(%arg0: i32) -> (i32, i32) {
    %c0_i32 = arith.constant 0 : i32
    %c0_i32_0 = arith.constant 0 : i32
    %c0_i32_1 = arith.constant 0 : i32
    return %c0_i32, %c0_i32_0 : i32, i32
  }
  func.func @transform_3(%arg0: i32) -> (i32, i32, i32) {
    %c0_i32 = arith.constant 0 : i32
    %c0_i32_0 = arith.constant 0 : i32
    %c0_i32_1 = arith.constant 0 : i32
    %c0_i32_2 = arith.constant 0 : i32
    return %c0_i32, %c0_i32_0, %c0_i32_1 : i32, i32, i32
  }
  func.func @transform_4(%arg0: i32) -> (i32, i32, i32) {
    %c0_i32 = arith.constant 0 : i32
    %c0_i32_0 = arith.constant 0 : i32
    %c0_i32_1 = arith.constant 0 : i32
    %c0_i32_2 = arith.constant 0 : i32
    return %c0_i32, %c0_i32_0, %c0_i32_1 : i32, i32, i32
  }
  func.func @transform_5(%arg0: i32) -> (i32, i32) {
    %c0_i32 = arith.constant 0 : i32
    %c0_i32_0 = arith.constant 0 : i32
    %c0_i32_1 = arith.constant 0 : i32
    return %c0_i32, %c0_i32_0 : i32, i32
  }
  func.func @transform_6(%arg0: i32) -> (i32, i32) {
    %c0_i32 = arith.constant 0 : i32
    %c0_i32_0 = arith.constant 0 : i32
    %c0_i32_1 = arith.constant 0 : i32
    return %c0_i32, %c0_i32_0 : i32, i32
  }
  func.func @transform_7(%arg0: i32) -> (i32, i32) {
    %c0_i32 = arith.constant 0 : i32
    %c0_i32_0 = arith.constant 0 : i32
    return %arg0, %c0_i32 : i32, i32
  }
}

</mosaic_0001>

<llo_original>
// kernel: tpu_custom_call.1
$region0: #{tpu_custom_call.1}
  #allocation0 [shape = 'u32[]', space=smem, size = 0x4, offset = 0x4, fixed_abs, tag = 'smem constant byte address 0x4 - core index']
  #allocation1 [shape = 'u32[144,128]{1,0:T(1,128)}', space=vmem, size = 0x12000, scoped, tag = 'internal scratch']
  %s0 = inlined_call_operand.vmem [shape: f32[160,16], index: 0, kind: input, shape index: {}]
  %s1 = inlined_call_operand.vmem [shape: bf16[16,128], index: 1, kind: input, shape index: {}]
  %s2 = inlined_call_operand.vmem [shape: f32[1,128], index: 2, kind: input, shape index: {}]
  %s3 = inlined_call_operand.hbm [shape: bf16[9,128,128], index: 3, kind: input, shape index: {}]
  %s4 = inlined_call_operand.vmem [shape: f32[9,1,128], index: 4, kind: input, shape index: {}]
  %s5 = inlined_call_operand.vmem [shape: bf16[128,2], index: 5, kind: input, shape index: {}]
  %s6 = inlined_call_operand.vmem [shape: f32[1,2], index: 6, kind: input, shape index: {}]
  %s7 = inlined_call_operand.vmem [shape: f32[160,2], index: 7, kind: output, shape index: {}]
  %s8 = sld [smem:[#allocation0]]
  $region65: #{tpu_custom_call.1} parent=0
    _
  %s10 = ssub.s32 1, %s8
  %s11 = scalar_select 0, %s10, %s8
  $region1: #{tpu_custom_call.1} parent=0
    #allocation2 [shape = 'u8[294912]{0}', space=vmem, size = 0x48000, scoped, tag = 'input window, operand 3, single buffered']
    #allocation3 [shape = 's32[2]{0}', space=sflag, size = 0x8, scoped, tag = 'scoped memory for tpu_custom_call.1']
    %12 = vsyncpa [#allocation3], 0
    loop: start=0, step=1, limit=4
    $region2: #{tpu_custom_call.1} parent=1 // loop_pre_header
      _
    $region3: #{tpu_custom_call.1} parent=1 // loop_header
      %s14 = sphi 0, %s18
      %p15 = scmp.ge.s32.totalorder %s14, 4
      %s24 = sphi 0, %s26
      %s27 = sphi 0, %s24
      %s28 = sphi 0, %s27
      %s44 = sphi 0, %s28
      %s48 = sphi 0, %s48
      %s50 = sphi 0, %s48
      %s51 = sphi 0, %s50
      %s65 = sphi 0, %s51
      %s69 = sphi 0, %s69
      %s71 = sphi 0, %s69
      %s72 = sphi 0, %s71
      %s86 = sphi 0, %s72
      %s90 = sphi 0, %s90
      %s92 = sphi 0, %s90
      %s93 = sphi 0, %s92
      %s107 = sphi 0, %s93
      %s111 = sphi 0, %s111
      %s113 = sphi 0, %s111
      %s114 = sphi 0, %s113
      %s128 = sphi 0, %s114
      %s132 = sphi 0, %s132
      %s134 = sphi 0, %s132
      %s135 = sphi 0, %s134
      %s149 = sphi 0, %s135
      %s153 = sphi 0, %s153
      %s155 = sphi 0, %s153
      %s156 = sphi 0, %s155
      %s170 = sphi 0, %s156
      %s176 = sphi 0, %s178
      %s179 = sphi 0, %s176
      %s180 = sphi 0, %s179
      %s196 = sphi 0, %s180
    $region4: #{tpu_custom_call.1} parent=1 // loop_header_branch
      %17 = sbr.rel (%p15) target = $region8
    $region5: #{tpu_custom_call.1} parent=1 // loop_body
      %s19 = ssub.s32 %s14, 1
      %s20 = ssub.s32 %s14, 2
      %s21 = sadd.s32 %s14, 1
      %s22 = ssub.s32 %s14, %s21
      %p23 = scmp.eq.s32.totalorder %s22, 0
      %s25 = sadd.s32 %s24, 1
      %s26 = scalar_select %p23, %s24, %s25
      %p29 = pneg %p23
      %p30 = scmp.eq.s32.totalorder %s14, 1
      %p31 = por %p29, %p30
      %p32 = scmp.ne.s32.totalorder %s24, %s27
      %p33 = scmp.eq.s32.totalorder %s14, 0
      %p34 = por %p32, %p33
      %p35 = scmp.ne.s32.totalorder %s24, %s27
      %p36 = scmp.eq.s32.totalorder %s19, 1
      %p37 = por %p35, %p36
      %p38 = scmp.ne.s32.totalorder %s27, %s28
      %p39 = scmp.eq.s32.totalorder %s19, 0
      %p40 = por %p38, %p39
      %p41 = scmp.ne.s32.totalorder %s27, %s28
      %p42 = scmp.eq.s32.totalorder %s20, 1
      %p43 = por %p41, %p42
      %p45 = scmp.ne.s32.totalorder %s28, %s44
      %p46 = scmp.eq.s32.totalorder %s20, 0
      %p47 = por %p45, %p46
      %s49 = sadd.s32 %s48, 1
      %p52 = scmp.eq.s32.totalorder %s14, 1
      %p53 = scmp.ne.s32.totalorder %s48, %s50
      %p54 = scmp.eq.s32.totalorder %s14, 0
      %p55 = por %p53, %p54
      %p56 = scmp.ne.s32.totalorder %s48, %s50
      %p57 = scmp.eq.s32.totalorder %s19, 1
      %p58 = por %p56, %p57
      %p59 = scmp.ne.s32.totalorder %s50, %s51
      %p60 = scmp.eq.s32.totalorder %s19, 0
      %p61 = por %p59, %p60
      %p62 = scmp.ne.s32.totalorder %s50, %s51
      %p63 = scmp.eq.s32.totalorder %s20, 1
      %p64 = por %p62, %p63
      %p66 = scmp.ne.s32.totalorder %s51, %s65
      %p67 = scmp.eq.s32.totalorder %s20, 0
      %p68 = por %p66, %p67
      %s70 = sadd.s32 %s69, 1
      %p73 = scmp.eq.s32.totalorder %s14, 1
      %p74 = scmp.ne.s32.totalorder %s69, %s71
      %p75 = scmp.eq.s32.totalorder %s14, 0
      %p76 = por %p74, %p75
      %p77 = scmp.ne.s32.totalorder %s69, %s71
      %p78 = scmp.eq.s32.totalorder %s19, 1
      %p79 = por %p77, %p78
      %p80 = scmp.ne.s32.totalorder %s71, %s72
      %p81 = scmp.eq.s32.totalorder %s19, 0
      %p82 = por %p80, %p81
      %p83 = scmp.ne.s32.totalorder %s71, %s72
      %p84 = scmp.eq.s32.totalorder %s20, 1
      %p85 = por %p83, %p84
      %p87 = scmp.ne.s32.totalorder %s72, %s86
      %p88 = scmp.eq.s32.totalorder %s20, 0
      %p89 = por %p87, %p88
      %s91 = sadd.s32 %s90, 1
      %p94 = scmp.eq.s32.totalorder %s14, 1
      %p95 = scmp.ne.s32.totalorder %s90, %s92
      %p96 = scmp.eq.s32.totalorder %s14, 0
      %p97 = por %p95, %p96
      %p98 = scmp.ne.s32.totalorder %s90, %s92
      %p99 = scmp.eq.s32.totalorder %s19, 1
      %p100 = por %p98, %p99
      %p101 = scmp.ne.s32.totalorder %s92, %s93
      %p102 = scmp.eq.s32.totalorder %s19, 0
      %p103 = por %p101, %p102
      %p104 = scmp.ne.s32.totalorder %s92, %s93
      %p105 = scmp.eq.s32.totalorder %s20, 1
      %p106 = por %p104, %p105
      %p108 = scmp.ne.s32.totalorder %s93, %s107
      %p109 = scmp.eq.s32.totalorder %s20, 0
      %p110 = por %p108, %p109
      %s112 = sadd.s32 %s111, 1
      %p115 = scmp.eq.s32.totalorder %s14, 1
      %p116 = scmp.ne.s32.totalorder %s111, %s113
      %p117 = scmp.eq.s32.totalorder %s14, 0
      %p118 = por %p116, %p117
      %p119 = scmp.ne.s32.totalorder %s111, %s113
      %p120 = scmp.eq.s32.totalorder %s19, 1
      %p121 = por %p119, %p120
      %p122 = scmp.ne.s32.totalorder %s113, %s114
      %p123 = scmp.eq.s32.totalorder %s19, 0
      %p124 = por %p122, %p123
      %p125 = scmp.ne.s32.totalorder %s113, %s114
      %p126 = scmp.eq.s32.totalorder %s20, 1
      %p127 = por %p125, %p126
      %p129 = scmp.ne.s32.totalorder %s114, %s128
      %p130 = scmp.eq.s32.totalorder %s20, 0
      %p131 = por %p129, %p130
      %s133 = sadd.s32 %s132, 1
      %p136 = scmp.eq.s32.totalorder %s14, 1
      %p137 = scmp.ne.s32.totalorder %s132, %s134
      %p138 = scmp.eq.s32.totalorder %s14, 0
      %p139 = por %p137, %p138
      %p140 = scmp.ne.s32.totalorder %s132, %s134
      %p141 = scmp.eq.s32.totalorder %s19, 1
      %p142 = por %p140, %p141
      %p143 = scmp.ne.s32.totalorder %s134, %s135
      %p144 = scmp.eq.s32.totalorder %s19, 0
      %p145 = por %p143, %p144
      %p146 = scmp.ne.s32.totalorder %s134, %s135
      %p147 = scmp.eq.s32.totalorder %s20, 1
      %p148 = por %p146, %p147
      %p150 = scmp.ne.s32.totalorder %s135, %s149
      %p151 = scmp.eq.s32.totalorder %s20, 0
      %p152 = por %p150, %p151
      %s154 = sadd.s32 %s153, 1
      %p157 = scmp.eq.s32.totalorder %s14, 1
      %p158 = scmp.ne.s32.totalorder %s153, %s155
      %p159 = scmp.eq.s32.totalorder %s14, 0
      %p160 = por %p158, %p159
      %p161 = scmp.ne.s32.totalorder %s153, %s155
      %p162 = scmp.eq.s32.totalorder %s19, 1
      %p163 = por %p161, %p162
      %p164 = scmp.ne.s32.totalorder %s155, %s156
      %p165 = scmp.eq.s32.totalorder %s19, 0
      %p166 = por %p164, %p165
      %p167 = scmp.ne.s32.totalorder %s155, %s156
      %p168 = scmp.eq.s32.totalorder %s20, 1
      %p169 = por %p167, %p168
      %p171 = scmp.ne.s32.totalorder %s156, %s170
      %p172 = scmp.eq.s32.totalorder %s20, 0
      %p173 = por %p171, %p172
      %s174 = ssub.s32 %s14, %s21
      %p175 = scmp.eq.s32.totalorder %s174, 0
      %s177 = sadd.s32 %s176, 1
      %s178 = scalar_select %p175, %s176, %s177
      %p181 = pneg %p175
      %p182 = scmp.eq.s32.totalorder %s14, 1
      %p183 = por %p181, %p182
      %p184 = scmp.ne.s32.totalorder %s176, %s179
      %p185 = scmp.eq.s32.totalorder %s14, 0
      %p186 = por %p184, %p185
      %p187 = scmp.ne.s32.totalorder %s176, %s179
      %p188 = scmp.eq.s32.totalorder %s19, 1
      %p189 = por %p187, %p188
      %p190 = scmp.ne.s32.totalorder %s179, %s180
      %p191 = scmp.eq.s32.totalorder %s19, 0
      %p192 = por %p190, %p191
      %p193 = scmp.ne.s32.totalorder %s179, %s180
      %p194 = scmp.eq.s32.totalorder %s20, 1
      %p195 = por %p193, %p194
      %p197 = scmp.ne.s32.totalorder %s180, %s196
      %p198 = scmp.eq.s32.totalorder %s20, 0
      %p199 = por %p197, %p198
      %p200 = scmp.le.s32.totalorder 1, %s14
      %p201 = scmp.lt.s32.totalorder %s14, 3
      %p202 = pnand %p200, %p201
      %p203 = pneg %p202
      // Predicated region
      $region9: #{tpu_custom_call.1} parent=5 // pred_check
        _
      $region10: #{tpu_custom_call.1} parent=5 // pred_check_branch
        %205 = sbr.rel (%p202) target = $region12
      $region11: #{tpu_custom_call.1} parent=5 // pred_region
        %s206 = ssub.s32 %s14, 1
        // Predicated region
        $region13: #{tpu_custom_call.1} parent=11 // pred_check
          %p207 = pneg %p61
        $region14: #{tpu_custom_call.1} parent=11 // pred_check_branch
          %209 = sbr.rel (%p207) target = $region16
        $region15: #{tpu_custom_call.1} parent=11 // pred_region
          _
        $region16: #{tpu_custom_call.1} parent=11 // pred_fallthru
          _
        // Predicated region
        $region17: #{tpu_custom_call.1} parent=11 // pred_check
          %p210 = pneg %p82
        $region18: #{tpu_custom_call.1} parent=11 // pred_check_branch
          %212 = sbr.rel (%p210) target = $region20
        $region19: #{tpu_custom_call.1} parent=11 // pred_region
          _
        $region20: #{tpu_custom_call.1} parent=11 // pred_fallthru
          _
        // Predicated region
        $region21: #{tpu_custom_call.1} parent=11 // pred_check
          %p213 = pneg %p103
        $region22: #{tpu_custom_call.1} parent=11 // pred_check_branch
          %215 = sbr.rel (%p213) target = $region24
        $region23: #{tpu_custom_call.1} parent=11 // pred_region
          %s217 = ssub.s32 9216, 9216
          %218 = vsyncadd [#allocation3], %s217
          %s219 = sshll.u32 [#allocation2], 4
          %s220 = int_to_ptr.vmem [resolvable:$true] %s219
          %225 = dma.hbm_to_vmem [thread:$0]  %s3, 9216, %s220, [#allocation3], 64, 64, 4
        $region24: #{tpu_custom_call.1} parent=11 // pred_fallthru
          _
        // Predicated region
        $region25: #{tpu_custom_call.1} parent=11 // pred_check
          %p226 = pneg %p124
        $region26: #{tpu_custom_call.1} parent=11 // pred_check_branch
          %228 = sbr.rel (%p226) target = $region28
        $region27: #{tpu_custom_call.1} parent=11 // pred_region
          _
        $region28: #{tpu_custom_call.1} parent=11 // pred_fallthru
          _
        // Predicated region
        $region29: #{tpu_custom_call.1} parent=11 // pred_check
          %p229 = pneg %p145
        $region30: #{tpu_custom_call.1} parent=11 // pred_check_branch
          %231 = sbr.rel (%p229) target = $region32
        $region31: #{tpu_custom_call.1} parent=11 // pred_region
          _
        $region32: #{tpu_custom_call.1} parent=11 // pred_fallthru
          _
        // Predicated region
        $region33: #{tpu_custom_call.1} parent=11 // pred_check
          %p232 = pneg %p166
        $region34: #{tpu_custom_call.1} parent=11 // pred_check_branch
          %234 = sbr.rel (%p232) target = $region36
        $region35: #{tpu_custom_call.1} parent=11 // pred_region
          _
        $region36: #{tpu_custom_call.1} parent=11 // pred_fallthru
          _
      $region12: #{tpu_custom_call.1} parent=5 // pred_fallthru
        _
      %p235 = scmp.lt.s32.totalorder %s14, 2
      // Predicated region
      $region37: #{tpu_custom_call.1} parent=5 // pred_check
        %p236 = pneg %p235
      $region38: #{tpu_custom_call.1} parent=5 // pred_check_branch
        %238 = sbr.rel (%p236) target = $region40
      $region39: #{tpu_custom_call.1} parent=5 // pred_region
        // Predicated region
        $region41: #{tpu_custom_call.1} parent=39 // pred_check
          %p239 = pneg %p34
        $region42: #{tpu_custom_call.1} parent=39 // pred_check_branch
          %241 = sbr.rel (%p239) target = $region44
        $region43: #{tpu_custom_call.1} parent=39 // pred_region
          %s242 = smul.u32 10, %s14
          %p243 = scmp.lt.s32.totalorder %s242, 19
          %s244 = scalar_select %p243, %s242, 19
          %s245 = smul.addr %s244, 8
          %s246 = scalar_lea.vmem %s0, %s245
          %s247 = smul.u32 10, %s14
        $region44: #{tpu_custom_call.1} parent=39 // pred_fallthru
          _
      $region40: #{tpu_custom_call.1} parent=5 // pred_fallthru
        _
      %p248 = scmp.le.s32.totalorder 1, %s14
      %p249 = scmp.lt.s32.totalorder %s14, 3
      %p250 = pnand %p248, %p249
      %p251 = pneg %p250
      // Predicated region
      $region45: #{tpu_custom_call.1} parent=5 // pred_check
        _
      $region46: #{tpu_custom_call.1} parent=5 // pred_check_branch
        %253 = sbr.rel (%p250) target = $region48
      $region47: #{tpu_custom_call.1} parent=5 // pred_region
        %s254 = ssub.s32 %s14, 1
        // Predicated region
        $region49: #{tpu_custom_call.1} parent=47 // pred_check
          %p255 = pneg %p103
        $region50: #{tpu_custom_call.1} parent=47 // pred_check_branch
          %257 = sbr.rel (%p255) target = $region52
        $region51: #{tpu_custom_call.1} parent=47 // pred_region
          %258 = dma.done [#allocation3], 9216
        $region52: #{tpu_custom_call.1} parent=47 // pred_fallthru
          _
        %s259 = smul.u32 10, %s19
        %p260 = scmp.lt.s32.totalorder %s259, 19
        %s261 = scalar_select %p260, %s259, 19
        %s262 = smul.addr %s261, 8
        %s263 = scalar_lea.vmem %s0, %s262
        %p264 = pneg %p40
        %p265 = pneg %p37
        %p266 = pneg %p61
        %p267 = pneg %p58
        %p268 = pneg %p82
        %p269 = pneg %p79
        %p270 = pneg %p103
        %p271 = pneg %p100
        %p272 = pneg %p124
        %p273 = pneg %p121
        %p274 = pneg %p145
        %p275 = pneg %p142
        %p276 = pneg %p166
        %p277 = pneg %p163
        %p278 = pneg %p192
        %p279 = pneg %p189
        %s280 = smul.u32 10, %s19
        %p281 = scmp.lt.s32.totalorder %s280, 19
        %s282 = scalar_select %p281, %s280, 19
        %s283 = smul.addr %s282, 8
        %s284 = scalar_lea.vmem %s7, %s283
        %s285 = smul.u32 10, %s19
        %p286 = scmp.lt.s32.totalorder %s285, 19
        %s287 = scalar_select %p286, %s285, 19
        %s288 = smul.addr %s287, 8
        %s289 = scalar_lea.vmem %s0, %s288
        %s290 = smul.u32 10, %s19
        %s291 = smul.u32 10, %s19
        %p292 = scmp.lt.s32.totalorder %s291, 19
        %s293 = scalar_select %p292, %s291, 19
        %s294 = smul.addr %s293, 8
        %s295 = scalar_lea.vmem %s7, %s294
        %s296 = smul.u32 10, %s19
        %v298 = vlaneseq
        %v299 = vand.u32 %v298, 127
        %v300 = vand.u32 %v299, 63
        %vm301 = vcmp.lt.s32.totalorder %v300, 50
        %v302 = vld [vmem:[%s289] sm:$0xff]
        %v303 = vld [vmem:[%s289 + $0x8] sm:$0xff]
        %v304 = vld [vmem:[%s289 + $0x10] sm:$0xff]
        %v305 = vld [vmem:[%s289 + $0x18] sm:$0xff]
        %v306 = vld [vmem:[%s289 + $0x20] sm:$0xff]
        %v307 = vld [vmem:[%s289 + $0x28] sm:$0xff]
        %v308 = vld [vmem:[%s289 + $0x30] sm:$0xff]
        %v309 = vld [vmem:[%s289 + $0x38] sm:$0xff]
        %v310 = vld [vmem:[%s289 + $0x40] sm:$0xff]
        %v311 = vld [vmem:[%s289 + $0x48] sm:$0xff]
        %v312 = vpack.c.bf16 %v303, %v302
        %v313 = vpack.c.bf16 %v305, %v304
        %v314 = vpack.c.bf16 %v307, %v306
        %v315 = vpack.c.bf16 %v309, %v308
        %v316 = vpack.c.bf16 %v311, %v310
        %v317 = vld [vmem:[%s1] sm:$0xf]
        %v318 = vld [vmem:[%s1 + $0x4] sm:$0xf]
        %v319 = vld [vmem:[%s2] sm:$0x1]
        %v321 = vlaneseq
        %v322 = vshrl.u32 %v321, 7
        %v323 = vsub.s32 0, %v322
        %v324 = vrot.slane %v319, %v323
        %v328 = vunpack.c.l.b16 %v317
        %v329 = vunpack.c.l.b16 %v318
        %v330 = vpack.c.b16 %v329, %v328
        %vm332 = vcmask 130048
        %v334 = vsel %vm332, %v312, 0
        %v337 = vsel %vm332, %v313, 0
        %v340 = vsel %vm332, %v314, 0
        %v343 = vsel %vm332, %v315, 0
        %v346 = vsel %vm332, %v316, 0
        %348 = vmatprep.subr.bf16.mxu0 0
        %349 = vmatpush1.bf16.msra.mxu0 0
        %350 = vmatprep.subr.bf16.mxu0 0
        %351 = vmatpush1.bf16.msra.mxu0 0
        %352 = vmatprep.subr.bf16.mxu0 0
        %353 = vmatpush1.bf16.msra.mxu0 0
        %354 = vmatprep.subr.bf16.mxu0 0
        %355 = vmatpush1.bf16.msra.mxu0 0
        %356 = vmatprep.subr.bf16.mxu0 0
        %357 = vmatpush1.bf16.msra.mxu0 0
        %358 = vmatprep.subr.bf16.mxu0 0
        %359 = vmatpush1.bf16.msra.mxu0 0
        %360 = vmatprep.subr.bf16.mxu0 0
        %361 = vmatpush1.bf16.msra.mxu0 0
        %362 = vmatprep.subr.bf16.mxu0 0
        %363 = vmatpush1.bf16.msra.mxu0 %v330
        %364 = vmatprep.subr.bf16.mxu0 0
        %365 = vmatpush2.bf16.msra.mxu0 0
        %366 = vmatprep.subr.bf16.mxu0 0
        %367 = vmatpush2.bf16.msra.mxu0 0
        %368 = vmatprep.subr.bf16.mxu0 0
        %369 = vmatpush2.bf16.msra.mxu0 0
        %370 = vmatprep.subr.bf16.mxu0 0
        %371 = vmatpush2.bf16.msra.mxu0 0
        %372 = vmatprep.subr.bf16.mxu0 0
        %373 = vmatpush2.bf16.msra.mxu0 0
        %374 = vmatprep.subr.bf16.mxu0 0
        %375 = vmatpush2.bf16.msra.mxu0 0
        %376 = vmatprep.subr.bf16.mxu0 0
        %377 = vmatpush2.bf16.msra.mxu0 0
        %378 = vmatprep.subr.bf16.mxu0 0
        %379 = vmatpush2.bf16.msra.mxu0 0
        %380 = vmatprep.mubr.bf16.mxu0 0
        %381 = vmatmul.mubr.bf16.gmra.mxu0 %v334
        %v382 = vpop.f32.mrf.mxu0
        %v383 = vadd.f32 %v324, %v382
        %v384 = vpop.f32.mrf.mxu0
        %v385 = vpop.f32.mrf.mxu0
        %v386 = vadd.f32 %v324, %v385
        %v387 = vpop.f32.mrf.mxu0
        %388 = vmatprep.mubr.bf16.mxu0 0
        %389 = vmatmul.mubr.bf16.gmra.mxu0 %v337
        %v390 = vpop.f32.mrf.mxu0
        %v391 = vadd.f32 %v324, %v390
        %v392 = vpop.f32.mrf.mxu0
        %v393 = vpop.f32.mrf.mxu0
        %v394 = vadd.f32 %v324, %v393
        %v395 = vpop.f32.mrf.mxu0
        %396 = vmatprep.mubr.bf16.mxu0 0
        %397 = vmatmul.mubr.bf16.gmra.mxu0 %v340
        %v398 = vpop.f32.mrf.mxu0
        %v399 = vadd.f32 %v324, %v398
        %v400 = vpop.f32.mrf.mxu0
        %v401 = vpop.f32.mrf.mxu0
        %v402 = vadd.f32 %v324, %v401
        %v403 = vpop.f32.mrf.mxu0
        %404 = vmatprep.mubr.bf16.mxu0 0
        %405 = vmatmul.mubr.bf16.gmra.mxu0 %v343
        %v406 = vpop.f32.mrf.mxu0
        %v407 = vadd.f32 %v324, %v406
        %v408 = vpop.f32.mrf.mxu0
        %v409 = vpop.f32.mrf.mxu0
        %v410 = vadd.f32 %v324, %v409
        %v411 = vpop.f32.mrf.mxu0
        %412 = vmatprep.mubr.bf16.mxu0 0
        %413 = vmatmul.mubr.bf16.gmra.mxu0 %v346
        %v414 = vpop.f32.mrf.mxu0
        %v415 = vadd.f32 %v324, %v414
        %v416 = vpop.f32.mrf.mxu0
        %v417 = vpop.f32.mrf.mxu0
        %v418 = vadd.f32 %v324, %v417
        %v419 = vpop.f32.mrf.mxu0
        %420 = vdwg.mxu0
        %v421 = vmax.f32 %v383, 0.0
        %v422 = vmax.f32 %v386, 0.0
        %v423 = vmax.f32 %v391, 0.0
        %v424 = vmax.f32 %v394, 0.0
        %v425 = vmax.f32 %v399, 0.0
        %v426 = vmax.f32 %v402, 0.0
        %v427 = vmax.f32 %v407, 0.0
        %v428 = vmax.f32 %v410, 0.0
        %v429 = vmax.f32 %v415, 0.0
        %v430 = vmax.f32 %v418, 0.0
        %v431 = vand.u32 2147483647, %v383
        %v432 = vand.u32 2147483647, %v386
        %v433 = vand.u32 2147483647, %v391
        %v434 = vand.u32 2147483647, %v394
        %v435 = vand.u32 2147483647, %v399
        %v436 = vand.u32 2147483647, %v402
        %v437 = vand.u32 2147483647, %v407
        %v438 = vand.u32 2147483647, %v410
        %v439 = vand.u32 2147483647, %v415
        %v440 = vand.u32 2147483647, %v418
        %v441 = vsub.f32 0.0, %v431
        %v442 = vsub.f32 0.0, %v432
        %v443 = vsub.f32 0.0, %v433
        %v444 = vsub.f32 0.0, %v434
        %v445 = vsub.f32 0.0, %v435
        %v446 = vsub.f32 0.0, %v436
        %v447 = vsub.f32 0.0, %v437
        %v448 = vsub.f32 0.0, %v438
        %v449 = vsub.f32 0.0, %v439
        %v450 = vsub.f32 0.0, %v440
        %v451 = vmul.f32 %v441, 1.442695
        %v452 = vpow.pop %v451
        %v453 = vmul.f32 %v442, 1.442695
        %v454 = vpow.pop %v453
        %v455 = vmul.f32 %v443, 1.442695
        %v456 = vpow.pop %v455
        %v457 = vmul.f32 %v444, 1.442695
        %v458 = vpow.pop %v457
        %v459 = vmul.f32 %v445, 1.442695
        %v460 = vpow.pop %v459
        %v461 = vmul.f32 %v446, 1.442695
        %v462 = vpow.pop %v461
        %v463 = vmul.f32 %v447, 1.442695
        %v464 = vpow.pop %v463
        %v465 = vmul.f32 %v448, 1.442695
        %v466 = vpow.pop %v465
        %v467 = vmul.f32 %v449, 1.442695
        %v468 = vpow.pop %v467
        %v469 = vmul.f32 %v450, 1.442695
        %v470 = vpow.pop %v469
        %v471 = vadd.f32 %v452, 1.0
        %v472 = vlog2.pop %v471
        %v473 = vmul.f32 %v472, 0.6931472
        %v474 = vmul.f32 -0.5, %v452
        %v475 = vadd.f32 %v474, 1.0
        %v476 = vmul.f32 %v475, %v452
        %v477 = vand.u32 2147483647, %v452
        %vm478 = vcmp.lt.f32.partialorder %v477, 0.0004427343
        %v479 = vsel %vm478, %v476, %v473
        %v480 = vadd.f32 %v454, 1.0
        %v481 = vlog2.pop %v480
        %v482 = vmul.f32 %v481, 0.6931472
        %v483 = vmul.f32 -0.5, %v454
        %v484 = vadd.f32 %v483, 1.0
        %v485 = vmul.f32 %v484, %v454
        %v486 = vand.u32 2147483647, %v454
        %vm487 = vcmp.lt.f32.partialorder %v486, 0.0004427343
        %v488 = vsel %vm487, %v485, %v482
        %v489 = vadd.f32 %v456, 1.0
        %v490 = vlog2.pop %v489
        %v491 = vmul.f32 %v490, 0.6931472
        %v492 = vmul.f32 -0.5, %v456
        %v493 = vadd.f32 %v492, 1.0
        %v494 = vmul.f32 %v493, %v456
        %v495 = vand.u32 2147483647, %v456
        %vm496 = vcmp.lt.f32.partialorder %v495, 0.0004427343
        %v497 = vsel %vm496, %v494, %v491
        %v498 = vadd.f32 %v458, 1.0
        %v499 = vlog2.pop %v498
        %v500 = vmul.f32 %v499, 0.6931472
        %v501 = vmul.f32 -0.5, %v458
        %v502 = vadd.f32 %v501, 1.0
        %v503 = vmul.f32 %v502, %v458
        %v504 = vand.u32 2147483647, %v458
        %vm505 = vcmp.lt.f32.partialorder %v504, 0.0004427343
        %v506 = vsel %vm505, %v503, %v500
        %v507 = vadd.f32 %v460, 1.0
        %v508 = vlog2.pop %v507
        %v509 = vmul.f32 %v508, 0.6931472
        %v510 = vmul.f32 -0.5, %v460
        %v511 = vadd.f32 %v510, 1.0
        %v512 = vmul.f32 %v511, %v460
        %v513 = vand.u32 2147483647, %v460
        %vm514 = vcmp.lt.f32.partialorder %v513, 0.0004427343
        %v515 = vsel %vm514, %v512, %v509
        %v516 = vadd.f32 %v462, 1.0
        %v517 = vlog2.pop %v516
        %v518 = vmul.f32 %v517, 0.6931472
        %v519 = vmul.f32 -0.5, %v462
        %v520 = vadd.f32 %v519, 1.0
        %v521 = vmul.f32 %v520, %v462
        %v522 = vand.u32 2147483647, %v462
        %vm523 = vcmp.lt.f32.partialorder %v522, 0.0004427343
        %v524 = vsel %vm523, %v521, %v518
        %v525 = vadd.f32 %v464, 1.0
        %v526 = vlog2.pop %v525
        %v527 = vmul.f32 %v526, 0.6931472
        %v528 = vmul.f32 -0.5, %v464
        %v529 = vadd.f32 %v528, 1.0
        %v530 = vmul.f32 %v529, %v464
        %v531 = vand.u32 2147483647, %v464
        %vm532 = vcmp.lt.f32.partialorder %v531, 0.0004427343
        %v533 = vsel %vm532, %v530, %v527
        %v534 = vadd.f32 %v466, 1.0
        %v535 = vlog2.pop %v534
        %v536 = vmul.f32 %v535, 0.6931472
        %v537 = vmul.f32 -0.5, %v466
        %v538 = vadd.f32 %v537, 1.0
        %v539 = vmul.f32 %v538, %v466
        %v540 = vand.u32 2147483647, %v466
        %vm541 = vcmp.lt.f32.partialorder %v540, 0.0004427343
        %v542 = vsel %vm541, %v539, %v536
        %v543 = vadd.f32 %v468, 1.0
        %v544 = vlog2.pop %v543
        %v545 = vmul.f32 %v544, 0.6931472
        %v546 = vmul.f32 -0.5, %v468
        %v547 = vadd.f32 %v546, 1.0
        %v548 = vmul.f32 %v547, %v468
        %v549 = vand.u32 2147483647, %v468
        %vm550 = vcmp.lt.f32.partialorder %v549, 0.0004427343
        %v551 = vsel %vm550, %v548, %v545
        %v552 = vadd.f32 %v470, 1.0
        %v553 = vlog2.pop %v552
        %v554 = vmul.f32 %v553, 0.6931472
        %v555 = vmul.f32 -0.5, %v470
        %v556 = vadd.f32 %v555, 1.0
        %v557 = vmul.f32 %v556, %v470
        %v558 = vand.u32 2147483647, %v470
        %vm559 = vcmp.lt.f32.partialorder %v558, 0.0004427343
        %v560 = vsel %vm559, %v557, %v554
        %v561 = vadd.f32 %v421, %v479
        %v562 = vadd.f32 %v422, %v488
        %v563 = vadd.f32 %v423, %v497
        %v564 = vadd.f32 %v424, %v506
        %v565 = vadd.f32 %v425, %v515
        %v566 = vadd.f32 %v426, %v524
        %v567 = vadd.f32 %v427, %v533
        %v568 = vadd.f32 %v428, %v542
        %v569 = vadd.f32 %v429, %v551
        %v570 = vadd.f32 %v430, %v560
        %v571 = vsub.f32 0.0, %v561
        %v572 = vsub.f32 0.0, %v562
        %v573 = vsub.f32 0.0, %v563
        %v574 = vsub.f32 0.0, %v564
        %v575 = vsub.f32 0.0, %v565
        %v576 = vsub.f32 0.0, %v566
        %v577 = vsub.f32 0.0, %v567
        %v578 = vsub.f32 0.0, %v568
        %v579 = vsub.f32 0.0, %v569
        %v580 = vsub.f32 0.0, %v570
        %v581 = vsel %vm301, %v571, %v383
        %v582 = vsel %vm301, %v572, %v386
        %v583 = vsel %vm301, %v573, %v391
        %v584 = vsel %vm301, %v574, %v394
        %v585 = vsel %vm301, %v575, %v399
        %v586 = vsel %vm301, %v576, %v402
        %v587 = vsel %vm301, %v577, %v407
        %v588 = vsel %vm301, %v578, %v410
        %v589 = vsel %vm301, %v579, %v415
        %v590 = vsel %vm301, %v580, %v418
        %v591 = vpack.c.bf16 %v582, %v581
        %v592 = vpack.c.bf16 %v584, %v583
        %v593 = vpack.c.bf16 %v586, %v585
        %v594 = vpack.c.bf16 %v588, %v587
        %v595 = vpack.c.bf16 %v590, %v589
        %v596 = vld [vmem:[#allocation2] sm:$0xf]
        %v597 = vld [vmem:[#allocation2 + $0x4] sm:$0xf]
        %v598 = vld [vmem:[#allocation2 + $0x8] sm:$0xf]
        %v599 = vld [vmem:[#allocation2 + $0xc] sm:$0xf]
        %v600 = vld [vmem:[#allocation2 + $0x10] sm:$0xf]
        %v601 = vld [vmem:[#allocation2 + $0x14] sm:$0xf]
        %v602 = vld [vmem:[#allocation2 + $0x18] sm:$0xf]
        %v603 = vld [vmem:[#allocation2 + $0x1c] sm:$0xf]
        %v604 = vld [vmem:[#allocation2 + $0x20] sm:$0xf]
        %v605 = vld [vmem:[#allocation2 + $0x24] sm:$0xf]
        %v606 = vld [vmem:[#allocation2 + $0x28] sm:$0xf]
        %v607 = vld [vmem:[#allocation2 + $0x2c] sm:$0xf]
        %v608 = vld [vmem:[#allocation2 + $0x30] sm:$0xf]
        %v609 = vld [vmem:[#allocation2 + $0x34] sm:$0xf]
        %v610 = vld [vmem:[#allocation2 + $0x38] sm:$0xf]
        %v611 = vld [vmem:[#allocation2 + $0x3c] sm:$0xf]
        %v612 = vld [vmem:[%s4] sm:$0x1]
        %v614 = vlaneseq
        %v615 = vshrl.u32 %v614, 7
        %v616 = vsub.s32 0, %v615
        %v617 = vrot.slane %v612, %v616
        %v635 = vunpack.c.l.b16 %v596
        %v636 = vunpack.c.l.b16 %v597
        %v637 = vunpack.c.l.b16 %v598
        %v638 = vunpack.c.l.b16 %v599
        %v639 = vunpack.c.l.b16 %v600
        %v640 = vunpack.c.l.b16 %v601
        %v641 = vunpack.c.l.b16 %v602
        %v642 = vunpack.c.l.b16 %v603
        %v643 = vunpack.c.l.b16 %v604
        %v644 = vunpack.c.l.b16 %v605
        %v645 = vunpack.c.l.b16 %v606
        %v646 = vunpack.c.l.b16 %v607
        %v647 = vunpack.c.l.b16 %v608
        %v648 = vunpack.c.l.b16 %v609
        %v649 = vunpack.c.l.b16 %v610
        %v650 = vunpack.c.l.b16 %v611
        %v651 = vpack.c.b16 %v636, %v635
        %v652 = vpack.c.b16 %v638, %v637
        %v653 = vpack.c.b16 %v640, %v639
        %v654 = vpack.c.b16 %v642, %v641
        %v655 = vpack.c.b16 %v644, %v643
        %v656 = vpack.c.b16 %v646, %v645
        %v657 = vpack.c.b16 %v648, %v647
        %v658 = vpack.c.b16 %v650, %v649
        %667 = vmatprep.subr.bf16.mxu0 0
        %668 = vmatpush1.bf16.msra.mxu0 %v658
        %669 = vmatprep.subr.bf16.mxu0 0
        %670 = vmatpush1.bf16.msra.mxu0 %v657
        %671 = vmatprep.subr.bf16.mxu0 0
        %672 = vmatpush1.bf16.msra.mxu0 %v656
        %673 = vmatprep.subr.bf16.mxu0 0
        %674 = vmatpush1.bf16.msra.mxu0 %v655
        %675 = vmatprep.subr.bf16.mxu0 0
        %676 = vmatpush1.bf16.msra.mxu0 %v654
        %677 = vmatprep.subr.bf16.mxu0 0
        %678 = vmatpush1.bf16.msra.mxu0 %v653
        %679 = vmatprep.subr.bf16.mxu0 0
        %680 = vmatpush1.bf16.msra.mxu0 %v652
        %681 = vmatprep.subr.bf16.mxu0 0
        %682 = vmatpush1.bf16.msra.mxu0 %v651
        %683 = vmatprep.subr.bf16.mxu0 0
        %684 = vmatpush2.bf16.msra.mxu0 0
        %685 = vmatprep.subr.bf16.mxu0 0
        %686 = vmatpush2.bf16.msra.mxu0 0
        %687 = vmatprep.subr.bf16.mxu0 0
        %688 = vmatpush2.bf16.msra.mxu0 0
        %689 = vmatprep.subr.bf16.mxu0 0
        %690 = vmatpush2.bf16.msra.mxu0 0
        %691 = vmatprep.subr.bf16.mxu0 0
        %692 = vmatpush2.bf16.msra.mxu0 0
        %693 = vmatprep.subr.bf16.mxu0 0
        %694 = vmatpush2.bf16.msra.mxu0 0
        %695 = vmatprep.subr.bf16.mxu0 0
        %696 = vmatpush2.bf16.msra.mxu0 0
        %697 = vmatprep.subr.bf16.mxu0 0
        %698 = vmatpush2.bf16.msra.mxu0 0
        %699 = vmatprep.mubr.bf16.mxu0 0
        %700 = vmatmul.mubr.bf16.gmra.mxu0 %v591
        %v701 = vpop.f32.mrf.mxu0
        %v702 = vadd.f32 %v617, %v701
        %v703 = vpop.f32.mrf.mxu0
        %v704 = vpop.f32.mrf.mxu0
        %v705 = vadd.f32 %v617, %v704
        %v706 = vpop.f32.mrf.mxu0
        %707 = vmatprep.mubr.bf16.mxu0 0
        %708 = vmatmul.mubr.bf16.gmra.mxu0 %v592
        %v709 = vpop.f32.mrf.mxu0
        %v710 = vadd.f32 %v617, %v709
        %v711 = vpop.f32.mrf.mxu0
        %v712 = vpop.f32.mrf.mxu0
        %v713 = vadd.f32 %v617, %v712
        %v714 = vpop.f32.mrf.mxu0
        %715 = vmatprep.mubr.bf16.mxu0 0
        %716 = vmatmul.mubr.bf16.gmra.mxu0 %v593
        %v717 = vpop.f32.mrf.mxu0
        %v718 = vadd.f32 %v617, %v717
        %v719 = vpop.f32.mrf.mxu0
        %v720 = vpop.f32.mrf.mxu0
        %v721 = vadd.f32 %v617, %v720
        %v722 = vpop.f32.mrf.mxu0
        %723 = vmatprep.mubr.bf16.mxu0 0
        %724 = vmatmul.mubr.bf16.gmra.mxu0 %v594
        %v725 = vpop.f32.mrf.mxu0
        %v726 = vadd.f32 %v617, %v725
        %v727 = vpop.f32.mrf.mxu0
        %v728 = vpop.f32.mrf.mxu0
        %v729 = vadd.f32 %v617, %v728
        %v730 = vpop.f32.mrf.mxu0
        %731 = vmatprep.mubr.bf16.mxu0 0
        %732 = vmatmul.mubr.bf16.gmra.mxu0 %v595
        %v733 = vpop.f32.mrf.mxu0
        %v734 = vadd.f32 %v617, %v733
        %v735 = vpop.f32.mrf.mxu0
        %v736 = vpop.f32.mrf.mxu0
        %v737 = vadd.f32 %v617, %v736
        %v738 = vpop.f32.mrf.mxu0
        %739 = vdwg.mxu0
        %v740 = vmax.f32 %v702, 0.0
        %v741 = vmax.f32 %v705, 0.0
        %v742 = vmax.f32 %v710, 0.0
        %v743 = vmax.f32 %v713, 0.0
        %v744 = vmax.f32 %v718, 0.0
        %v745 = vmax.f32 %v721, 0.0
        %v746 = vmax.f32 %v726, 0.0
        %v747 = vmax.f32 %v729, 0.0
        %v748 = vmax.f32 %v734, 0.0
        %v749 = vmax.f32 %v737, 0.0
        %v750 = vand.u32 2147483647, %v702
        %v751 = vand.u32 2147483647, %v705
        %v752 = vand.u32 2147483647, %v710
        %v753 = vand.u32 2147483647, %v713
        %v754 = vand.u32 2147483647, %v718
        %v755 = vand.u32 2147483647, %v721
        %v756 = vand.u32 2147483647, %v726
        %v757 = vand.u32 2147483647, %v729
        %v758 = vand.u32 2147483647, %v734
        %v759 = vand.u32 2147483647, %v737
        %v760 = vsub.f32 0.0, %v750
        %v761 = vsub.f32 0.0, %v751
        %v762 = vsub.f32 0.0, %v752
        %v763 = vsub.f32 0.0, %v753
        %v764 = vsub.f32 0.0, %v754
        %v765 = vsub.f32 0.0, %v755
        %v766 = vsub.f32 0.0, %v756
        %v767 = vsub.f32 0.0, %v757
        %v768 = vsub.f32 0.0, %v758
        %v769 = vsub.f32 0.0, %v759
        %v770 = vmul.f32 %v760, 1.442695
        %v771 = vpow.pop %v770
        %v772 = vmul.f32 %v761, 1.442695
        %v773 = vpow.pop %v772
        %v774 = vmul.f32 %v762, 1.442695
        %v775 = vpow.pop %v774
        %v776 = vmul.f32 %v763, 1.442695
        %v777 = vpow.pop %v776
        %v778 = vmul.f32 %v764, 1.442695
        %v779 = vpow.pop %v778
        %v780 = vmul.f32 %v765, 1.442695
        %v781 = vpow.pop %v780
        %v782 = vmul.f32 %v766, 1.442695
        %v783 = vpow.pop %v782
        %v784 = vmul.f32 %v767, 1.442695
        %v785 = vpow.pop %v784
        %v786 = vmul.f32 %v768, 1.442695
        %v787 = vpow.pop %v786
        %v788 = vmul.f32 %v769, 1.442695
        %v789 = vpow.pop %v788
        %v790 = vadd.f32 %v771, 1.0
        %v791 = vlog2.pop %v790
        %v792 = vmul.f32 %v791, 0.6931472
        %v793 = vmul.f32 -0.5, %v771
        %v794 = vadd.f32 %v793, 1.0
        %v795 = vmul.f32 %v794, %v771
        %v796 = vand.u32 2147483647, %v771
        %vm797 = vcmp.lt.f32.partialorder %v796, 0.0004427343
        %v798 = vsel %vm797, %v795, %v792
        %v799 = vadd.f32 %v773, 1.0
        %v800 = vlog2.pop %v799
        %v801 = vmul.f32 %v800, 0.6931472
        %v802 = vmul.f32 -0.5, %v773
        %v803 = vadd.f32 %v802, 1.0
        %v804 = vmul.f32 %v803, %v773
        %v805 = vand.u32 2147483647, %v773
        %vm806 = vcmp.lt.f32.partialorder %v805, 0.0004427343
        %v807 = vsel %vm806, %v804, %v801
        %v808 = vadd.f32 %v775, 1.0
        %v809 = vlog2.pop %v808
        %v810 = vmul.f32 %v809, 0.6931472
        %v811 = vmul.f32 -0.5, %v775
        %v812 = vadd.f32 %v811, 1.0
        %v813 = vmul.f32 %v812, %v775
        %v814 = vand.u32 2147483647, %v775
        %vm815 = vcmp.lt.f32.partialorder %v814, 0.0004427343
        %v816 = vsel %vm815, %v813, %v810
        %v817 = vadd.f32 %v777, 1.0
        %v818 = vlog2.pop %v817
        %v819 = vmul.f32 %v818, 0.6931472
        %v820 = vmul.f32 -0.5, %v777
        %v821 = vadd.f32 %v820, 1.0
        %v822 = vmul.f32 %v821, %v777
        %v823 = vand.u32 2147483647, %v777
        %vm824 = vcmp.lt.f32.partialorder %v823, 0.0004427343
        %v825 = vsel %vm824, %v822, %v819
        %v826 = vadd.f32 %v779, 1.0
        %v827 = vlog2.pop %v826
        %v828 = vmul.f32 %v827, 0.6931472
        %v829 = vmul.f32 -0.5, %v779
        %v830 = vadd.f32 %v829, 1.0
        %v831 = vmul.f32 %v830, %v779
        %v832 = vand.u32 2147483647, %v779
        %vm833 = vcmp.lt.f32.partialorder %v832, 0.0004427343
        %v834 = vsel %vm833, %v831, %v828
        %v835 = vadd.f32 %v781, 1.0
        %v836 = vlog2.pop %v835
        %v837 = vmul.f32 %v836, 0.6931472
        %v838 = vmul.f32 -0.5, %v781
        %v839 = vadd.f32 %v838, 1.0
        %v840 = vmul.f32 %v839, %v781
        %v841 = vand.u32 2147483647, %v781
        %vm842 = vcmp.lt.f32.partialorder %v841, 0.0004427343
        %v843 = vsel %vm842, %v840, %v837
        %v844 = vadd.f32 %v783, 1.0
        %v845 = vlog2.pop %v844
        %v846 = vmul.f32 %v845, 0.6931472
        %v847 = vmul.f32 -0.5, %v783
        %v848 = vadd.f32 %v847, 1.0
        %v849 = vmul.f32 %v848, %v783
        %v850 = vand.u32 2147483647, %v783
        %vm851 = vcmp.lt.f32.partialorder %v850, 0.0004427343
        %v852 = vsel %vm851, %v849, %v846
        %v853 = vadd.f32 %v785, 1.0
        %v854 = vlog2.pop %v853
        %v855 = vmul.f32 %v854, 0.6931472
        %v856 = vmul.f32 -0.5, %v785
        %v857 = vadd.f32 %v856, 1.0
        %v858 = vmul.f32 %v857, %v785
        %v859 = vand.u32 2147483647, %v785
        %vm860 = vcmp.lt.f32.partialorder %v859, 0.0004427343
        %v861 = vsel %vm860, %v858, %v855
        %v862 = vadd.f32 %v787, 1.0
        %v863 = vlog2.pop %v862
        %v864 = vmul.f32 %v863, 0.6931472
        %v865 = vmul.f32 -0.5, %v787
        %v866 = vadd.f32 %v865, 1.0
        %v867 = vmul.f32 %v866, %v787
        %v868 = vand.u32 2147483647, %v787
        %vm869 = vcmp.lt.f32.partialorder %v868, 0.0004427343
        %v870 = vsel %vm869, %v867, %v864
        %v871 = vadd.f32 %v789, 1.0
        %v872 = vlog2.pop %v871
        %v873 = vmul.f32 %v872, 0.6931472
        %v874 = vmul.f32 -0.5, %v789
        %v875 = vadd.f32 %v874, 1.0
        %v876 = vmul.f32 %v875, %v789
        %v877 = vand.u32 2147483647, %v789
        %vm878 = vcmp.lt.f32.partialorder %v877, 0.0004427343
        %v879 = vsel %vm878, %v876, %v873
        %v880 = vadd.f32 %v740, %v798
        %v881 = vadd.f32 %v741, %v807
        %v882 = vadd.f32 %v742, %v816
        %v883 = vadd.f32 %v743, %v825
        %v884 = vadd.f32 %v744, %v834
        %v885 = vadd.f32 %v745, %v843
        %v886 = vadd.f32 %v746, %v852
        %v887 = vadd.f32 %v747, %v861
        %v888 = vadd.f32 %v748, %v870
        %v889 = vadd.f32 %v749, %v879
        %v890 = vsub.f32 0.0, %v880
        %v891 = vsub.f32 0.0, %v881
        %v892 = vsub.f32 0.0, %v882
        %v893 = vsub.f32 0.0, %v883
        %v894 = vsub.f32 0.0, %v884
        %v895 = vsub.f32 0.0, %v885
        %v896 = vsub.f32 0.0, %v886
        %v897 = vsub.f32 0.0, %v887
        %v898 = vsub.f32 0.0, %v888
        %v899 = vsub.f32 0.0, %v889
        %v900 = vsel %vm301, %v890, %v702
        %v901 = vsel %vm301, %v891, %v705
        %v902 = vsel %vm301, %v892, %v710
        %v903 = vsel %vm301, %v893, %v713
        %v904 = vsel %vm301, %v894, %v718
        %v905 = vsel %vm301, %v895, %v721
        %v906 = vsel %vm301, %v896, %v726
        %v907 = vsel %vm301, %v897, %v729
        %v908 = vsel %vm301, %v898, %v734
        %v909 = vsel %vm301, %v899, %v737
        %v910 = vpack.c.bf16 %v901, %v900
        %v911 = vpack.c.bf16 %v903, %v902
        %v912 = vpack.c.bf16 %v905, %v904
        %v913 = vpack.c.bf16 %v907, %v906
        %v914 = vpack.c.bf16 %v909, %v908
        %s915 = scalar_lea.vmem [#allocation2], 64
        %v916 = vld [vmem:[%s915] sm:$0xf]
        %v917 = vld [vmem:[%s915 + $0x4] sm:$0xf]
        %v918 = vld [vmem:[%s915 + $0x8] sm:$0xf]
        %v919 = vld [vmem:[%s915 + $0xc] sm:$0xf]
        %v920 = vld [vmem:[%s915 + $0x10] sm:$0xf]
        %v921 = vld [vmem:[%s915 + $0x14] sm:$0xf]
        %v922 = vld [vmem:[%s915 + $0x18] sm:$0xf]
        %v923 = vld [vmem:[%s915 + $0x1c] sm:$0xf]
        %v924 = vld [vmem:[%s915 + $0x20] sm:$0xf]
        %v925 = vld [vmem:[%s915 + $0x24] sm:$0xf]
        %v926 = vld [vmem:[%s915 + $0x28] sm:$0xf]
        %v927 = vld [vmem:[%s915 + $0x2c] sm:$0xf]
        %v928 = vld [vmem:[%s915 + $0x30] sm:$0xf]
        %v929 = vld [vmem:[%s915 + $0x34] sm:$0xf]
        %v930 = vld [vmem:[%s915 + $0x38] sm:$0xf]
        %v931 = vld [vmem:[%s915 + $0x3c] sm:$0xf]
        %s932 = scalar_lea.vmem %s4, 1
        %v933 = vld [vmem:[%s932] sm:$0x1]
        %v935 = vlaneseq
        %v936 = vshrl.u32 %v935, 7
        %v937 = vsub.s32 0, %v936
        %v938 = vrot.slane %v933, %v937
        %v956 = vunpack.c.l.b16 %v916
        %v957 = vunpack.c.l.b16 %v917
        %v958 = vunpack.c.l.b16 %v918
        %v959 = vunpack.c.l.b16 %v919
        %v960 = vunpack.c.l.b16 %v920
        %v961 = vunpack.c.l.b16 %v921
        %v962 = vunpack.c.l.b16 %v922
        %v963 = vunpack.c.l.b16 %v923
        %v964 = vunpack.c.l.b16 %v924
        %v965 = vunpack.c.l.b16 %v925
        %v966 = vunpack.c.l.b16 %v926
        %v967 = vunpack.c.l.b16 %v927
        %v968 = vunpack.c.l.b16 %v928
        %v969 = vunpack.c.l.b16 %v929
        %v970 = vunpack.c.l.b16 %v930
        %v971 = vunpack.c.l.b16 %v931
        %v972 = vpack.c.b16 %v957, %v956
        %v973 = vpack.c.b16 %v959, %v958
        %v974 = vpack.c.b16 %v961, %v960
        %v975 = vpack.c.b16 %v963, %v962
        %v976 = vpack.c.b16 %v965, %v964
        %v977 = vpack.c.b16 %v967, %v966
        %v978 = vpack.c.b16 %v969, %v968
        %v979 = vpack.c.b16 %v971, %v970
        %988 = vmatprep.subr.bf16.mxu0 0
        %989 = vmatpush1.bf16.msra.mxu0 %v979
        %990 = vmatprep.subr.bf16.mxu0 0
        %991 = vmatpush1.bf16.msra.mxu0 %v978
        %992 = vmatprep.subr.bf16.mxu0 0
        %993 = vmatpush1.bf16.msra.mxu0 %v977
        %994 = vmatprep.subr.bf16.mxu0 0
        %995 = vmatpush1.bf16.msra.mxu0 %v976
        %996 = vmatprep.subr.bf16.mxu0 0
        %997 = vmatpush1.bf16.msra.mxu0 %v975
        %998 = vmatprep.subr.bf16.mxu0 0
        %999 = vmatpush1.bf16.msra.mxu0 %v974
        %1000 = vmatprep.subr.bf16.mxu0 0
        %1001 = vmatpush1.bf16.msra.mxu0 %v973
        %1002 = vmatprep.subr.bf16.mxu0 0
        %1003 = vmatpush1.bf16.msra.mxu0 %v972
        %1004 = vmatprep.subr.bf16.mxu0 0
        %1005 = vmatpush2.bf16.msra.mxu0 0
        %1006 = vmatprep.subr.bf16.mxu0 0
        %1007 = vmatpush2.bf16.msra.mxu0 0
        %1008 = vmatprep.subr.bf16.mxu0 0
        %1009 = vmatpush2.bf16.msra.mxu0 0
        %1010 = vmatprep.subr.bf16.mxu0 0
        %1011 = vmatpush2.bf16.msra.mxu0 0
        %1012 = vmatprep.subr.bf16.mxu0 0
        %1013 = vmatpush2.bf16.msra.mxu0 0
        %1014 = vmatprep.subr.bf16.mxu0 0
        %1015 = vmatpush2.bf16.msra.mxu0 0
        %1016 = vmatprep.subr.bf16.mxu0 0
        %1017 = vmatpush2.bf16.msra.mxu0 0
        %1018 = vmatprep.subr.bf16.mxu0 0
        %1019 = vmatpush2.bf16.msra.mxu0 0
        %1020 = vmatprep.mubr.bf16.mxu0 0
        %1021 = vmatmul.mubr.bf16.gmra.mxu0 %v910
        %v1022 = vpop.f32.mrf.mxu0
        %v1023 = vadd.f32 %v938, %v1022
        %v1024 = vpop.f32.mrf.mxu0
        %v1025 = vpop.f32.mrf.mxu0
        %v1026 = vadd.f32 %v938, %v1025
        %v1027 = vpop.f32.mrf.mxu0
        %1028 = vmatprep.mubr.bf16.mxu0 0
        %1029 = vmatmul.mubr.bf16.gmra.mxu0 %v911
        %v1030 = vpop.f32.mrf.mxu0
        %v1031 = vadd.f32 %v938, %v1030
        %v1032 = vpop.f32.mrf.mxu0
        %v1033 = vpop.f32.mrf.mxu0
        %v1034 = vadd.f32 %v938, %v1033
        %v1035 = vpop.f32.mrf.mxu0
        %1036 = vmatprep.mubr.bf16.mxu0 0
        %1037 = vmatmul.mubr.bf16.gmra.mxu0 %v912
        %v1038 = vpop.f32.mrf.mxu0
        %v1039 = vadd.f32 %v938, %v1038
        %v1040 = vpop.f32.mrf.mxu0
        %v1041 = vpop.f32.mrf.mxu0
        %v1042 = vadd.f32 %v938, %v1041
        %v1043 = vpop.f32.mrf.mxu0
        %1044 = vmatprep.mubr.bf16.mxu0 0
        %1045 = vmatmul.mubr.bf16.gmra.mxu0 %v913
        %v1046 = vpop.f32.mrf.mxu0
        %v1047 = vadd.f32 %v938, %v1046
        %v1048 = vpop.f32.mrf.mxu0
        %v1049 = vpop.f32.mrf.mxu0
        %v1050 = vadd.f32 %v938, %v1049
        %v1051 = vpop.f32.mrf.mxu0
        %1052 = vmatprep.mubr.bf16.mxu0 0
        %1053 = vmatmul.mubr.bf16.gmra.mxu0 %v914
        %v1054 = vpop.f32.mrf.mxu0
        %v1055 = vadd.f32 %v938, %v1054
        %v1056 = vpop.f32.mrf.mxu0
        %v1057 = vpop.f32.mrf.mxu0
        %v1058 = vadd.f32 %v938, %v1057
        %v1059 = vpop.f32.mrf.mxu0
        %1060 = vdwg.mxu0
        %v1061 = vmax.f32 %v1023, 0.0
        %v1062 = vmax.f32 %v1026, 0.0
        %v1063 = vmax.f32 %v1031, 0.0
        %v1064 = vmax.f32 %v1034, 0.0
        %v1065 = vmax.f32 %v1039, 0.0
        %v1066 = vmax.f32 %v1042, 0.0
        %v1067 = vmax.f32 %v1047, 0.0
        %v1068 = vmax.f32 %v1050, 0.0
        %v1069 = vmax.f32 %v1055, 0.0
        %v1070 = vmax.f32 %v1058, 0.0
        %v1071 = vand.u32 2147483647, %v1023
        %v1072 = vand.u32 2147483647, %v1026
        %v1073 = vand.u32 2147483647, %v1031
        %v1074 = vand.u32 2147483647, %v1034
        %v1075 = vand.u32 2147483647, %v1039
        %v1076 = vand.u32 2147483647, %v1042
        %v1077 = vand.u32 2147483647, %v1047
        %v1078 = vand.u32 2147483647, %v1050
        %v1079 = vand.u32 2147483647, %v1055
        %v1080 = vand.u32 2147483647, %v1058
        %v1081 = vsub.f32 0.0, %v1071
        %v1082 = vsub.f32 0.0, %v1072
        %v1083 = vsub.f32 0.0, %v1073
        %v1084 = vsub.f32 0.0, %v1074
        %v1085 = vsub.f32 0.0, %v1075
        %v1086 = vsub.f32 0.0, %v1076
        %v1087 = vsub.f32 0.0, %v1077
        %v1088 = vsub.f32 0.0, %v1078
        %v1089 = vsub.f32 0.0, %v1079
        %v1090 = vsub.f32 0.0, %v1080
        %v1091 = vmul.f32 %v1081, 1.442695
        %v1092 = vpow.pop %v1091
        %v1093 = vmul.f32 %v1082, 1.442695
        %v1094 = vpow.pop %v1093
        %v1095 = vmul.f32 %v1083, 1.442695
        %v1096 = vpow.pop %v1095
        %v1097 = vmul.f32 %v1084, 1.442695
        %v1098 = vpow.pop %v1097
        %v1099 = vmul.f32 %v1085, 1.442695
        %v1100 = vpow.pop %v1099
        %v1101 = vmul.f32 %v1086, 1.442695
        %v1102 = vpow.pop %v1101
        %v1103 = vmul.f32 %v1087, 1.442695
        %v1104 = vpow.pop %v1103
        %v1105 = vmul.f32 %v1088, 1.442695
        %v1106 = vpow.pop %v1105
        %v1107 = vmul.f32 %v1089, 1.442695
        %v1108 = vpow.pop %v1107
        %v1109 = vmul.f32 %v1090, 1.442695
        %v1110 = vpow.pop %v1109
        %v1111 = vadd.f32 %v1092, 1.0
        %v1112 = vlog2.pop %v1111
        %v1113 = vmul.f32 %v1112, 0.6931472
        %v1114 = vmul.f32 -0.5, %v1092
        %v1115 = vadd.f32 %v1114, 1.0
        %v1116 = vmul.f32 %v1115, %v1092
        %v1117 = vand.u32 2147483647, %v1092
        %vm1118 = vcmp.lt.f32.partialorder %v1117, 0.0004427343
        %v1119 = vsel %vm1118, %v1116, %v1113
        %v1120 = vadd.f32 %v1094, 1.0
        %v1121 = vlog2.pop %v1120
        %v1122 = vmul.f32 %v1121, 0.6931472
        %v1123 = vmul.f32 -0.5, %v1094
        %v1124 = vadd.f32 %v1123, 1.0
        %v1125 = vmul.f32 %v1124, %v1094
        %v1126 = vand.u32 2147483647, %v1094
        %vm1127 = vcmp.lt.f32.partialorder %v1126, 0.0004427343
        %v1128 = vsel %vm1127, %v1125, %v1122
        %v1129 = vadd.f32 %v1096, 1.0
        %v1130 = vlog2.pop %v1129
        %v1131 = vmul.f32 %v1130, 0.6931472
        %v1132 = vmul.f32 -0.5, %v1096
        %v1133 = vadd.f32 %v1132, 1.0
        %v1134 = vmul.f32 %v1133, %v1096
        %v1135 = vand.u32 2147483647, %v1096
        %vm1136 = vcmp.lt.f32.partialorder %v1135, 0.0004427343
        %v1137 = vsel %vm1136, %v1134, %v1131
        %v1138 = vadd.f32 %v1098, 1.0
        %v1139 = vlog2.pop %v1138
        %v1140 = vmul.f32 %v1139, 0.6931472
        %v1141 = vmul.f32 -0.5, %v1098
        %v1142 = vadd.f32 %v1141, 1.0
        %v1143 = vmul.f32 %v1142, %v1098
        %v1144 = vand.u32 2147483647, %v1098
        %vm1145 = vcmp.lt.f32.partialorder %v1144, 0.0004427343
        %v1146 = vsel %vm1145, %v1143, %v1140
        %v1147 = vadd.f32 %v1100, 1.0
        %v1148 = vlog2.pop %v1147
        %v1149 = vmul.f32 %v1148, 0.6931472
        %v1150 = vmul.f32 -0.5, %v1100
        %v1151 = vadd.f32 %v1150, 1.0
        %v1152 = vmul.f32 %v1151, %v1100
        %v1153 = vand.u32 2147483647, %v1100
        %vm1154 = vcmp.lt.f32.partialorder %v1153, 0.0004427343
        %v1155 = vsel %vm1154, %v1152, %v1149
        %v1156 = vadd.f32 %v1102, 1.0
        %v1157 = vlog2.pop %v1156
        %v1158 = vmul.f32 %v1157, 0.6931472
        %v1159 = vmul.f32 -0.5, %v1102
        %v1160 = vadd.f32 %v1159, 1.0
        %v1161 = vmul.f32 %v1160, %v1102
        %v1162 = vand.u32 2147483647, %v1102
        %vm1163 = vcmp.lt.f32.partialorder %v1162, 0.0004427343
        %v1164 = vsel %vm1163, %v1161, %v1158
        %v1165 = vadd.f32 %v1104, 1.0
        %v1166 = vlog2.pop %v1165
        %v1167 = vmul.f32 %v1166, 0.6931472
        %v1168 = vmul.f32 -0.5, %v1104
        %v1169 = vadd.f32 %v1168, 1.0
        %v1170 = vmul.f32 %v1169, %v1104
        %v1171 = vand.u32 2147483647, %v1104
        %vm1172 = vcmp.lt.f32.partialorder %v1171, 0.0004427343
        %v1173 = vsel %vm1172, %v1170, %v1167
        %v1174 = vadd.f32 %v1106, 1.0
        %v1175 = vlog2.pop %v1174
        %v1176 = vmul.f32 %v1175, 0.6931472
        %v1177 = vmul.f32 -0.5, %v1106
        %v1178 = vadd.f32 %v1177, 1.0
        %v1179 = vmul.f32 %v1178, %v1106
        %v1180 = vand.u32 2147483647, %v1106
        %vm1181 = vcmp.lt.f32.partialorder %v1180, 0.0004427343
        %v1182 = vsel %vm1181, %v1179, %v1176
        %v1183 = vadd.f32 %v1108, 1.0
        %v1184 = vlog2.pop %v1183
        %v1185 = vmul.f32 %v1184, 0.6931472
        %v1186 = vmul.f32 -0.5, %v1108
        %v1187 = vadd.f32 %v1186, 1.0
        %v1188 = vmul.f32 %v1187, %v1108
        %v1189 = vand.u32 2147483647, %v1108
        %vm1190 = vcmp.lt.f32.partialorder %v1189, 0.0004427343
        %v1191 = vsel %vm1190, %v1188, %v1185
        %v1192 = vadd.f32 %v1110, 1.0
        %v1193 = vlog2.pop %v1192
        %v1194 = vmul.f32 %v1193, 0.6931472
        %v1195 = vmul.f32 -0.5, %v1110
        %v1196 = vadd.f32 %v1195, 1.0
        %v1197 = vmul.f32 %v1196, %v1110
        %v1198 = vand.u32 2147483647, %v1110
        %vm1199 = vcmp.lt.f32.partialorder %v1198, 0.0004427343
        %v1200 = vsel %vm1199, %v1197, %v1194
        %v1201 = vadd.f32 %v1061, %v1119
        %v1202 = vadd.f32 %v1062, %v1128
        %v1203 = vadd.f32 %v1063, %v1137
        %v1204 = vadd.f32 %v1064, %v1146
        %v1205 = vadd.f32 %v1065, %v1155
        %v1206 = vadd.f32 %v1066, %v1164
        %v1207 = vadd.f32 %v1067, %v1173
        %v1208 = vadd.f32 %v1068, %v1182
        %v1209 = vadd.f32 %v1069, %v1191
        %v1210 = vadd.f32 %v1070, %v1200
        %v1211 = vsub.f32 0.0, %v1201
        %v1212 = vsub.f32 0.0, %v1202
        %v1213 = vsub.f32 0.0, %v1203
        %v1214 = vsub.f32 0.0, %v1204
        %v1215 = vsub.f32 0.0, %v1205
        %v1216 = vsub.f32 0.0, %v1206
        %v1217 = vsub.f32 0.0, %v1207
        %v1218 = vsub.f32 0.0, %v1208
        %v1219 = vsub.f32 0.0, %v1209
        %v1220 = vsub.f32 0.0, %v1210
        %v1221 = vsel %vm301, %v1211, %v1023
        %v1222 = vsel %vm301, %v1212, %v1026
        %v1223 = vsel %vm301, %v1213, %v1031
        %v1224 = vsel %vm301, %v1214, %v1034
        %v1225 = vsel %vm301, %v1215, %v1039
        %v1226 = vsel %vm301, %v1216, %v1042
        %v1227 = vsel %vm301, %v1217, %v1047
        %v1228 = vsel %vm301, %v1218, %v1050
        %v1229 = vsel %vm301, %v1219, %v1055
        %v1230 = vsel %vm301, %v1220, %v1058
        %v1231 = vpack.c.bf16 %v1222, %v1221
        %v1232 = vpack.c.bf16 %v1224, %v1223
        %v1233 = vpack.c.bf16 %v1226, %v1225
        %v1234 = vpack.c.bf16 %v1228, %v1227
        %v1235 = vpack.c.bf16 %v1230, %v1229
        %s1236 = scalar_lea.vmem [#allocation2], 128
        %v1237 = vld [vmem:[%s1236] sm:$0xf]
        %v1238 = vld [vmem:[%s1236 + $0x4] sm:$0xf]
        %v1239 = vld [vmem:[%s1236 + $0x8] sm:$0xf]
        %v1240 = vld [vmem:[%s1236 + $0xc] sm:$0xf]
        %v1241 = vld [vmem:[%s1236 + $0x10] sm:$0xf]
        %v1242 = vld [vmem:[%s1236 + $0x14] sm:$0xf]
        %v1243 = vld [vmem:[%s1236 + $0x18] sm:$0xf]
        %v1244 = vld [vmem:[%s1236 + $0x1c] sm:$0xf]
        %v1245 = vld [vmem:[%s1236 + $0x20] sm:$0xf]
        %v1246 = vld [vmem:[%s1236 + $0x24] sm:$0xf]
        %v1247 = vld [vmem:[%s1236 + $0x28] sm:$0xf]
        %v1248 = vld [vmem:[%s1236 + $0x2c] sm:$0xf]
        %v1249 = vld [vmem:[%s1236 + $0x30] sm:$0xf]
        %v1250 = vld [vmem:[%s1236 + $0x34] sm:$0xf]
        %v1251 = vld [vmem:[%s1236 + $0x38] sm:$0xf]
        %v1252 = vld [vmem:[%s1236 + $0x3c] sm:$0xf]
        %s1253 = scalar_lea.vmem %s4, 2
        %v1254 = vld [vmem:[%s1253] sm:$0x1]
        %v1256 = vlaneseq
        %v1257 = vshrl.u32 %v1256, 7
        %v1258 = vsub.s32 0, %v1257
        %v1259 = vrot.slane %v1254, %v1258
        %v1277 = vunpack.c.l.b16 %v1237
        %v1278 = vunpack.c.l.b16 %v1238
        %v1279 = vunpack.c.l.b16 %v1239
        %v1280 = vunpack.c.l.b16 %v1240
        %v1281 = vunpack.c.l.b16 %v1241
        %v1282 = vunpack.c.l.b16 %v1242
        %v1283 = vunpack.c.l.b16 %v1243
        %v1284 = vunpack.c.l.b16 %v1244
        %v1285 = vunpack.c.l.b16 %v1245
        %v1286 = vunpack.c.l.b16 %v1246
        %v1287 = vunpack.c.l.b16 %v1247
        %v1288 = vunpack.c.l.b16 %v1248
        %v1289 = vunpack.c.l.b16 %v1249
        %v1290 = vunpack.c.l.b16 %v1250
        %v1291 = vunpack.c.l.b16 %v1251
        %v1292 = vunpack.c.l.b16 %v1252
        %v1293 = vpack.c.b16 %v1278, %v1277
        %v1294 = vpack.c.b16 %v1280, %v1279
        %v1295 = vpack.c.b16 %v1282, %v1281
        %v1296 = vpack.c.b16 %v1284, %v1283
        %v1297 = vpack.c.b16 %v1286, %v1285
        %v1298 = vpack.c.b16 %v1288, %v1287
        %v1299 = vpack.c.b16 %v1290, %v1289
        %v1300 = vpack.c.b16 %v1292, %v1291
        %1309 = vmatprep.subr.bf16.mxu0 0
        %1310 = vmatpush1.bf16.msra.mxu0 %v1300
        %1311 = vmatprep.subr.bf16.mxu0 0
        %1312 = vmatpush1.bf16.msra.mxu0 %v1299
        %1313 = vmatprep.subr.bf16.mxu0 0
        %1314 = vmatpush1.bf16.msra.mxu0 %v1298
        %1315 = vmatprep.subr.bf16.mxu0 0
        %1316 = vmatpush1.bf16.msra.mxu0 %v1297
        %1317 = vmatprep.subr.bf16.mxu0 0
        %1318 = vmatpush1.bf16.msra.mxu0 %v1296
        %1319 = vmatprep.subr.bf16.mxu0 0
        %1320 = vmatpush1.bf16.msra.mxu0 %v1295
        %1321 = vmatprep.subr.bf16.mxu0 0
        %1322 = vmatpush1.bf16.msra.mxu0 %v1294
        %1323 = vmatprep.subr.bf16.mxu0 0
        %1324 = vmatpush1.bf16.msra.mxu0 %v1293
        %1325 = vmatprep.subr.bf16.mxu0 0
        %1326 = vmatpush2.bf16.msra.mxu0 0
        %1327 = vmatprep.subr.bf16.mxu0 0
        %1328 = vmatpush2.bf16.msra.mxu0 0
        %1329 = vmatprep.subr.bf16.mxu0 0
        %1330 = vmatpush2.bf16.msra.mxu0 0
        %1331 = vmatprep.subr.bf16.mxu0 0
        %1332 = vmatpush2.bf16.msra.mxu0 0
        %1333 = vmatprep.subr.bf16.mxu0 0
        %1334 = vmatpush2.bf16.msra.mxu0 0
        %1335 = vmatprep.subr.bf16.mxu0 0
        %1336 = vmatpush2.bf16.msra.mxu0 0
        %1337 = vmatprep.subr.bf16.mxu0 0
        %1338 = vmatpush2.bf16.msra.mxu0 0
        %1339 = vmatprep.subr.bf16.mxu0 0
        %1340 = vmatpush2.bf16.msra.mxu0 0
        %1341 = vmatprep.mubr.bf16.mxu0 0
        %1342 = vmatmul.mubr.bf16.gmra.mxu0 %v1231
        %v1343 = vpop.f32.mrf.mxu0
        %v1344 = vadd.f32 %v1259, %v1343
        %v1345 = vpop.f32.mrf.mxu0
        %v1346 = vpop.f32.mrf.mxu0
        %v1347 = vadd.f32 %v1259, %v1346
        %v1348 = vpop.f32.mrf.mxu0
        %1349 = vmatprep.mubr.bf16.mxu0 0
        %1350 = vmatmul.mubr.bf16.gmra.mxu0 %v1232
        %v1351 = vpop.f32.mrf.mxu0
        %v1352 = vadd.f32 %v1259, %v1351
        %v1353 = vpop.f32.mrf.mxu0
        %v1354 = vpop.f32.mrf.mxu0
        %v1355 = vadd.f32 %v1259, %v1354
        %v1356 = vpop.f32.mrf.mxu0
        %1357 = vmatprep.mubr.bf16.mxu0 0
        %1358 = vmatmul.mubr.bf16.gmra.mxu0 %v1233
        %v1359 = vpop.f32.mrf.mxu0
        %v1360 = vadd.f32 %v1259, %v1359
        %v1361 = vpop.f32.mrf.mxu0
        %v1362 = vpop.f32.mrf.mxu0
        %v1363 = vadd.f32 %v1259, %v1362
        %v1364 = vpop.f32.mrf.mxu0
        %1365 = vmatprep.mubr.bf16.mxu0 0
        %1366 = vmatmul.mubr.bf16.gmra.mxu0 %v1234
        %v1367 = vpop.f32.mrf.mxu0
        %v1368 = vadd.f32 %v1259, %v1367
        %v1369 = vpop.f32.mrf.mxu0
        %v1370 = vpop.f32.mrf.mxu0
        %v1371 = vadd.f32 %v1259, %v1370
        %v1372 = vpop.f32.mrf.mxu0
        %1373 = vmatprep.mubr.bf16.mxu0 0
        %1374 = vmatmul.mubr.bf16.gmra.mxu0 %v1235
        %v1375 = vpop.f32.mrf.mxu0
        %v1376 = vadd.f32 %v1259, %v1375
        %v1377 = vpop.f32.mrf.mxu0
        %v1378 = vpop.f32.mrf.mxu0
        %v1379 = vadd.f32 %v1259, %v1378
        %v1380 = vpop.f32.mrf.mxu0
        %1381 = vdwg.mxu0
        %v1382 = vmax.f32 %v1344, 0.0
        %v1383 = vmax.f32 %v1347, 0.0
        %v1384 = vmax.f32 %v1352, 0.0
        %v1385 = vmax.f32 %v1355, 0.0
        %v1386 = vmax.f32 %v1360, 0.0
        %v1387 = vmax.f32 %v1363, 0.0
        %v1388 = vmax.f32 %v1368, 0.0
        %v1389 = vmax.f32 %v1371, 0.0
        %v1390 = vmax.f32 %v1376, 0.0
        %v1391 = vmax.f32 %v1379, 0.0
        %v1392 = vand.u32 2147483647, %v1344
        %v1393 = vand.u32 2147483647, %v1347
        %v1394 = vand.u32 2147483647, %v1352
        %v1395 = vand.u32 2147483647, %v1355
        %v1396 = vand.u32 2147483647, %v1360
        %v1397 = vand.u32 2147483647, %v1363
        %v1398 = vand.u32 2147483647, %v1368
        %v1399 = vand.u32 2147483647, %v1371
        %v1400 = vand.u32 2147483647, %v1376
        %v1401 = vand.u32 2147483647, %v1379
        %v1402 = vsub.f32 0.0, %v1392
        %v1403 = vsub.f32 0.0, %v1393
        %v1404 = vsub.f32 0.0, %v1394
        %v1405 = vsub.f32 0.0, %v1395
        %v1406 = vsub.f32 0.0, %v1396
        %v1407 = vsub.f32 0.0, %v1397
        %v1408 = vsub.f32 0.0, %v1398
        %v1409 = vsub.f32 0.0, %v1399
        %v1410 = vsub.f32 0.0, %v1400
        %v1411 = vsub.f32 0.0, %v1401
        %v1412 = vmul.f32 %v1402, 1.442695
        %v1413 = vpow.pop %v1412
        %v1414 = vmul.f32 %v1403, 1.442695
        %v1415 = vpow.pop %v1414
        %v1416 = vmul.f32 %v1404, 1.442695
        %v1417 = vpow.pop %v1416
        %v1418 = vmul.f32 %v1405, 1.442695
        %v1419 = vpow.pop %v1418
        %v1420 = vmul.f32 %v1406, 1.442695
        %v1421 = vpow.pop %v1420
        %v1422 = vmul.f32 %v1407, 1.442695
        %v1423 = vpow.pop %v1422
        %v1424 = vmul.f32 %v1408, 1.442695
        %v1425 = vpow.pop %v1424
        %v1426 = vmul.f32 %v1409, 1.442695
        %v1427 = vpow.pop %v1426
        %v1428 = vmul.f32 %v1410, 1.442695
        %v1429 = vpow.pop %v1428
        %v1430 = vmul.f32 %v1411, 1.442695
        %v1431 = vpow.pop %v1430
        %v1432 = vadd.f32 %v1413, 1.0
        %v1433 = vlog2.pop %v1432
        %v1434 = vmul.f32 %v1433, 0.6931472
        %v1435 = vmul.f32 -0.5, %v1413
        %v1436 = vadd.f32 %v1435, 1.0
        %v1437 = vmul.f32 %v1436, %v1413
        %v1438 = vand.u32 2147483647, %v1413
        %vm1439 = vcmp.lt.f32.partialorder %v1438, 0.0004427343
        %v1440 = vsel %vm1439, %v1437, %v1434
        %v1441 = vadd.f32 %v1415, 1.0
        %v1442 = vlog2.pop %v1441
        %v1443 = vmul.f32 %v1442, 0.6931472
        %v1444 = vmul.f32 -0.5, %v1415
        %v1445 = vadd.f32 %v1444, 1.0
        %v1446 = vmul.f32 %v1445, %v1415
        %v1447 = vand.u32 2147483647, %v1415
        %vm1448 = vcmp.lt.f32.partialorder %v1447, 0.0004427343
        %v1449 = vsel %vm1448, %v1446, %v1443
        %v1450 = vadd.f32 %v1417, 1.0
        %v1451 = vlog2.pop %v1450
        %v1452 = vmul.f32 %v1451, 0.6931472
        %v1453 = vmul.f32 -0.5, %v1417
        %v1454 = vadd.f32 %v1453, 1.0
        %v1455 = vmul.f32 %v1454, %v1417
        %v1456 = vand.u32 2147483647, %v1417
        %vm1457 = vcmp.lt.f32.partialorder %v1456, 0.0004427343
        %v1458 = vsel %vm1457, %v1455, %v1452
        %v1459 = vadd.f32 %v1419, 1.0
        %v1460 = vlog2.pop %v1459
        %v1461 = vmul.f32 %v1460, 0.6931472
        %v1462 = vmul.f32 -0.5, %v1419
        %v1463 = vadd.f32 %v1462, 1.0
        %v1464 = vmul.f32 %v1463, %v1419
        %v1465 = vand.u32 2147483647, %v1419
        %vm1466 = vcmp.lt.f32.partialorder %v1465, 0.0004427343
        %v1467 = vsel %vm1466, %v1464, %v1461
        %v1468 = vadd.f32 %v1421, 1.0
        %v1469 = vlog2.pop %v1468
        %v1470 = vmul.f32 %v1469, 0.6931472
        %v1471 = vmul.f32 -0.5, %v1421
        %v1472 = vadd.f32 %v1471, 1.0
        %v1473 = vmul.f32 %v1472, %v1421
        %v1474 = vand.u32 2147483647, %v1421
        %vm1475 = vcmp.lt.f32.partialorder %v1474, 0.0004427343
        %v1476 = vsel %vm1475, %v1473, %v1470
        %v1477 = vadd.f32 %v1423, 1.0
        %v1478 = vlog2.pop %v1477
        %v1479 = vmul.f32 %v1478, 0.6931472
        %v1480 = vmul.f32 -0.5, %v1423
        %v1481 = vadd.f32 %v1480, 1.0
        %v1482 = vmul.f32 %v1481, %v1423
        %v1483 = vand.u32 2147483647, %v1423
        %vm1484 = vcmp.lt.f32.partialorder %v1483, 0.0004427343
        %v1485 = vsel %vm1484, %v1482, %v1479
        %v1486 = vadd.f32 %v1425, 1.0
        %v1487 = vlog2.pop %v1486
        %v1488 = vmul.f32 %v1487, 0.6931472
        %v1489 = vmul.f32 -0.5, %v1425
        %v1490 = vadd.f32 %v1489, 1.0
        %v1491 = vmul.f32 %v1490, %v1425
        %v1492 = vand.u32 2147483647, %v1425
        %vm1493 = vcmp.lt.f32.partialorder %v1492, 0.0004427343
        %v1494 = vsel %vm1493, %v1491, %v1488
        %v1495 = vadd.f32 %v1427, 1.0
        %v1496 = vlog2.pop %v1495
        %v1497 = vmul.f32 %v1496, 0.6931472
        %v1498 = vmul.f32 -0.5, %v1427
        %v1499 = vadd.f32 %v1498, 1.0
        %v1500 = vmul.f32 %v1499, %v1427
        %v1501 = vand.u32 2147483647, %v1427
        %vm1502 = vcmp.lt.f32.partialorder %v1501, 0.0004427343
        %v1503 = vsel %vm1502, %v1500, %v1497
        %v1504 = vadd.f32 %v1429, 1.0
        %v1505 = vlog2.pop %v1504
        %v1506 = vmul.f32 %v1505, 0.6931472
        %v1507 = vmul.f32 -0.5, %v1429
        %v1508 = vadd.f32 %v1507, 1.0
        %v1509 = vmul.f32 %v1508, %v1429
        %v1510 = vand.u32 2147483647, %v1429
        %vm1511 = vcmp.lt.f32.partialorder %v1510, 0.0004427343
        %v1512 = vsel %vm1511, %v1509, %v1506
        %v1513 = vadd.f32 %v1431, 1.0
        %v1514 = vlog2.pop %v1513
        %v1515 = vmul.f32 %v1514, 0.6931472
        %v1516 = vmul.f32 -0.5, %v1431
        %v1517 = vadd.f32 %v1516, 1.0
        %v1518 = vmul.f32 %v1517, %v1431
        %v1519 = vand.u32 2147483647, %v1431
        %vm1520 = vcmp.lt.f32.partialorder %v1519, 0.0004427343
        %v1521 = vsel %vm1520, %v1518, %v1515
        %v1522 = vadd.f32 %v1382, %v1440
        %v1523 = vadd.f32 %v1383, %v1449
        %v1524 = vadd.f32 %v1384, %v1458
        %v1525 = vadd.f32 %v1385, %v1467
        %v1526 = vadd.f32 %v1386, %v1476
        %v1527 = vadd.f32 %v1387, %v1485
        %v1528 = vadd.f32 %v1388, %v1494
        %v1529 = vadd.f32 %v1389, %v1503
        %v1530 = vadd.f32 %v1390, %v1512
        %v1531 = vadd.f32 %v1391, %v1521
        %v1532 = vsub.f32 0.0, %v1522
        %v1533 = vsub.f32 0.0, %v1523
        %v1534 = vsub.f32 0.0, %v1524
        %v1535 = vsub.f32 0.0, %v1525
        %v1536 = vsub.f32 0.0, %v1526
        %v1537 = vsub.f32 0.0, %v1527
        %v1538 = vsub.f32 0.0, %v1528
        %v1539 = vsub.f32 0.0, %v1529
        %v1540 = vsub.f32 0.0, %v1530
        %v1541 = vsub.f32 0.0, %v1531
        %v1542 = vsel %vm301, %v1532, %v1344
        %v1543 = vsel %vm301, %v1533, %v1347
        %v1544 = vsel %vm301, %v1534, %v1352
        %v1545 = vsel %vm301, %v1535, %v1355
        %v1546 = vsel %vm301, %v1536, %v1360
        %v1547 = vsel %vm301, %v1537, %v1363
        %v1548 = vsel %vm301, %v1538, %v1368
        %v1549 = vsel %vm301, %v1539, %v1371
        %v1550 = vsel %vm301, %v1540, %v1376
        %v1551 = vsel %vm301, %v1541, %v1379
        %v1552 = vpack.c.bf16 %v1543, %v1542
        %v1553 = vpack.c.bf16 %v1545, %v1544
        %v1554 = vpack.c.bf16 %v1547, %v1546
        %v1555 = vpack.c.bf16 %v1549, %v1548
        %v1556 = vpack.c.bf16 %v1551, %v1550
        %s1557 = scalar_lea.vmem [#allocation2], 192
        %v1558 = vld [vmem:[%s1557] sm:$0xf]
        %v1559 = vld [vmem:[%s1557 + $0x4] sm:$0xf]
        %v1560 = vld [vmem:[%s1557 + $0x8] sm:$0xf]
        %v1561 = vld [vmem:[%s1557 + $0xc] sm:$0xf]
        %v1562 = vld [vmem:[%s1557 + $0x10] sm:$0xf]
        %v1563 = vld [vmem:[%s1557 + $0x14] sm:$0xf]
        %v1564 = vld [vmem:[%s1557 + $0x18] sm:$0xf]
        %v1565 = vld [vmem:[%s1557 + $0x1c] sm:$0xf]
        %v1566 = vld [vmem:[%s1557 + $0x20] sm:$0xf]
        %v1567 = vld [vmem:[%s1557 + $0x24] sm:$0xf]
        %v1568 = vld [vmem:[%s1557 + $0x28] sm:$0xf]
        %v1569 = vld [vmem:[%s1557 + $0x2c] sm:$0xf]
        %v1570 = vld [vmem:[%s1557 + $0x30] sm:$0xf]
        %v1571 = vld [vmem:[%s1557 + $0x34] sm:$0xf]
        %v1572 = vld [vmem:[%s1557 + $0x38] sm:$0xf]
        %v1573 = vld [vmem:[%s1557 + $0x3c] sm:$0xf]
        %s1574 = scalar_lea.vmem %s4, 3
        %v1575 = vld [vmem:[%s1574] sm:$0x1]
        %v1577 = vlaneseq
        %v1578 = vshrl.u32 %v1577, 7
        %v1579 = vsub.s32 0, %v1578
        %v1580 = vrot.slane %v1575, %v1579
        %v1598 = vunpack.c.l.b16 %v1558
        %v1599 = vunpack.c.l.b16 %v1559
        %v1600 = vunpack.c.l.b16 %v1560
        %v1601 = vunpack.c.l.b16 %v1561
        %v1602 = vunpack.c.l.b16 %v1562
        %v1603 = vunpack.c.l.b16 %v1563
        %v1604 = vunpack.c.l.b16 %v1564
        %v1605 = vunpack.c.l.b16 %v1565
        %v1606 = vunpack.c.l.b16 %v1566
        %v1607 = vunpack.c.l.b16 %v1567
        %v1608 = vunpack.c.l.b16 %v1568
        %v1609 = vunpack.c.l.b16 %v1569
        %v1610 = vunpack.c.l.b16 %v1570
        %v1611 = vunpack.c.l.b16 %v1571
        %v1612 = vunpack.c.l.b16 %v1572
        %v1613 = vunpack.c.l.b16 %v1573
        %v1614 = vpack.c.b16 %v1599, %v1598
        %v1615 = vpack.c.b16 %v1601, %v1600
        %v1616 = vpack.c.b16 %v1603, %v1602
        %v1617 = vpack.c.b16 %v1605, %v1604
        %v1618 = vpack.c.b16 %v1607, %v1606
        %v1619 = vpack.c.b16 %v1609, %v1608
        %v1620 = vpack.c.b16 %v1611, %v1610
        %v1621 = vpack.c.b16 %v1613, %v1612
        %1630 = vmatprep.subr.bf16.mxu0 0
        %1631 = vmatpush1.bf16.msra.mxu0 %v1621
        %1632 = vmatprep.subr.bf16.mxu0 0
        %1633 = vmatpush1.bf16.msra.mxu0 %v1620
        %1634 = vmatprep.subr.bf16.mxu0 0
        %1635 = vmatpush1.bf16.msra.mxu0 %v1619
        %1636 = vmatprep.subr.bf16.mxu0 0
        %1637 = vmatpush1.bf16.msra.mxu0 %v1618
        %1638 = vmatprep.subr.bf16.mxu0 0
        %1639 = vmatpush1.bf16.msra.mxu0 %v1617
        %1640 = vmatprep.subr.bf16.mxu0 0
        %1641 = vmatpush1.bf16.msra.mxu0 %v1616
        %1642 = vmatprep.subr.bf16.mxu0 0
        %1643 = vmatpush1.bf16.msra.mxu0 %v1615
        %1644 = vmatprep.subr.bf16.mxu0 0
        %1645 = vmatpush1.bf16.msra.mxu0 %v1614
        %1646 = vmatprep.subr.bf16.mxu0 0
        %1647 = vmatpush2.bf16.msra.mxu0 0
        %1648 = vmatprep.subr.bf16.mxu0 0
        %1649 = vmatpush2.bf16.msra.mxu0 0
        %1650 = vmatprep.subr.bf16.mxu0 0
        %1651 = vmatpush2.bf16.msra.mxu0 0
        %1652 = vmatprep.subr.bf16.mxu0 0
        %1653 = vmatpush2.bf16.msra.mxu0 0
        %1654 = vmatprep.subr.bf16.mxu0 0
        %1655 = vmatpush2.bf16.msra.mxu0 0
        %1656 = vmatprep.subr.bf16.mxu0 0
        %1657 = vmatpush2.bf16.msra.mxu0 0
        %1658 = vmatprep.subr.bf16.mxu0 0
        %1659 = vmatpush2.bf16.msra.mxu0 0
        %1660 = vmatprep.subr.bf16.mxu0 0
        %1661 = vmatpush2.bf16.msra.mxu0 0
        %1662 = vmatprep.mubr.bf16.mxu0 0
        %1663 = vmatmul.mubr.bf16.gmra.mxu0 %v1552
        %v1664 = vpop.f32.mrf.mxu0
        %v1665 = vadd.f32 %v1580, %v1664
        %v1666 = vpop.f32.mrf.mxu0
        %v1667 = vpop.f32.mrf.mxu0
        %v1668 = vadd.f32 %v1580, %v1667
        %v1669 = vpop.f32.mrf.mxu0
        %1670 = vmatprep.mubr.bf16.mxu0 0
        %1671 = vmatmul.mubr.bf16.gmra.mxu0 %v1553
        %v1672 = vpop.f32.mrf.mxu0
        %v1673 = vadd.f32 %v1580, %v1672
        %v1674 = vpop.f32.mrf.mxu0
        %v1675 = vpop.f32.mrf.mxu0
        %v1676 = vadd.f32 %v1580, %v1675
        %v1677 = vpop.f32.mrf.mxu0
        %1678 = vmatprep.mubr.bf16.mxu0 0
        %1679 = vmatmul.mubr.bf16.gmra.mxu0 %v1554
        %v1680 = vpop.f32.mrf.mxu0
        %v1681 = vadd.f32 %v1580, %v1680
        %v1682 = vpop.f32.mrf.mxu0
        %v1683 = vpop.f32.mrf.mxu0
        %v1684 = vadd.f32 %v1580, %v1683
        %v1685 = vpop.f32.mrf.mxu0
        %1686 = vmatprep.mubr.bf16.mxu0 0
        %1687 = vmatmul.mubr.bf16.gmra.mxu0 %v1555
        %v1688 = vpop.f32.mrf.mxu0
        %v1689 = vadd.f32 %v1580, %v1688
        %v1690 = vpop.f32.mrf.mxu0
        %v1691 = vpop.f32.mrf.mxu0
        %v1692 = vadd.f32 %v1580, %v1691
        %v1693 = vpop.f32.mrf.mxu0
        %1694 = vmatprep.mubr.bf16.mxu0 0
        %1695 = vmatmul.mubr.bf16.gmra.mxu0 %v1556
        %v1696 = vpop.f32.mrf.mxu0
        %v1697 = vadd.f32 %v1580, %v1696
        %v1698 = vpop.f32.mrf.mxu0
        %v1699 = vpop.f32.mrf.mxu0
        %v1700 = vadd.f32 %v1580, %v1699
        %v1701 = vpop.f32.mrf.mxu0
        %1702 = vdwg.mxu0
        %v1703 = vmax.f32 %v1665, 0.0
        %v1704 = vmax.f32 %v1668, 0.0
        %v1705 = vmax.f32 %v1673, 0.0
        %v1706 = vmax.f32 %v1676, 0.0
        %v1707 = vmax.f32 %v1681, 0.0
        %v1708 = vmax.f32 %v1684, 0.0
        %v1709 = vmax.f32 %v1689, 0.0
        %v1710 = vmax.f32 %v1692, 0.0
        %v1711 = vmax.f32 %v1697, 0.0
        %v1712 = vmax.f32 %v1700, 0.0
        %v1713 = vand.u32 2147483647, %v1665
        %v1714 = vand.u32 2147483647, %v1668
        %v1715 = vand.u32 2147483647, %v1673
        %v1716 = vand.u32 2147483647, %v1676
        %v1717 = vand.u32 2147483647, %v1681
        %v1718 = vand.u32 2147483647, %v1684
        %v1719 = vand.u32 2147483647, %v1689
        %v1720 = vand.u32 2147483647, %v1692
        %v1721 = vand.u32 2147483647, %v1697
        %v1722 = vand.u32 2147483647, %v1700
        %v1723 = vsub.f32 0.0, %v1713
        %v1724 = vsub.f32 0.0, %v1714
        %v1725 = vsub.f32 0.0, %v1715
        %v1726 = vsub.f32 0.0, %v1716
        %v1727 = vsub.f32 0.0, %v1717
        %v1728 = vsub.f32 0.0, %v1718
        %v1729 = vsub.f32 0.0, %v1719
        %v1730 = vsub.f32 0.0, %v1720
        %v1731 = vsub.f32 0.0, %v1721
        %v1732 = vsub.f32 0.0, %v1722
        %v1733 = vmul.f32 %v1723, 1.442695
        %v1734 = vpow.pop %v1733
        %v1735 = vmul.f32 %v1724, 1.442695
        %v1736 = vpow.pop %v1735
        %v1737 = vmul.f32 %v1725, 1.442695
        %v1738 = vpow.pop %v1737
        %v1739 = vmul.f32 %v1726, 1.442695
        %v1740 = vpow.pop %v1739
        %v1741 = vmul.f32 %v1727, 1.442695
        %v1742 = vpow.pop %v1741
        %v1743 = vmul.f32 %v1728, 1.442695
        %v1744 = vpow.pop %v1743
        %v1745 = vmul.f32 %v1729, 1.442695
        %v1746 = vpow.pop %v1745
        %v1747 = vmul.f32 %v1730, 1.442695
        %v1748 = vpow.pop %v1747
        %v1749 = vmul.f32 %v1731, 1.442695
        %v1750 = vpow.pop %v1749
        %v1751 = vmul.f32 %v1732, 1.442695
        %v1752 = vpow.pop %v1751
        %v1753 = vadd.f32 %v1734, 1.0
        %v1754 = vlog2.pop %v1753
        %v1755 = vmul.f32 %v1754, 0.6931472
        %v1756 = vmul.f32 -0.5, %v1734
        %v1757 = vadd.f32 %v1756, 1.0
        %v1758 = vmul.f32 %v1757, %v1734
        %v1759 = vand.u32 2147483647, %v1734
        %vm1760 = vcmp.lt.f32.partialorder %v1759, 0.0004427343
        %v1761 = vsel %vm1760, %v1758, %v1755
        %v1762 = vadd.f32 %v1736, 1.0
        %v1763 = vlog2.pop %v1762
        %v1764 = vmul.f32 %v1763, 0.6931472
        %v1765 = vmul.f32 -0.5, %v1736
        %v1766 = vadd.f32 %v1765, 1.0
        %v1767 = vmul.f32 %v1766, %v1736
        %v1768 = vand.u32 2147483647, %v1736
        %vm1769 = vcmp.lt.f32.partialorder %v1768, 0.0004427343
        %v1770 = vsel %vm1769, %v1767, %v1764
        %v1771 = vadd.f32 %v1738, 1.0
        %v1772 = vlog2.pop %v1771
        %v1773 = vmul.f32 %v1772, 0.6931472
        %v1774 = vmul.f32 -0.5, %v1738
        %v1775 = vadd.f32 %v1774, 1.0
        %v1776 = vmul.f32 %v1775, %v1738
        %v1777 = vand.u32 2147483647, %v1738
        %vm1778 = vcmp.lt.f32.partialorder %v1777, 0.0004427343
        %v1779 = vsel %vm1778, %v1776, %v1773
        %v1780 = vadd.f32 %v1740, 1.0
        %v1781 = vlog2.pop %v1780
        %v1782 = vmul.f32 %v1781, 0.6931472
        %v1783 = vmul.f32 -0.5, %v1740
        %v1784 = vadd.f32 %v1783, 1.0
        %v1785 = vmul.f32 %v1784, %v1740
        %v1786 = vand.u32 2147483647, %v1740
        %vm1787 = vcmp.lt.f32.partialorder %v1786, 0.0004427343
        %v1788 = vsel %vm1787, %v1785, %v1782
        %v1789 = vadd.f32 %v1742, 1.0
        %v1790 = vlog2.pop %v1789
        %v1791 = vmul.f32 %v1790, 0.6931472
        %v1792 = vmul.f32 -0.5, %v1742
        %v1793 = vadd.f32 %v1792, 1.0
        %v1794 = vmul.f32 %v1793, %v1742
        %v1795 = vand.u32 2147483647, %v1742
        %vm1796 = vcmp.lt.f32.partialorder %v1795, 0.0004427343
        %v1797 = vsel %vm1796, %v1794, %v1791
        %v1798 = vadd.f32 %v1744, 1.0
        %v1799 = vlog2.pop %v1798
        %v1800 = vmul.f32 %v1799, 0.6931472
        %v1801 = vmul.f32 -0.5, %v1744
        %v1802 = vadd.f32 %v1801, 1.0
        %v1803 = vmul.f32 %v1802, %v1744
        %v1804 = vand.u32 2147483647, %v1744
        %vm1805 = vcmp.lt.f32.partialorder %v1804, 0.0004427343
        %v1806 = vsel %vm1805, %v1803, %v1800
        %v1807 = vadd.f32 %v1746, 1.0
        %v1808 = vlog2.pop %v1807
        %v1809 = vmul.f32 %v1808, 0.6931472
        %v1810 = vmul.f32 -0.5, %v1746
        %v1811 = vadd.f32 %v1810, 1.0
        %v1812 = vmul.f32 %v1811, %v1746
        %v1813 = vand.u32 2147483647, %v1746
        %vm1814 = vcmp.lt.f32.partialorder %v1813, 0.0004427343
        %v1815 = vsel %vm1814, %v1812, %v1809
        %v1816 = vadd.f32 %v1748, 1.0
        %v1817 = vlog2.pop %v1816
        %v1818 = vmul.f32 %v1817, 0.6931472
        %v1819 = vmul.f32 -0.5, %v1748
        %v1820 = vadd.f32 %v1819, 1.0
        %v1821 = vmul.f32 %v1820, %v1748
        %v1822 = vand.u32 2147483647, %v1748
        %vm1823 = vcmp.lt.f32.partialorder %v1822, 0.0004427343
        %v1824 = vsel %vm1823, %v1821, %v1818
        %v1825 = vadd.f32 %v1750, 1.0
        %v1826 = vlog2.pop %v1825
        %v1827 = vmul.f32 %v1826, 0.6931472
        %v1828 = vmul.f32 -0.5, %v1750
        %v1829 = vadd.f32 %v1828, 1.0
        %v1830 = vmul.f32 %v1829, %v1750
        %v1831 = vand.u32 2147483647, %v1750
        %vm1832 = vcmp.lt.f32.partialorder %v1831, 0.0004427343
        %v1833 = vsel %vm1832, %v1830, %v1827
        %v1834 = vadd.f32 %v1752, 1.0
        %v1835 = vlog2.pop %v1834
        %v1836 = vmul.f32 %v1835, 0.6931472
        %v1837 = vmul.f32 -0.5, %v1752
        %v1838 = vadd.f32 %v1837, 1.0
        %v1839 = vmul.f32 %v1838, %v1752
        %v1840 = vand.u32 2147483647, %v1752
        %vm1841 = vcmp.lt.f32.partialorder %v1840, 0.0004427343
        %v1842 = vsel %vm1841, %v1839, %v1836
        %v1843 = vadd.f32 %v1703, %v1761
        %v1844 = vadd.f32 %v1704, %v1770
        %v1845 = vadd.f32 %v1705, %v1779
        %v1846 = vadd.f32 %v1706, %v1788
        %v1847 = vadd.f32 %v1707, %v1797
        %v1848 = vadd.f32 %v1708, %v1806
        %v1849 = vadd.f32 %v1709, %v1815
        %v1850 = vadd.f32 %v1710, %v1824
        %v1851 = vadd.f32 %v1711, %v1833
        %v1852 = vadd.f32 %v1712, %v1842
        %v1853 = vsub.f32 0.0, %v1843
        %v1854 = vsub.f32 0.0, %v1844
        %v1855 = vsub.f32 0.0, %v1845
        %v1856 = vsub.f32 0.0, %v1846
        %v1857 = vsub.f32 0.0, %v1847
        %v1858 = vsub.f32 0.0, %v1848
        %v1859 = vsub.f32 0.0, %v1849
        %v1860 = vsub.f32 0.0, %v1850
        %v1861 = vsub.f32 0.0, %v1851
        %v1862 = vsub.f32 0.0, %v1852
        %v1863 = vsel %vm301, %v1853, %v1665
        %v1864 = vsel %vm301, %v1854, %v1668
        %v1865 = vsel %vm301, %v1855, %v1673
        %v1866 = vsel %vm301, %v1856, %v1676
        %v1867 = vsel %vm301, %v1857, %v1681
        %v1868 = vsel %vm301, %v1858, %v1684
        %v1869 = vsel %vm301, %v1859, %v1689
        %v1870 = vsel %vm301, %v1860, %v1692
        %v1871 = vsel %vm301, %v1861, %v1697
        %v1872 = vsel %vm301, %v1862, %v1700
        %v1873 = vpack.c.bf16 %v1864, %v1863
        %v1874 = vpack.c.bf16 %v1866, %v1865
        %v1875 = vpack.c.bf16 %v1868, %v1867
        %v1876 = vpack.c.bf16 %v1870, %v1869
        %v1877 = vpack.c.bf16 %v1872, %v1871
        %s1878 = scalar_lea.vmem [#allocation2], 256
        %v1879 = vld [vmem:[%s1878] sm:$0xf]
        %v1880 = vld [vmem:[%s1878 + $0x4] sm:$0xf]
        %v1881 = vld [vmem:[%s1878 + $0x8] sm:$0xf]
        %v1882 = vld [vmem:[%s1878 + $0xc] sm:$0xf]
        %v1883 = vld [vmem:[%s1878 + $0x10] sm:$0xf]
        %v1884 = vld [vmem:[%s1878 + $0x14] sm:$0xf]
        %v1885 = vld [vmem:[%s1878 + $0x18] sm:$0xf]
        %v1886 = vld [vmem:[%s1878 + $0x1c] sm:$0xf]
        %v1887 = vld [vmem:[%s1878 + $0x20] sm:$0xf]
        %v1888 = vld [vmem:[%s1878 + $0x24] sm:$0xf]
        %v1889 = vld [vmem:[%s1878 + $0x28] sm:$0xf]
        %v1890 = vld [vmem:[%s1878 + $0x2c] sm:$0xf]
        %v1891 = vld [vmem:[%s1878 + $0x30] sm:$0xf]
        %v1892 = vld [vmem:[%s1878 + $0x34] sm:$0xf]
        %v1893 = vld [vmem:[%s1878 + $0x38] sm:$0xf]
        %v1894 = vld [vmem:[%s1878 + $0x3c] sm:$0xf]
        %s1895 = scalar_lea.vmem %s4, 4
        %v1896 = vld [vmem:[%s1895] sm:$0x1]
        %v1898 = vlaneseq
        %v1899 = vshrl.u32 %v1898, 7
        %v1900 = vsub.s32 0, %v1899
        %v1901 = vrot.slane %v1896, %v1900
        %v1919 = vunpack.c.l.b16 %v1879
        %v1920 = vunpack.c.l.b16 %v1880
        %v1921 = vunpack.c.l.b16 %v1881
        %v1922 = vunpack.c.l.b16 %v1882
        %v1923 = vunpack.c.l.b16 %v1883
        %v1924 = vunpack.c.l.b16 %v1884
        %v1925 = vunpack.c.l.b16 %v1885
        %v1926 = vunpack.c.l.b16 %v1886
        %v1927 = vunpack.c.l.b16 %v1887
        %v1928 = vunpack.c.l.b16 %v1888
        %v1929 = vunpack.c.l.b16 %v1889
        %v1930 = vunpack.c.l.b16 %v1890
        %v1931 = vunpack.c.l.b16 %v1891
        %v1932 = vunpack.c.l.b16 %v1892
        %v1933 = vunpack.c.l.b16 %v1893
        %v1934 = vunpack.c.l.b16 %v1894
        %v1935 = vpack.c.b16 %v1920, %v1919
        %v1936 = vpack.c.b16 %v1922, %v1921
        %v1937 = vpack.c.b16 %v1924, %v1923
        %v1938 = vpack.c.b16 %v1926, %v1925
        %v1939 = vpack.c.b16 %v1928, %v1927
        %v1940 = vpack.c.b16 %v1930, %v1929
        %v1941 = vpack.c.b16 %v1932, %v1931
        %v1942 = vpack.c.b16 %v1934, %v1933
        %1951 = vmatprep.subr.bf16.mxu0 0
        %1952 = vmatpush1.bf16.msra.mxu0 %v1942
        %1953 = vmatprep.subr.bf16.mxu0 0
        %1954 = vmatpush1.bf16.msra.mxu0 %v1941
        %1955 = vmatprep.subr.bf16.mxu0 0
        %1956 = vmatpush1.bf16.msra.mxu0 %v1940
        %1957 = vmatprep.subr.bf16.mxu0 0
        %1958 = vmatpush1.bf16.msra.mxu0 %v1939
        %1959 = vmatprep.subr.bf16.mxu0 0
        %1960 = vmatpush1.bf16.msra.mxu0 %v1938
        %1961 = vmatprep.subr.bf16.mxu0 0
        %1962 = vmatpush1.bf16.msra.mxu0 %v1937
        %1963 = vmatprep.subr.bf16.mxu0 0
        %1964 = vmatpush1.bf16.msra.mxu0 %v1936
        %1965 = vmatprep.subr.bf16.mxu0 0
        %1966 = vmatpush1.bf16.msra.mxu0 %v1935
        %1967 = vmatprep.subr.bf16.mxu0 0
        %1968 = vmatpush2.bf16.msra.mxu0 0
        %1969 = vmatprep.subr.bf16.mxu0 0
        %1970 = vmatpush2.bf16.msra.mxu0 0
        %1971 = vmatprep.subr.bf16.mxu0 0
        %1972 = vmatpush2.bf16.msra.mxu0 0
        %1973 = vmatprep.subr.bf16.mxu0 0
        %1974 = vmatpush2.bf16.msra.mxu0 0
        %1975 = vmatprep.subr.bf16.mxu0 0
        %1976 = vmatpush2.bf16.msra.mxu0 0
        %1977 = vmatprep.subr.bf16.mxu0 0
        %1978 = vmatpush2.bf16.msra.mxu0 0
        %1979 = vmatprep.subr.bf16.mxu0 0
        %1980 = vmatpush2.bf16.msra.mxu0 0
        %1981 = vmatprep.subr.bf16.mxu0 0
        %1982 = vmatpush2.bf16.msra.mxu0 0
        %1983 = vmatprep.mubr.bf16.mxu0 0
        %1984 = vmatmul.mubr.bf16.gmra.mxu0 %v1873
        %v1985 = vpop.f32.mrf.mxu0
        %v1986 = vadd.f32 %v1901, %v1985
        %v1987 = vpop.f32.mrf.mxu0
        %v1988 = vpop.f32.mrf.mxu0
        %v1989 = vadd.f32 %v1901, %v1988
        %v1990 = vpop.f32.mrf.mxu0
        %1991 = vmatprep.mubr.bf16.mxu0 0
        %1992 = vmatmul.mubr.bf16.gmra.mxu0 %v1874
        %v1993 = vpop.f32.mrf.mxu0
        %v1994 = vadd.f32 %v1901, %v1993
        %v1995 = vpop.f32.mrf.mxu0
        %v1996 = vpop.f32.mrf.mxu0
        %v1997 = vadd.f32 %v1901, %v1996
        %v1998 = vpop.f32.mrf.mxu0
        %1999 = vmatprep.mubr.bf16.mxu0 0
        %2000 = vmatmul.mubr.bf16.gmra.mxu0 %v1875
        %v2001 = vpop.f32.mrf.mxu0
        %v2002 = vadd.f32 %v1901, %v2001
        %v2003 = vpop.f32.mrf.mxu0
        %v2004 = vpop.f32.mrf.mxu0
        %v2005 = vadd.f32 %v1901, %v2004
        %v2006 = vpop.f32.mrf.mxu0
        %2007 = vmatprep.mubr.bf16.mxu0 0
        %2008 = vmatmul.mubr.bf16.gmra.mxu0 %v1876
        %v2009 = vpop.f32.mrf.mxu0
        %v2010 = vadd.f32 %v1901, %v2009
        %v2011 = vpop.f32.mrf.mxu0
        %v2012 = vpop.f32.mrf.mxu0
        %v2013 = vadd.f32 %v1901, %v2012
        %v2014 = vpop.f32.mrf.mxu0
        %2015 = vmatprep.mubr.bf16.mxu0 0
        %2016 = vmatmul.mubr.bf16.gmra.mxu0 %v1877
        %v2017 = vpop.f32.mrf.mxu0
        %v2018 = vadd.f32 %v1901, %v2017
        %v2019 = vpop.f32.mrf.mxu0
        %v2020 = vpop.f32.mrf.mxu0
        %v2021 = vadd.f32 %v1901, %v2020
        %v2022 = vpop.f32.mrf.mxu0
        %2023 = vdwg.mxu0
        %v2024 = vmax.f32 %v1986, 0.0
        %v2025 = vmax.f32 %v1989, 0.0
        %v2026 = vmax.f32 %v1994, 0.0
        %v2027 = vmax.f32 %v1997, 0.0
        %v2028 = vmax.f32 %v2002, 0.0
        %v2029 = vmax.f32 %v2005, 0.0
        %v2030 = vmax.f32 %v2010, 0.0
        %v2031 = vmax.f32 %v2013, 0.0
        %v2032 = vmax.f32 %v2018, 0.0
        %v2033 = vmax.f32 %v2021, 0.0
        %v2034 = vand.u32 2147483647, %v1986
        %v2035 = vand.u32 2147483647, %v1989
        %v2036 = vand.u32 2147483647, %v1994
        %v2037 = vand.u32 2147483647, %v1997
        %v2038 = vand.u32 2147483647, %v2002
        %v2039 = vand.u32 2147483647, %v2005
        %v2040 = vand.u32 2147483647, %v2010
        %v2041 = vand.u32 2147483647, %v2013
        %v2042 = vand.u32 2147483647, %v2018
        %v2043 = vand.u32 2147483647, %v2021
        %v2044 = vsub.f32 0.0, %v2034
        %v2045 = vsub.f32 0.0, %v2035
        %v2046 = vsub.f32 0.0, %v2036
        %v2047 = vsub.f32 0.0, %v2037
        %v2048 = vsub.f32 0.0, %v2038
        %v2049 = vsub.f32 0.0, %v2039
        %v2050 = vsub.f32 0.0, %v2040
        %v2051 = vsub.f32 0.0, %v2041
        %v2052 = vsub.f32 0.0, %v2042
        %v2053 = vsub.f32 0.0, %v2043
        %v2054 = vmul.f32 %v2044, 1.442695
        %v2055 = vpow.pop %v2054
        %v2056 = vmul.f32 %v2045, 1.442695
        %v2057 = vpow.pop %v2056
        %v2058 = vmul.f32 %v2046, 1.442695
        %v2059 = vpow.pop %v2058
        %v2060 = vmul.f32 %v2047, 1.442695
        %v2061 = vpow.pop %v2060
        %v2062 = vmul.f32 %v2048, 1.442695
        %v2063 = vpow.pop %v2062
        %v2064 = vmul.f32 %v2049, 1.442695
        %v2065 = vpow.pop %v2064
        %v2066 = vmul.f32 %v2050, 1.442695
        %v2067 = vpow.pop %v2066
        %v2068 = vmul.f32 %v2051, 1.442695
        %v2069 = vpow.pop %v2068
        %v2070 = vmul.f32 %v2052, 1.442695
        %v2071 = vpow.pop %v2070
        %v2072 = vmul.f32 %v2053, 1.442695
        %v2073 = vpow.pop %v2072
        %v2074 = vadd.f32 %v2055, 1.0
        %v2075 = vlog2.pop %v2074
        %v2076 = vmul.f32 %v2075, 0.6931472
        %v2077 = vmul.f32 -0.5, %v2055
        %v2078 = vadd.f32 %v2077, 1.0
        %v2079 = vmul.f32 %v2078, %v2055
        %v2080 = vand.u32 2147483647, %v2055
        %vm2081 = vcmp.lt.f32.partialorder %v2080, 0.0004427343
        %v2082 = vsel %vm2081, %v2079, %v2076
        %v2083 = vadd.f32 %v2057, 1.0
        %v2084 = vlog2.pop %v2083
        %v2085 = vmul.f32 %v2084, 0.6931472
        %v2086 = vmul.f32 -0.5, %v2057
        %v2087 = vadd.f32 %v2086, 1.0
        %v2088 = vmul.f32 %v2087, %v2057
        %v2089 = vand.u32 2147483647, %v2057
        %vm2090 = vcmp.lt.f32.partialorder %v2089, 0.0004427343
        %v2091 = vsel %vm2090, %v2088, %v2085
        %v2092 = vadd.f32 %v2059, 1.0
        %v2093 = vlog2.pop %v2092
        %v2094 = vmul.f32 %v2093, 0.6931472
        %v2095 = vmul.f32 -0.5, %v2059
        %v2096 = vadd.f32 %v2095, 1.0
        %v2097 = vmul.f32 %v2096, %v2059
        %v2098 = vand.u32 2147483647, %v2059
        %vm2099 = vcmp.lt.f32.partialorder %v2098, 0.0004427343
        %v2100 = vsel %vm2099, %v2097, %v2094
        %v2101 = vadd.f32 %v2061, 1.0
        %v2102 = vlog2.pop %v2101
        %v2103 = vmul.f32 %v2102, 0.6931472
        %v2104 = vmul.f32 -0.5, %v2061
        %v2105 = vadd.f32 %v2104, 1.0
        %v2106 = vmul.f32 %v2105, %v2061
        %v2107 = vand.u32 2147483647, %v2061
        %vm2108 = vcmp.lt.f32.partialorder %v2107, 0.0004427343
        %v2109 = vsel %vm2108, %v2106, %v2103
        %v2110 = vadd.f32 %v2063, 1.0
        %v2111 = vlog2.pop %v2110
        %v2112 = vmul.f32 %v2111, 0.6931472
        %v2113 = vmul.f32 -0.5, %v2063
        %v2114 = vadd.f32 %v2113, 1.0
        %v2115 = vmul.f32 %v2114, %v2063
        %v2116 = vand.u32 2147483647, %v2063
        %vm2117 = vcmp.lt.f32.partialorder %v2116, 0.0004427343
        %v2118 = vsel %vm2117, %v2115, %v2112
        %v2119 = vadd.f32 %v2065, 1.0
        %v2120 = vlog2.pop %v2119
        %v2121 = vmul.f32 %v2120, 0.6931472
        %v2122 = vmul.f32 -0.5, %v2065
        %v2123 = vadd.f32 %v2122, 1.0
        %v2124 = vmul.f32 %v2123, %v2065
        %v2125 = vand.u32 2147483647, %v2065
        %vm2126 = vcmp.lt.f32.partialorder %v2125, 0.0004427343
        %v2127 = vsel %vm2126, %v2124, %v2121
        %v2128 = vadd.f32 %v2067, 1.0
        %v2129 = vlog2.pop %v2128
        %v2130 = vmul.f32 %v2129, 0.6931472
        %v2131 = vmul.f32 -0.5, %v2067
        %v2132 = vadd.f32 %v2131, 1.0
        %v2133 = vmul.f32 %v2132, %v2067
        %v2134 = vand.u32 2147483647, %v2067
        %vm2135 = vcmp.lt.f32.partialorder %v2134, 0.0004427343
        %v2136 = vsel %vm2135, %v2133, %v2130
        %v2137 = vadd.f32 %v2069, 1.0
        %v2138 = vlog2.pop %v2137
        %v2139 = vmul.f32 %v2138, 0.6931472
        %v2140 = vmul.f32 -0.5, %v2069
        %v2141 = vadd.f32 %v2140, 1.0
        %v2142 = vmul.f32 %v2141, %v2069
        %v2143 = vand.u32 2147483647, %v2069
        %vm2144 = vcmp.lt.f32.partialorder %v2143, 0.0004427343
        %v2145 = vsel %vm2144, %v2142, %v2139
        %v2146 = vadd.f32 %v2071, 1.0
        %v2147 = vlog2.pop %v2146
        %v2148 = vmul.f32 %v2147, 0.6931472
        %v2149 = vmul.f32 -0.5, %v2071
        %v2150 = vadd.f32 %v2149, 1.0
        %v2151 = vmul.f32 %v2150, %v2071
        %v2152 = vand.u32 2147483647, %v2071
        %vm2153 = vcmp.lt.f32.partialorder %v2152, 0.0004427343
        %v2154 = vsel %vm2153, %v2151, %v2148
        %v2155 = vadd.f32 %v2073, 1.0
        %v2156 = vlog2.pop %v2155
        %v2157 = vmul.f32 %v2156, 0.6931472
        %v2158 = vmul.f32 -0.5, %v2073
        %v2159 = vadd.f32 %v2158, 1.0
        %v2160 = vmul.f32 %v2159, %v2073
        %v2161 = vand.u32 2147483647, %v2073
        %vm2162 = vcmp.lt.f32.partialorder %v2161, 0.0004427343
        %v2163 = vsel %vm2162, %v2160, %v2157
        %v2164 = vadd.f32 %v2024, %v2082
        %v2165 = vadd.f32 %v2025, %v2091
        %v2166 = vadd.f32 %v2026, %v2100
        %v2167 = vadd.f32 %v2027, %v2109
        %v2168 = vadd.f32 %v2028, %v2118
        %v2169 = vadd.f32 %v2029, %v2127
        %v2170 = vadd.f32 %v2030, %v2136
        %v2171 = vadd.f32 %v2031, %v2145
        %v2172 = vadd.f32 %v2032, %v2154
        %v2173 = vadd.f32 %v2033, %v2163
        %v2174 = vsub.f32 0.0, %v2164
        %v2175 = vsub.f32 0.0, %v2165
        %v2176 = vsub.f32 0.0, %v2166
        %v2177 = vsub.f32 0.0, %v2167
        %v2178 = vsub.f32 0.0, %v2168
        %v2179 = vsub.f32 0.0, %v2169
        %v2180 = vsub.f32 0.0, %v2170
        %v2181 = vsub.f32 0.0, %v2171
        %v2182 = vsub.f32 0.0, %v2172
        %v2183 = vsub.f32 0.0, %v2173
        %v2184 = vsel %vm301, %v2174, %v1986
        %v2185 = vsel %vm301, %v2175, %v1989
        %v2186 = vsel %vm301, %v2176, %v1994
        %v2187 = vsel %vm301, %v2177, %v1997
        %v2188 = vsel %vm301, %v2178, %v2002
        %v2189 = vsel %vm301, %v2179, %v2005
        %v2190 = vsel %vm301, %v2180, %v2010
        %v2191 = vsel %vm301, %v2181, %v2013
        %v2192 = vsel %vm301, %v2182, %v2018
        %v2193 = vsel %vm301, %v2183, %v2021
        %v2194 = vpack.c.bf16 %v2185, %v2184
        %v2195 = vpack.c.bf16 %v2187, %v2186
        %v2196 = vpack.c.bf16 %v2189, %v2188
        %v2197 = vpack.c.bf16 %v2191, %v2190
        %v2198 = vpack.c.bf16 %v2193, %v2192
        %s2199 = scalar_lea.vmem [#allocation2], 320
        %v2200 = vld [vmem:[%s2199] sm:$0xf]
        %v2201 = vld [vmem:[%s2199 + $0x4] sm:$0xf]
        %v2202 = vld [vmem:[%s2199 + $0x8] sm:$0xf]
        %v2203 = vld [vmem:[%s2199 + $0xc] sm:$0xf]
        %v2204 = vld [vmem:[%s2199 + $0x10] sm:$0xf]
        %v2205 = vld [vmem:[%s2199 + $0x14] sm:$0xf]
        %v2206 = vld [vmem:[%s2199 + $0x18] sm:$0xf]
        %v2207 = vld [vmem:[%s2199 + $0x1c] sm:$0xf]
        %v2208 = vld [vmem:[%s2199 + $0x20] sm:$0xf]
        %v2209 = vld [vmem:[%s2199 + $0x24] sm:$0xf]
        %v2210 = vld [vmem:[%s2199 + $0x28] sm:$0xf]
        %v2211 = vld [vmem:[%s2199 + $0x2c] sm:$0xf]
        %v2212 = vld [vmem:[%s2199 + $0x30] sm:$0xf]
        %v2213 = vld [vmem:[%s2199 + $0x34] sm:$0xf]
        %v2214 = vld [vmem:[%s2199 + $0x38] sm:$0xf]
        %v2215 = vld [vmem:[%s2199 + $0x3c] sm:$0xf]
        %s2216 = scalar_lea.vmem %s4, 5
        %v2217 = vld [vmem:[%s2216] sm:$0x1]
        %v2219 = vlaneseq
        %v2220 = vshrl.u32 %v2219, 7
        %v2221 = vsub.s32 0, %v2220
        %v2222 = vrot.slane %v2217, %v2221
        %v2240 = vunpack.c.l.b16 %v2200
        %v2241 = vunpack.c.l.b16 %v2201
        %v2242 = vunpack.c.l.b16 %v2202
        %v2243 = vunpack.c.l.b16 %v2203
        %v2244 = vunpack.c.l.b16 %v2204
        %v2245 = vunpack.c.l.b16 %v2205
        %v2246 = vunpack.c.l.b16 %v2206
        %v2247 = vunpack.c.l.b16 %v2207
        %v2248 = vunpack.c.l.b16 %v2208
        %v2249 = vunpack.c.l.b16 %v2209
        %v2250 = vunpack.c.l.b16 %v2210
        %v2251 = vunpack.c.l.b16 %v2211
        %v2252 = vunpack.c.l.b16 %v2212
        %v2253 = vunpack.c.l.b16 %v2213
        %v2254 = vunpack.c.l.b16 %v2214
        %v2255 = vunpack.c.l.b16 %v2215
        %v2256 = vpack.c.b16 %v2241, %v2240
        %v2257 = vpack.c.b16 %v2243, %v2242
        %v2258 = vpack.c.b16 %v2245, %v2244
        %v2259 = vpack.c.b16 %v2247, %v2246
        %v2260 = vpack.c.b16 %v2249, %v2248
        %v2261 = vpack.c.b16 %v2251, %v2250
        %v2262 = vpack.c.b16 %v2253, %v2252
        %v2263 = vpack.c.b16 %v2255, %v2254
        %2272 = vmatprep.subr.bf16.mxu0 0
        %2273 = vmatpush1.bf16.msra.mxu0 %v2263
        %2274 = vmatprep.subr.bf16.mxu0 0
        %2275 = vmatpush1.bf16.msra.mxu0 %v2262
        %2276 = vmatprep.subr.bf16.mxu0 0
        %2277 = vmatpush1.bf16.msra.mxu0 %v2261
        %2278 = vmatprep.subr.bf16.mxu0 0
        %2279 = vmatpush1.bf16.msra.mxu0 %v2260
        %2280 = vmatprep.subr.bf16.mxu0 0
        %2281 = vmatpush1.bf16.msra.mxu0 %v2259
        %2282 = vmatprep.subr.bf16.mxu0 0
        %2283 = vmatpush1.bf16.msra.mxu0 %v2258
        %2284 = vmatprep.subr.bf16.mxu0 0
        %2285 = vmatpush1.bf16.msra.mxu0 %v2257
        %2286 = vmatprep.subr.bf16.mxu0 0
        %2287 = vmatpush1.bf16.msra.mxu0 %v2256
        %2288 = vmatprep.subr.bf16.mxu0 0
        %2289 = vmatpush2.bf16.msra.mxu0 0
        %2290 = vmatprep.subr.bf16.mxu0 0
        %2291 = vmatpush2.bf16.msra.mxu0 0
        %2292 = vmatprep.subr.bf16.mxu0 0
        %2293 = vmatpush2.bf16.msra.mxu0 0
        %2294 = vmatprep.subr.bf16.mxu0 0
        %2295 = vmatpush2.bf16.msra.mxu0 0
        %2296 = vmatprep.subr.bf16.mxu0 0
        %2297 = vmatpush2.bf16.msra.mxu0 0
        %2298 = vmatprep.subr.bf16.mxu0 0
        %2299 = vmatpush2.bf16.msra.mxu0 0
        %2300 = vmatprep.subr.bf16.mxu0 0
        %2301 = vmatpush2.bf16.msra.mxu0 0
        %2302 = vmatprep.subr.bf16.mxu0 0
        %2303 = vmatpush2.bf16.msra.mxu0 0
        %2304 = vmatprep.mubr.bf16.mxu0 0
        %2305 = vmatmul.mubr.bf16.gmra.mxu0 %v2194
        %v2306 = vpop.f32.mrf.mxu0
        %v2307 = vadd.f32 %v2222, %v2306
        %v2308 = vpop.f32.mrf.mxu0
        %v2309 = vpop.f32.mrf.mxu0
        %v2310 = vadd.f32 %v2222, %v2309
        %v2311 = vpop.f32.mrf.mxu0
        %2312 = vmatprep.mubr.bf16.mxu0 0
        %2313 = vmatmul.mubr.bf16.gmra.mxu0 %v2195
        %v2314 = vpop.f32.mrf.mxu0
        %v2315 = vadd.f32 %v2222, %v2314
        %v2316 = vpop.f32.mrf.mxu0
        %v2317 = vpop.f32.mrf.mxu0
        %v2318 = vadd.f32 %v2222, %v2317
        %v2319 = vpop.f32.mrf.mxu0
        %2320 = vmatprep.mubr.bf16.mxu0 0
        %2321 = vmatmul.mubr.bf16.gmra.mxu0 %v2196
        %v2322 = vpop.f32.mrf.mxu0
        %v2323 = vadd.f32 %v2222, %v2322
        %v2324 = vpop.f32.mrf.mxu0
        %v2325 = vpop.f32.mrf.mxu0
        %v2326 = vadd.f32 %v2222, %v2325
        %v2327 = vpop.f32.mrf.mxu0
        %2328 = vmatprep.mubr.bf16.mxu0 0
        %2329 = vmatmul.mubr.bf16.gmra.mxu0 %v2197
        %v2330 = vpop.f32.mrf.mxu0
        %v2331 = vadd.f32 %v2222, %v2330
        %v2332 = vpop.f32.mrf.mxu0
        %v2333 = vpop.f32.mrf.mxu0
        %v2334 = vadd.f32 %v2222, %v2333
        %v2335 = vpop.f32.mrf.mxu0
        %2336 = vmatprep.mubr.bf16.mxu0 0
        %2337 = vmatmul.mubr.bf16.gmra.mxu0 %v2198
        %v2338 = vpop.f32.mrf.mxu0
        %v2339 = vadd.f32 %v2222, %v2338
        %v2340 = vpop.f32.mrf.mxu0
        %v2341 = vpop.f32.mrf.mxu0
        %v2342 = vadd.f32 %v2222, %v2341
        %v2343 = vpop.f32.mrf.mxu0
        %2344 = vdwg.mxu0
        %v2345 = vmax.f32 %v2307, 0.0
        %v2346 = vmax.f32 %v2310, 0.0
        %v2347 = vmax.f32 %v2315, 0.0
        %v2348 = vmax.f32 %v2318, 0.0
        %v2349 = vmax.f32 %v2323, 0.0
        %v2350 = vmax.f32 %v2326, 0.0
        %v2351 = vmax.f32 %v2331, 0.0
        %v2352 = vmax.f32 %v2334, 0.0
        %v2353 = vmax.f32 %v2339, 0.0
        %v2354 = vmax.f32 %v2342, 0.0
        %v2355 = vand.u32 2147483647, %v2307
        %v2356 = vand.u32 2147483647, %v2310
        %v2357 = vand.u32 2147483647, %v2315
        %v2358 = vand.u32 2147483647, %v2318
        %v2359 = vand.u32 2147483647, %v2323
        %v2360 = vand.u32 2147483647, %v2326
        %v2361 = vand.u32 2147483647, %v2331
        %v2362 = vand.u32 2147483647, %v2334
        %v2363 = vand.u32 2147483647, %v2339
        %v2364 = vand.u32 2147483647, %v2342
        %v2365 = vsub.f32 0.0, %v2355
        %v2366 = vsub.f32 0.0, %v2356
        %v2367 = vsub.f32 0.0, %v2357
        %v2368 = vsub.f32 0.0, %v2358
        %v2369 = vsub.f32 0.0, %v2359
        %v2370 = vsub.f32 0.0, %v2360
        %v2371 = vsub.f32 0.0, %v2361
        %v2372 = vsub.f32 0.0, %v2362
        %v2373 = vsub.f32 0.0, %v2363
        %v2374 = vsub.f32 0.0, %v2364
        %v2375 = vmul.f32 %v2365, 1.442695
        %v2376 = vpow.pop %v2375
        %v2377 = vmul.f32 %v2366, 1.442695
        %v2378 = vpow.pop %v2377
        %v2379 = vmul.f32 %v2367, 1.442695
        %v2380 = vpow.pop %v2379
        %v2381 = vmul.f32 %v2368, 1.442695
        %v2382 = vpow.pop %v2381
        %v2383 = vmul.f32 %v2369, 1.442695
        %v2384 = vpow.pop %v2383
        %v2385 = vmul.f32 %v2370, 1.442695
        %v2386 = vpow.pop %v2385
        %v2387 = vmul.f32 %v2371, 1.442695
        %v2388 = vpow.pop %v2387
        %v2389 = vmul.f32 %v2372, 1.442695
        %v2390 = vpow.pop %v2389
        %v2391 = vmul.f32 %v2373, 1.442695
        %v2392 = vpow.pop %v2391
        %v2393 = vmul.f32 %v2374, 1.442695
        %v2394 = vpow.pop %v2393
        %v2395 = vadd.f32 %v2376, 1.0
        %v2396 = vlog2.pop %v2395
        %v2397 = vmul.f32 %v2396, 0.6931472
        %v2398 = vmul.f32 -0.5, %v2376
        %v2399 = vadd.f32 %v2398, 1.0
        %v2400 = vmul.f32 %v2399, %v2376
        %v2401 = vand.u32 2147483647, %v2376
        %vm2402 = vcmp.lt.f32.partialorder %v2401, 0.0004427343
        %v2403 = vsel %vm2402, %v2400, %v2397
        %v2404 = vadd.f32 %v2378, 1.0
        %v2405 = vlog2.pop %v2404
        %v2406 = vmul.f32 %v2405, 0.6931472
        %v2407 = vmul.f32 -0.5, %v2378
        %v2408 = vadd.f32 %v2407, 1.0
        %v2409 = vmul.f32 %v2408, %v2378
        %v2410 = vand.u32 2147483647, %v2378
        %vm2411 = vcmp.lt.f32.partialorder %v2410, 0.0004427343
        %v2412 = vsel %vm2411, %v2409, %v2406
        %v2413 = vadd.f32 %v2380, 1.0
        %v2414 = vlog2.pop %v2413
        %v2415 = vmul.f32 %v2414, 0.6931472
        %v2416 = vmul.f32 -0.5, %v2380
        %v2417 = vadd.f32 %v2416, 1.0
        %v2418 = vmul.f32 %v2417, %v2380
        %v2419 = vand.u32 2147483647, %v2380
        %vm2420 = vcmp.lt.f32.partialorder %v2419, 0.0004427343
        %v2421 = vsel %vm2420, %v2418, %v2415
        %v2422 = vadd.f32 %v2382, 1.0
        %v2423 = vlog2.pop %v2422
        %v2424 = vmul.f32 %v2423, 0.6931472
        %v2425 = vmul.f32 -0.5, %v2382
        %v2426 = vadd.f32 %v2425, 1.0
        %v2427 = vmul.f32 %v2426, %v2382
        %v2428 = vand.u32 2147483647, %v2382
        %vm2429 = vcmp.lt.f32.partialorder %v2428, 0.0004427343
        %v2430 = vsel %vm2429, %v2427, %v2424
        %v2431 = vadd.f32 %v2384, 1.0
        %v2432 = vlog2.pop %v2431
        %v2433 = vmul.f32 %v2432, 0.6931472
        %v2434 = vmul.f32 -0.5, %v2384
        %v2435 = vadd.f32 %v2434, 1.0
        %v2436 = vmul.f32 %v2435, %v2384
        %v2437 = vand.u32 2147483647, %v2384
        %vm2438 = vcmp.lt.f32.partialorder %v2437, 0.0004427343
        %v2439 = vsel %vm2438, %v2436, %v2433
        %v2440 = vadd.f32 %v2386, 1.0
        %v2441 = vlog2.pop %v2440
        %v2442 = vmul.f32 %v2441, 0.6931472
        %v2443 = vmul.f32 -0.5, %v2386
        %v2444 = vadd.f32 %v2443, 1.0
        %v2445 = vmul.f32 %v2444, %v2386
        %v2446 = vand.u32 2147483647, %v2386
        %vm2447 = vcmp.lt.f32.partialorder %v2446, 0.0004427343
        %v2448 = vsel %vm2447, %v2445, %v2442
        %v2449 = vadd.f32 %v2388, 1.0
        %v2450 = vlog2.pop %v2449
        %v2451 = vmul.f32 %v2450, 0.6931472
        %v2452 = vmul.f32 -0.5, %v2388
        %v2453 = vadd.f32 %v2452, 1.0
        %v2454 = vmul.f32 %v2453, %v2388
        %v2455 = vand.u32 2147483647, %v2388
        %vm2456 = vcmp.lt.f32.partialorder %v2455, 0.0004427343
        %v2457 = vsel %vm2456, %v2454, %v2451
        %v2458 = vadd.f32 %v2390, 1.0
        %v2459 = vlog2.pop %v2458
        %v2460 = vmul.f32 %v2459, 0.6931472
        %v2461 = vmul.f32 -0.5, %v2390
        %v2462 = vadd.f32 %v2461, 1.0
        %v2463 = vmul.f32 %v2462, %v2390
        %v2464 = vand.u32 2147483647, %v2390
        %vm2465 = vcmp.lt.f32.partialorder %v2464, 0.0004427343
        %v2466 = vsel %vm2465, %v2463, %v2460
        %v2467 = vadd.f32 %v2392, 1.0
        %v2468 = vlog2.pop %v2467
        %v2469 = vmul.f32 %v2468, 0.6931472
        %v2470 = vmul.f32 -0.5, %v2392
        %v2471 = vadd.f32 %v2470, 1.0
        %v2472 = vmul.f32 %v2471, %v2392
        %v2473 = vand.u32 2147483647, %v2392
        %vm2474 = vcmp.lt.f32.partialorder %v2473, 0.0004427343
        %v2475 = vsel %vm2474, %v2472, %v2469
        %v2476 = vadd.f32 %v2394, 1.0
        %v2477 = vlog2.pop %v2476
        %v2478 = vmul.f32 %v2477, 0.6931472
        %v2479 = vmul.f32 -0.5, %v2394
        %v2480 = vadd.f32 %v2479, 1.0
        %v2481 = vmul.f32 %v2480, %v2394
        %v2482 = vand.u32 2147483647, %v2394
        %vm2483 = vcmp.lt.f32.partialorder %v2482, 0.0004427343
        %v2484 = vsel %vm2483, %v2481, %v2478
        %v2485 = vadd.f32 %v2345, %v2403
        %v2486 = vadd.f32 %v2346, %v2412
        %v2487 = vadd.f32 %v2347, %v2421
        %v2488 = vadd.f32 %v2348, %v2430
        %v2489 = vadd.f32 %v2349, %v2439
        %v2490 = vadd.f32 %v2350, %v2448
        %v2491 = vadd.f32 %v2351, %v2457
        %v2492 = vadd.f32 %v2352, %v2466
        %v2493 = vadd.f32 %v2353, %v2475
        %v2494 = vadd.f32 %v2354, %v2484
        %v2495 = vsub.f32 0.0, %v2485
        %v2496 = vsub.f32 0.0, %v2486
        %v2497 = vsub.f32 0.0, %v2487
        %v2498 = vsub.f32 0.0, %v2488
        %v2499 = vsub.f32 0.0, %v2489
        %v2500 = vsub.f32 0.0, %v2490
        %v2501 = vsub.f32 0.0, %v2491
        %v2502 = vsub.f32 0.0, %v2492
        %v2503 = vsub.f32 0.0, %v2493
        %v2504 = vsub.f32 0.0, %v2494
        %v2505 = vsel %vm301, %v2495, %v2307
        %v2506 = vsel %vm301, %v2496, %v2310
        %v2507 = vsel %vm301, %v2497, %v2315
        %v2508 = vsel %vm301, %v2498, %v2318
        %v2509 = vsel %vm301, %v2499, %v2323
        %v2510 = vsel %vm301, %v2500, %v2326
        %v2511 = vsel %vm301, %v2501, %v2331
        %v2512 = vsel %vm301, %v2502, %v2334
        %v2513 = vsel %vm301, %v2503, %v2339
        %v2514 = vsel %vm301, %v2504, %v2342
        %v2515 = vpack.c.bf16 %v2506, %v2505
        %v2516 = vpack.c.bf16 %v2508, %v2507
        %v2517 = vpack.c.bf16 %v2510, %v2509
        %v2518 = vpack.c.bf16 %v2512, %v2511
        %v2519 = vpack.c.bf16 %v2514, %v2513
        %s2520 = scalar_lea.vmem [#allocation2], 384
        %v2521 = vld [vmem:[%s2520] sm:$0xf]
        %v2522 = vld [vmem:[%s2520 + $0x4] sm:$0xf]
        %v2523 = vld [vmem:[%s2520 + $0x8] sm:$0xf]
        %v2524 = vld [vmem:[%s2520 + $0xc] sm:$0xf]
        %v2525 = vld [vmem:[%s2520 + $0x10] sm:$0xf]
        %v2526 = vld [vmem:[%s2520 + $0x14] sm:$0xf]
        %v2527 = vld [vmem:[%s2520 + $0x18] sm:$0xf]
        %v2528 = vld [vmem:[%s2520 + $0x1c] sm:$0xf]
        %v2529 = vld [vmem:[%s2520 + $0x20] sm:$0xf]
        %v2530 = vld [vmem:[%s2520 + $0x24] sm:$0xf]
        %v2531 = vld [vmem:[%s2520 + $0x28] sm:$0xf]
        %v2532 = vld [vmem:[%s2520 + $0x2c] sm:$0xf]
        %v2533 = vld [vmem:[%s2520 + $0x30] sm:$0xf]
        %v2534 = vld [vmem:[%s2520 + $0x34] sm:$0xf]
        %v2535 = vld [vmem:[%s2520 + $0x38] sm:$0xf]
        %v2536 = vld [vmem:[%s2520 + $0x3c] sm:$0xf]
        %s2537 = scalar_lea.vmem %s4, 6
        %v2538 = vld [vmem:[%s2537] sm:$0x1]
        %v2540 = vlaneseq
        %v2541 = vshrl.u32 %v2540, 7
        %v2542 = vsub.s32 0, %v2541
        %v2543 = vrot.slane %v2538, %v2542
        %v2561 = vunpack.c.l.b16 %v2521
        %v2562 = vunpack.c.l.b16 %v2522
        %v2563 = vunpack.c.l.b16 %v2523
        %v2564 = vunpack.c.l.b16 %v2524
        %v2565 = vunpack.c.l.b16 %v2525
        %v2566 = vunpack.c.l.b16 %v2526
        %v2567 = vunpack.c.l.b16 %v2527
        %v2568 = vunpack.c.l.b16 %v2528
        %v2569 = vunpack.c.l.b16 %v2529
        %v2570 = vunpack.c.l.b16 %v2530
        %v2571 = vunpack.c.l.b16 %v2531
        %v2572 = vunpack.c.l.b16 %v2532
        %v2573 = vunpack.c.l.b16 %v2533
        %v2574 = vunpack.c.l.b16 %v2534
        %v2575 = vunpack.c.l.b16 %v2535
        %v2576 = vunpack.c.l.b16 %v2536
        %v2577 = vpack.c.b16 %v2562, %v2561
        %v2578 = vpack.c.b16 %v2564, %v2563
        %v2579 = vpack.c.b16 %v2566, %v2565
        %v2580 = vpack.c.b16 %v2568, %v2567
        %v2581 = vpack.c.b16 %v2570, %v2569
        %v2582 = vpack.c.b16 %v2572, %v2571
        %v2583 = vpack.c.b16 %v2574, %v2573
        %v2584 = vpack.c.b16 %v2576, %v2575
        %2593 = vmatprep.subr.bf16.mxu0 0
        %2594 = vmatpush1.bf16.msra.mxu0 %v2584
        %2595 = vmatprep.subr.bf16.mxu0 0
        %2596 = vmatpush1.bf16.msra.mxu0 %v2583
        %2597 = vmatprep.subr.bf16.mxu0 0
        %2598 = vmatpush1.bf16.msra.mxu0 %v2582
        %2599 = vmatprep.subr.bf16.mxu0 0
        %2600 = vmatpush1.bf16.msra.mxu0 %v2581
        %2601 = vmatprep.subr.bf16.mxu0 0
        %2602 = vmatpush1.bf16.msra.mxu0 %v2580
        %2603 = vmatprep.subr.bf16.mxu0 0
        %2604 = vmatpush1.bf16.msra.mxu0 %v2579
        %2605 = vmatprep.subr.bf16.mxu0 0
        %2606 = vmatpush1.bf16.msra.mxu0 %v2578
        %2607 = vmatprep.subr.bf16.mxu0 0
        %2608 = vmatpush1.bf16.msra.mxu0 %v2577
        %2609 = vmatprep.subr.bf16.mxu0 0
        %2610 = vmatpush2.bf16.msra.mxu0 0
        %2611 = vmatprep.subr.bf16.mxu0 0
        %2612 = vmatpush2.bf16.msra.mxu0 0
        %2613 = vmatprep.subr.bf16.mxu0 0
        %2614 = vmatpush2.bf16.msra.mxu0 0
        %2615 = vmatprep.subr.bf16.mxu0 0
        %2616 = vmatpush2.bf16.msra.mxu0 0
        %2617 = vmatprep.subr.bf16.mxu0 0
        %2618 = vmatpush2.bf16.msra.mxu0 0
        %2619 = vmatprep.subr.bf16.mxu0 0
        %2620 = vmatpush2.bf16.msra.mxu0 0
        %2621 = vmatprep.subr.bf16.mxu0 0
        %2622 = vmatpush2.bf16.msra.mxu0 0
        %2623 = vmatprep.subr.bf16.mxu0 0
        %2624 = vmatpush2.bf16.msra.mxu0 0
        %2625 = vmatprep.mubr.bf16.mxu0 0
        %2626 = vmatmul.mubr.bf16.gmra.mxu0 %v2515
        %v2627 = vpop.f32.mrf.mxu0
        %v2628 = vadd.f32 %v2543, %v2627
        %v2629 = vpop.f32.mrf.mxu0
        %v2630 = vpop.f32.mrf.mxu0
        %v2631 = vadd.f32 %v2543, %v2630
        %v2632 = vpop.f32.mrf.mxu0
        %2633 = vmatprep.mubr.bf16.mxu0 0
        %2634 = vmatmul.mubr.bf16.gmra.mxu0 %v2516
        %v2635 = vpop.f32.mrf.mxu0
        %v2636 = vadd.f32 %v2543, %v2635
        %v2637 = vpop.f32.mrf.mxu0
        %v2638 = vpop.f32.mrf.mxu0
        %v2639 = vadd.f32 %v2543, %v2638
        %v2640 = vpop.f32.mrf.mxu0
        %2641 = vmatprep.mubr.bf16.mxu0 0
        %2642 = vmatmul.mubr.bf16.gmra.mxu0 %v2517
        %v2643 = vpop.f32.mrf.mxu0
        %v2644 = vadd.f32 %v2543, %v2643
        %v2645 = vpop.f32.mrf.mxu0
        %v2646 = vpop.f32.mrf.mxu0
        %v2647 = vadd.f32 %v2543, %v2646
        %v2648 = vpop.f32.mrf.mxu0
        %2649 = vmatprep.mubr.bf16.mxu0 0
        %2650 = vmatmul.mubr.bf16.gmra.mxu0 %v2518
        %v2651 = vpop.f32.mrf.mxu0
        %v2652 = vadd.f32 %v2543, %v2651
        %v2653 = vpop.f32.mrf.mxu0
        %v2654 = vpop.f32.mrf.mxu0
        %v2655 = vadd.f32 %v2543, %v2654
        %v2656 = vpop.f32.mrf.mxu0
        %2657 = vmatprep.mubr.bf16.mxu0 0
        %2658 = vmatmul.mubr.bf16.gmra.mxu0 %v2519
        %v2659 = vpop.f32.mrf.mxu0
        %v2660 = vadd.f32 %v2543, %v2659
        %v2661 = vpop.f32.mrf.mxu0
        %v2662 = vpop.f32.mrf.mxu0
        %v2663 = vadd.f32 %v2543, %v2662
        %v2664 = vpop.f32.mrf.mxu0
        %2665 = vdwg.mxu0
        %v2666 = vmax.f32 %v2628, 0.0
        %v2667 = vmax.f32 %v2631, 0.0
        %v2668 = vmax.f32 %v2636, 0.0
        %v2669 = vmax.f32 %v2639, 0.0
        %v2670 = vmax.f32 %v2644, 0.0
        %v2671 = vmax.f32 %v2647, 0.0
        %v2672 = vmax.f32 %v2652, 0.0
        %v2673 = vmax.f32 %v2655, 0.0
        %v2674 = vmax.f32 %v2660, 0.0
        %v2675 = vmax.f32 %v2663, 0.0
        %v2676 = vand.u32 2147483647, %v2628
        %v2677 = vand.u32 2147483647, %v2631
        %v2678 = vand.u32 2147483647, %v2636
        %v2679 = vand.u32 2147483647, %v2639
        %v2680 = vand.u32 2147483647, %v2644
        %v2681 = vand.u32 2147483647, %v2647
        %v2682 = vand.u32 2147483647, %v2652
        %v2683 = vand.u32 2147483647, %v2655
        %v2684 = vand.u32 2147483647, %v2660
        %v2685 = vand.u32 2147483647, %v2663
        %v2686 = vsub.f32 0.0, %v2676
        %v2687 = vsub.f32 0.0, %v2677
        %v2688 = vsub.f32 0.0, %v2678
        %v2689 = vsub.f32 0.0, %v2679
        %v2690 = vsub.f32 0.0, %v2680
        %v2691 = vsub.f32 0.0, %v2681
        %v2692 = vsub.f32 0.0, %v2682
        %v2693 = vsub.f32 0.0, %v2683
        %v2694 = vsub.f32 0.0, %v2684
        %v2695 = vsub.f32 0.0, %v2685
        %v2696 = vmul.f32 %v2686, 1.442695
        %v2697 = vpow.pop %v2696
        %v2698 = vmul.f32 %v2687, 1.442695
        %v2699 = vpow.pop %v2698
        %v2700 = vmul.f32 %v2688, 1.442695
        %v2701 = vpow.pop %v2700
        %v2702 = vmul.f32 %v2689, 1.442695
        %v2703 = vpow.pop %v2702
        %v2704 = vmul.f32 %v2690, 1.442695
        %v2705 = vpow.pop %v2704
        %v2706 = vmul.f32 %v2691, 1.442695
        %v2707 = vpow.pop %v2706
        %v2708 = vmul.f32 %v2692, 1.442695
        %v2709 = vpow.pop %v2708
        %v2710 = vmul.f32 %v2693, 1.442695
        %v2711 = vpow.pop %v2710
        %v2712 = vmul.f32 %v2694, 1.442695
        %v2713 = vpow.pop %v2712
        %v2714 = vmul.f32 %v2695, 1.442695
        %v2715 = vpow.pop %v2714
        %v2716 = vadd.f32 %v2697, 1.0
        %v2717 = vlog2.pop %v2716
        %v2718 = vmul.f32 %v2717, 0.6931472
        %v2719 = vmul.f32 -0.5, %v2697
        %v2720 = vadd.f32 %v2719, 1.0
        %v2721 = vmul.f32 %v2720, %v2697
        %v2722 = vand.u32 2147483647, %v2697
        %vm2723 = vcmp.lt.f32.partialorder %v2722, 0.0004427343
        %v2724 = vsel %vm2723, %v2721, %v2718
        %v2725 = vadd.f32 %v2699, 1.0
        %v2726 = vlog2.pop %v2725
        %v2727 = vmul.f32 %v2726, 0.6931472
        %v2728 = vmul.f32 -0.5, %v2699
        %v2729 = vadd.f32 %v2728, 1.0
        %v2730 = vmul.f32 %v2729, %v2699
        %v2731 = vand.u32 2147483647, %v2699
        %vm2732 = vcmp.lt.f32.partialorder %v2731, 0.0004427343
        %v2733 = vsel %vm2732, %v2730, %v2727
        %v2734 = vadd.f32 %v2701, 1.0
        %v2735 = vlog2.pop %v2734
        %v2736 = vmul.f32 %v2735, 0.6931472
        %v2737 = vmul.f32 -0.5, %v2701
        %v2738 = vadd.f32 %v2737, 1.0
        %v2739 = vmul.f32 %v2738, %v2701
        %v2740 = vand.u32 2147483647, %v2701
        %vm2741 = vcmp.lt.f32.partialorder %v2740, 0.0004427343
        %v2742 = vsel %vm2741, %v2739, %v2736
        %v2743 = vadd.f32 %v2703, 1.0
        %v2744 = vlog2.pop %v2743
        %v2745 = vmul.f32 %v2744, 0.6931472
        %v2746 = vmul.f32 -0.5, %v2703
        %v2747 = vadd.f32 %v2746, 1.0
        %v2748 = vmul.f32 %v2747, %v2703
        %v2749 = vand.u32 2147483647, %v2703
        %vm2750 = vcmp.lt.f32.partialorder %v2749, 0.0004427343
        %v2751 = vsel %vm2750, %v2748, %v2745
        %v2752 = vadd.f32 %v2705, 1.0
        %v2753 = vlog2.pop %v2752
        %v2754 = vmul.f32 %v2753, 0.6931472
        %v2755 = vmul.f32 -0.5, %v2705
        %v2756 = vadd.f32 %v2755, 1.0
        %v2757 = vmul.f32 %v2756, %v2705
        %v2758 = vand.u32 2147483647, %v2705
        %vm2759 = vcmp.lt.f32.partialorder %v2758, 0.0004427343
        %v2760 = vsel %vm2759, %v2757, %v2754
        %v2761 = vadd.f32 %v2707, 1.0
        %v2762 = vlog2.pop %v2761
        %v2763 = vmul.f32 %v2762, 0.6931472
        %v2764 = vmul.f32 -0.5, %v2707
        %v2765 = vadd.f32 %v2764, 1.0
        %v2766 = vmul.f32 %v2765, %v2707
        %v2767 = vand.u32 2147483647, %v2707
        %vm2768 = vcmp.lt.f32.partialorder %v2767, 0.0004427343
        %v2769 = vsel %vm2768, %v2766, %v2763
        %v2770 = vadd.f32 %v2709, 1.0
        %v2771 = vlog2.pop %v2770
        %v2772 = vmul.f32 %v2771, 0.6931472
        %v2773 = vmul.f32 -0.5, %v2709
        %v2774 = vadd.f32 %v2773, 1.0
        %v2775 = vmul.f32 %v2774, %v2709
        %v2776 = vand.u32 2147483647, %v2709
        %vm2777 = vcmp.lt.f32.partialorder %v2776, 0.0004427343
        %v2778 = vsel %vm2777, %v2775, %v2772
        %v2779 = vadd.f32 %v2711, 1.0
        %v2780 = vlog2.pop %v2779
        %v2781 = vmul.f32 %v2780, 0.6931472
        %v2782 = vmul.f32 -0.5, %v2711
        %v2783 = vadd.f32 %v2782, 1.0
        %v2784 = vmul.f32 %v2783, %v2711
        %v2785 = vand.u32 2147483647, %v2711
        %vm2786 = vcmp.lt.f32.partialorder %v2785, 0.0004427343
        %v2787 = vsel %vm2786, %v2784, %v2781
        %v2788 = vadd.f32 %v2713, 1.0
        %v2789 = vlog2.pop %v2788
        %v2790 = vmul.f32 %v2789, 0.6931472
        %v2791 = vmul.f32 -0.5, %v2713
        %v2792 = vadd.f32 %v2791, 1.0
        %v2793 = vmul.f32 %v2792, %v2713
        %v2794 = vand.u32 2147483647, %v2713
        %vm2795 = vcmp.lt.f32.partialorder %v2794, 0.0004427343
        %v2796 = vsel %vm2795, %v2793, %v2790
        %v2797 = vadd.f32 %v2715, 1.0
        %v2798 = vlog2.pop %v2797
        %v2799 = vmul.f32 %v2798, 0.6931472
        %v2800 = vmul.f32 -0.5, %v2715
        %v2801 = vadd.f32 %v2800, 1.0
        %v2802 = vmul.f32 %v2801, %v2715
        %v2803 = vand.u32 2147483647, %v2715
        %vm2804 = vcmp.lt.f32.partialorder %v2803, 0.0004427343
        %v2805 = vsel %vm2804, %v2802, %v2799
        %v2806 = vadd.f32 %v2666, %v2724
        %v2807 = vadd.f32 %v2667, %v2733
        %v2808 = vadd.f32 %v2668, %v2742
        %v2809 = vadd.f32 %v2669, %v2751
        %v2810 = vadd.f32 %v2670, %v2760
        %v2811 = vadd.f32 %v2671, %v2769
        %v2812 = vadd.f32 %v2672, %v2778
        %v2813 = vadd.f32 %v2673, %v2787
        %v2814 = vadd.f32 %v2674, %v2796
        %v2815 = vadd.f32 %v2675, %v2805
        %v2816 = vsub.f32 0.0, %v2806
        %v2817 = vsub.f32 0.0, %v2807
        %v2818 = vsub.f32 0.0, %v2808
        %v2819 = vsub.f32 0.0, %v2809
        %v2820 = vsub.f32 0.0, %v2810
        %v2821 = vsub.f32 0.0, %v2811
        %v2822 = vsub.f32 0.0, %v2812
        %v2823 = vsub.f32 0.0, %v2813
        %v2824 = vsub.f32 0.0, %v2814
        %v2825 = vsub.f32 0.0, %v2815
        %v2826 = vsel %vm301, %v2816, %v2628
        %v2827 = vsel %vm301, %v2817, %v2631
        %v2828 = vsel %vm301, %v2818, %v2636
        %v2829 = vsel %vm301, %v2819, %v2639
        %v2830 = vsel %vm301, %v2820, %v2644
        %v2831 = vsel %vm301, %v2821, %v2647
        %v2832 = vsel %vm301, %v2822, %v2652
        %v2833 = vsel %vm301, %v2823, %v2655
        %v2834 = vsel %vm301, %v2824, %v2660
        %v2835 = vsel %vm301, %v2825, %v2663
        %v2836 = vpack.c.bf16 %v2827, %v2826
        %v2837 = vpack.c.bf16 %v2829, %v2828
        %v2838 = vpack.c.bf16 %v2831, %v2830
        %v2839 = vpack.c.bf16 %v2833, %v2832
        %v2840 = vpack.c.bf16 %v2835, %v2834
        %s2841 = scalar_lea.vmem [#allocation2], 448
        %v2842 = vld [vmem:[%s2841] sm:$0xf]
        %v2843 = vld [vmem:[%s2841 + $0x4] sm:$0xf]
        %v2844 = vld [vmem:[%s2841 + $0x8] sm:$0xf]
        %v2845 = vld [vmem:[%s2841 + $0xc] sm:$0xf]
        %v2846 = vld [vmem:[%s2841 + $0x10] sm:$0xf]
        %v2847 = vld [vmem:[%s2841 + $0x14] sm:$0xf]
        %v2848 = vld [vmem:[%s2841 + $0x18] sm:$0xf]
        %v2849 = vld [vmem:[%s2841 + $0x1c] sm:$0xf]
        %v2850 = vld [vmem:[%s2841 + $0x20] sm:$0xf]
        %v2851 = vld [vmem:[%s2841 + $0x24] sm:$0xf]
        %v2852 = vld [vmem:[%s2841 + $0x28] sm:$0xf]
        %v2853 = vld [vmem:[%s2841 + $0x2c] sm:$0xf]
        %v2854 = vld [vmem:[%s2841 + $0x30] sm:$0xf]
        %v2855 = vld [vmem:[%s2841 + $0x34] sm:$0xf]
        %v2856 = vld [vmem:[%s2841 + $0x38] sm:$0xf]
        %v2857 = vld [vmem:[%s2841 + $0x3c] sm:$0xf]
        %s2858 = scalar_lea.vmem %s4, 7
        %v2859 = vld [vmem:[%s2858] sm:$0x1]
        %v2861 = vlaneseq
        %v2862 = vshrl.u32 %v2861, 7
        %v2863 = vsub.s32 0, %v2862
        %v2864 = vrot.slane %v2859, %v2863
        %v2882 = vunpack.c.l.b16 %v2842
        %v2883 = vunpack.c.l.b16 %v2843
        %v2884 = vunpack.c.l.b16 %v2844
        %v2885 = vunpack.c.l.b16 %v2845
        %v2886 = vunpack.c.l.b16 %v2846
        %v2887 = vunpack.c.l.b16 %v2847
        %v2888 = vunpack.c.l.b16 %v2848
        %v2889 = vunpack.c.l.b16 %v2849
        %v2890 = vunpack.c.l.b16 %v2850
        %v2891 = vunpack.c.l.b16 %v2851
        %v2892 = vunpack.c.l.b16 %v2852
        %v2893 = vunpack.c.l.b16 %v2853
        %v2894 = vunpack.c.l.b16 %v2854
        %v2895 = vunpack.c.l.b16 %v2855
        %v2896 = vunpack.c.l.b16 %v2856
        %v2897 = vunpack.c.l.b16 %v2857
        %v2898 = vpack.c.b16 %v2883, %v2882
        %v2899 = vpack.c.b16 %v2885, %v2884
        %v2900 = vpack.c.b16 %v2887, %v2886
        %v2901 = vpack.c.b16 %v2889, %v2888
        %v2902 = vpack.c.b16 %v2891, %v2890
        %v2903 = vpack.c.b16 %v2893, %v2892
        %v2904 = vpack.c.b16 %v2895, %v2894
        %v2905 = vpack.c.b16 %v2897, %v2896
        %2914 = vmatprep.subr.bf16.mxu0 0
        %2915 = vmatpush1.bf16.msra.mxu0 %v2905
        %2916 = vmatprep.subr.bf16.mxu0 0
        %2917 = vmatpush1.bf16.msra.mxu0 %v2904
        %2918 = vmatprep.subr.bf16.mxu0 0
        %2919 = vmatpush1.bf16.msra.mxu0 %v2903
        %2920 = vmatprep.subr.bf16.mxu0 0
        %2921 = vmatpush1.bf16.msra.mxu0 %v2902
        %2922 = vmatprep.subr.bf16.mxu0 0
        %2923 = vmatpush1.bf16.msra.mxu0 %v2901
        %2924 = vmatprep.subr.bf16.mxu0 0
        %2925 = vmatpush1.bf16.msra.mxu0 %v2900
        %2926 = vmatprep.subr.bf16.mxu0 0
        %2927 = vmatpush1.bf16.msra.mxu0 %v2899
        %2928 = vmatprep.subr.bf16.mxu0 0
        %2929 = vmatpush1.bf16.msra.mxu0 %v2898
        %2930 = vmatprep.subr.bf16.mxu0 0
        %2931 = vmatpush2.bf16.msra.mxu0 0
        %2932 = vmatprep.subr.bf16.mxu0 0
        %2933 = vmatpush2.bf16.msra.mxu0 0
        %2934 = vmatprep.subr.bf16.mxu0 0
        %2935 = vmatpush2.bf16.msra.mxu0 0
        %2936 = vmatprep.subr.bf16.mxu0 0
        %2937 = vmatpush2.bf16.msra.mxu0 0
        %2938 = vmatprep.subr.bf16.mxu0 0
        %2939 = vmatpush2.bf16.msra.mxu0 0
        %2940 = vmatprep.subr.bf16.mxu0 0
        %2941 = vmatpush2.bf16.msra.mxu0 0
        %2942 = vmatprep.subr.bf16.mxu0 0
        %2943 = vmatpush2.bf16.msra.mxu0 0
        %2944 = vmatprep.subr.bf16.mxu0 0
        %2945 = vmatpush2.bf16.msra.mxu0 0
        %2946 = vmatprep.mubr.bf16.mxu0 0
        %2947 = vmatmul.mubr.bf16.gmra.mxu0 %v2836
        %v2948 = vpop.f32.mrf.mxu0
        %v2949 = vadd.f32 %v2864, %v2948
        %v2950 = vpop.f32.mrf.mxu0
        %v2951 = vpop.f32.mrf.mxu0
        %v2952 = vadd.f32 %v2864, %v2951
        %v2953 = vpop.f32.mrf.mxu0
        %2954 = vmatprep.mubr.bf16.mxu0 0
        %2955 = vmatmul.mubr.bf16.gmra.mxu0 %v2837
        %v2956 = vpop.f32.mrf.mxu0
        %v2957 = vadd.f32 %v2864, %v2956
        %v2958 = vpop.f32.mrf.mxu0
        %v2959 = vpop.f32.mrf.mxu0
        %v2960 = vadd.f32 %v2864, %v2959
        %v2961 = vpop.f32.mrf.mxu0
        %2962 = vmatprep.mubr.bf16.mxu0 0
        %2963 = vmatmul.mubr.bf16.gmra.mxu0 %v2838
        %v2964 = vpop.f32.mrf.mxu0
        %v2965 = vadd.f32 %v2864, %v2964
        %v2966 = vpop.f32.mrf.mxu0
        %v2967 = vpop.f32.mrf.mxu0
        %v2968 = vadd.f32 %v2864, %v2967
        %v2969 = vpop.f32.mrf.mxu0
        %2970 = vmatprep.mubr.bf16.mxu0 0
        %2971 = vmatmul.mubr.bf16.gmra.mxu0 %v2839
        %v2972 = vpop.f32.mrf.mxu0
        %v2973 = vadd.f32 %v2864, %v2972
        %v2974 = vpop.f32.mrf.mxu0
        %v2975 = vpop.f32.mrf.mxu0
        %v2976 = vadd.f32 %v2864, %v2975
        %v2977 = vpop.f32.mrf.mxu0
        %2978 = vmatprep.mubr.bf16.mxu0 0
        %2979 = vmatmul.mubr.bf16.gmra.mxu0 %v2840
        %v2980 = vpop.f32.mrf.mxu0
        %v2981 = vadd.f32 %v2864, %v2980
        %v2982 = vpop.f32.mrf.mxu0
        %v2983 = vpop.f32.mrf.mxu0
        %v2984 = vadd.f32 %v2864, %v2983
        %v2985 = vpop.f32.mrf.mxu0
        %2986 = vdwg.mxu0
        %v2987 = vmax.f32 %v2949, 0.0
        %v2988 = vmax.f32 %v2952, 0.0
        %v2989 = vmax.f32 %v2957, 0.0
        %v2990 = vmax.f32 %v2960, 0.0
        %v2991 = vmax.f32 %v2965, 0.0
        %v2992 = vmax.f32 %v2968, 0.0
        %v2993 = vmax.f32 %v2973, 0.0
        %v2994 = vmax.f32 %v2976, 0.0
        %v2995 = vmax.f32 %v2981, 0.0
        %v2996 = vmax.f32 %v2984, 0.0
        %v2997 = vand.u32 2147483647, %v2949
        %v2998 = vand.u32 2147483647, %v2952
        %v2999 = vand.u32 2147483647, %v2957
        %v3000 = vand.u32 2147483647, %v2960
        %v3001 = vand.u32 2147483647, %v2965
        %v3002 = vand.u32 2147483647, %v2968
        %v3003 = vand.u32 2147483647, %v2973
        %v3004 = vand.u32 2147483647, %v2976
        %v3005 = vand.u32 2147483647, %v2981
        %v3006 = vand.u32 2147483647, %v2984
        %v3007 = vsub.f32 0.0, %v2997
        %v3008 = vsub.f32 0.0, %v2998
        %v3009 = vsub.f32 0.0, %v2999
        %v3010 = vsub.f32 0.0, %v3000
        %v3011 = vsub.f32 0.0, %v3001
        %v3012 = vsub.f32 0.0, %v3002
        %v3013 = vsub.f32 0.0, %v3003
        %v3014 = vsub.f32 0.0, %v3004
        %v3015 = vsub.f32 0.0, %v3005
        %v3016 = vsub.f32 0.0, %v3006
        %v3017 = vmul.f32 %v3007, 1.442695
        %v3018 = vpow.pop %v3017
        %v3019 = vmul.f32 %v3008, 1.442695
        %v3020 = vpow.pop %v3019
        %v3021 = vmul.f32 %v3009, 1.442695
        %v3022 = vpow.pop %v3021
        %v3023 = vmul.f32 %v3010, 1.442695
        %v3024 = vpow.pop %v3023
        %v3025 = vmul.f32 %v3011, 1.442695
        %v3026 = vpow.pop %v3025
        %v3027 = vmul.f32 %v3012, 1.442695
        %v3028 = vpow.pop %v3027
        %v3029 = vmul.f32 %v3013, 1.442695
        %v3030 = vpow.pop %v3029
        %v3031 = vmul.f32 %v3014, 1.442695
        %v3032 = vpow.pop %v3031
        %v3033 = vmul.f32 %v3015, 1.442695
        %v3034 = vpow.pop %v3033
        %v3035 = vmul.f32 %v3016, 1.442695
        %v3036 = vpow.pop %v3035
        %v3037 = vadd.f32 %v3018, 1.0
        %v3038 = vlog2.pop %v3037
        %v3039 = vmul.f32 %v3038, 0.6931472
        %v3040 = vmul.f32 -0.5, %v3018
        %v3041 = vadd.f32 %v3040, 1.0
        %v3042 = vmul.f32 %v3041, %v3018
        %v3043 = vand.u32 2147483647, %v3018
        %vm3044 = vcmp.lt.f32.partialorder %v3043, 0.0004427343
        %v3045 = vsel %vm3044, %v3042, %v3039
        %v3046 = vadd.f32 %v3020, 1.0
        %v3047 = vlog2.pop %v3046
        %v3048 = vmul.f32 %v3047, 0.6931472
        %v3049 = vmul.f32 -0.5, %v3020
        %v3050 = vadd.f32 %v3049, 1.0
        %v3051 = vmul.f32 %v3050, %v3020
        %v3052 = vand.u32 2147483647, %v3020
        %vm3053 = vcmp.lt.f32.partialorder %v3052, 0.0004427343
        %v3054 = vsel %vm3053, %v3051, %v3048
        %v3055 = vadd.f32 %v3022, 1.0
        %v3056 = vlog2.pop %v3055
        %v3057 = vmul.f32 %v3056, 0.6931472
        %v3058 = vmul.f32 -0.5, %v3022
        %v3059 = vadd.f32 %v3058, 1.0
        %v3060 = vmul.f32 %v3059, %v3022
        %v3061 = vand.u32 2147483647, %v3022
        %vm3062 = vcmp.lt.f32.partialorder %v3061, 0.0004427343
        %v3063 = vsel %vm3062, %v3060, %v3057
        %v3064 = vadd.f32 %v3024, 1.0
        %v3065 = vlog2.pop %v3064
        %v3066 = vmul.f32 %v3065, 0.6931472
        %v3067 = vmul.f32 -0.5, %v3024
        %v3068 = vadd.f32 %v3067, 1.0
        %v3069 = vmul.f32 %v3068, %v3024
        %v3070 = vand.u32 2147483647, %v3024
        %vm3071 = vcmp.lt.f32.partialorder %v3070, 0.0004427343
        %v3072 = vsel %vm3071, %v3069, %v3066
        %v3073 = vadd.f32 %v3026, 1.0
        %v3074 = vlog2.pop %v3073
        %v3075 = vmul.f32 %v3074, 0.6931472
        %v3076 = vmul.f32 -0.5, %v3026
        %v3077 = vadd.f32 %v3076, 1.0
        %v3078 = vmul.f32 %v3077, %v3026
        %v3079 = vand.u32 2147483647, %v3026
        %vm3080 = vcmp.lt.f32.partialorder %v3079, 0.0004427343
        %v3081 = vsel %vm3080, %v3078, %v3075
        %v3082 = vadd.f32 %v3028, 1.0
        %v3083 = vlog2.pop %v3082
        %v3084 = vmul.f32 %v3083, 0.6931472
        %v3085 = vmul.f32 -0.5, %v3028
        %v3086 = vadd.f32 %v3085, 1.0
        %v3087 = vmul.f32 %v3086, %v3028
        %v3088 = vand.u32 2147483647, %v3028
        %vm3089 = vcmp.lt.f32.partialorder %v3088, 0.0004427343
        %v3090 = vsel %vm3089, %v3087, %v3084
        %v3091 = vadd.f32 %v3030, 1.0
        %v3092 = vlog2.pop %v3091
        %v3093 = vmul.f32 %v3092, 0.6931472
        %v3094 = vmul.f32 -0.5, %v3030
        %v3095 = vadd.f32 %v3094, 1.0
        %v3096 = vmul.f32 %v3095, %v3030
        %v3097 = vand.u32 2147483647, %v3030
        %vm3098 = vcmp.lt.f32.partialorder %v3097, 0.0004427343
        %v3099 = vsel %vm3098, %v3096, %v3093
        %v3100 = vadd.f32 %v3032, 1.0
        %v3101 = vlog2.pop %v3100
        %v3102 = vmul.f32 %v3101, 0.6931472
        %v3103 = vmul.f32 -0.5, %v3032
        %v3104 = vadd.f32 %v3103, 1.0
        %v3105 = vmul.f32 %v3104, %v3032
        %v3106 = vand.u32 2147483647, %v3032
        %vm3107 = vcmp.lt.f32.partialorder %v3106, 0.0004427343
        %v3108 = vsel %vm3107, %v3105, %v3102
        %v3109 = vadd.f32 %v3034, 1.0
        %v3110 = vlog2.pop %v3109
        %v3111 = vmul.f32 %v3110, 0.6931472
        %v3112 = vmul.f32 -0.5, %v3034
        %v3113 = vadd.f32 %v3112, 1.0
        %v3114 = vmul.f32 %v3113, %v3034
        %v3115 = vand.u32 2147483647, %v3034
        %vm3116 = vcmp.lt.f32.partialorder %v3115, 0.0004427343
        %v3117 = vsel %vm3116, %v3114, %v3111
        %v3118 = vadd.f32 %v3036, 1.0
        %v3119 = vlog2.pop %v3118
        %v3120 = vmul.f32 %v3119, 0.6931472
        %v3121 = vmul.f32 -0.5, %v3036
        %v3122 = vadd.f32 %v3121, 1.0
        %v3123 = vmul.f32 %v3122, %v3036
        %v3124 = vand.u32 2147483647, %v3036
        %vm3125 = vcmp.lt.f32.partialorder %v3124, 0.0004427343
        %v3126 = vsel %vm3125, %v3123, %v3120
        %v3127 = vadd.f32 %v2987, %v3045
        %v3128 = vadd.f32 %v2988, %v3054
        %v3129 = vadd.f32 %v2989, %v3063
        %v3130 = vadd.f32 %v2990, %v3072
        %v3131 = vadd.f32 %v2991, %v3081
        %v3132 = vadd.f32 %v2992, %v3090
        %v3133 = vadd.f32 %v2993, %v3099
        %v3134 = vadd.f32 %v2994, %v3108
        %v3135 = vadd.f32 %v2995, %v3117
        %v3136 = vadd.f32 %v2996, %v3126
        %v3137 = vsub.f32 0.0, %v3127
        %v3138 = vsub.f32 0.0, %v3128
        %v3139 = vsub.f32 0.0, %v3129
        %v3140 = vsub.f32 0.0, %v3130
        %v3141 = vsub.f32 0.0, %v3131
        %v3142 = vsub.f32 0.0, %v3132
        %v3143 = vsub.f32 0.0, %v3133
        %v3144 = vsub.f32 0.0, %v3134
        %v3145 = vsub.f32 0.0, %v3135
        %v3146 = vsub.f32 0.0, %v3136
        %v3147 = vsel %vm301, %v3137, %v2949
        %v3148 = vsel %vm301, %v3138, %v2952
        %v3149 = vsel %vm301, %v3139, %v2957
        %v3150 = vsel %vm301, %v3140, %v2960
        %v3151 = vsel %vm301, %v3141, %v2965
        %v3152 = vsel %vm301, %v3142, %v2968
        %v3153 = vsel %vm301, %v3143, %v2973
        %v3154 = vsel %vm301, %v3144, %v2976
        %v3155 = vsel %vm301, %v3145, %v2981
        %v3156 = vsel %vm301, %v3146, %v2984
        %v3157 = vpack.c.bf16 %v3148, %v3147
        %v3158 = vpack.c.bf16 %v3150, %v3149
        %v3159 = vpack.c.bf16 %v3152, %v3151
        %v3160 = vpack.c.bf16 %v3154, %v3153
        %v3161 = vpack.c.bf16 %v3156, %v3155
        %s3162 = scalar_lea.vmem [#allocation2], 512
        %v3163 = vld [vmem:[%s3162] sm:$0xf]
        %v3164 = vld [vmem:[%s3162 + $0x4] sm:$0xf]
        %v3165 = vld [vmem:[%s3162 + $0x8] sm:$0xf]
        %v3166 = vld [vmem:[%s3162 + $0xc] sm:$0xf]
        %v3167 = vld [vmem:[%s3162 + $0x10] sm:$0xf]
        %v3168 = vld [vmem:[%s3162 + $0x14] sm:$0xf]
        %v3169 = vld [vmem:[%s3162 + $0x18] sm:$0xf]
        %v3170 = vld [vmem:[%s3162 + $0x1c] sm:$0xf]
        %v3171 = vld [vmem:[%s3162 + $0x20] sm:$0xf]
        %v3172 = vld [vmem:[%s3162 + $0x24] sm:$0xf]
        %v3173 = vld [vmem:[%s3162 + $0x28] sm:$0xf]
        %v3174 = vld [vmem:[%s3162 + $0x2c] sm:$0xf]
        %v3175 = vld [vmem:[%s3162 + $0x30] sm:$0xf]
        %v3176 = vld [vmem:[%s3162 + $0x34] sm:$0xf]
        %v3177 = vld [vmem:[%s3162 + $0x38] sm:$0xf]
        %v3178 = vld [vmem:[%s3162 + $0x3c] sm:$0xf]
        %s3179 = scalar_lea.vmem %s4, 8
        %v3180 = vld [vmem:[%s3179] sm:$0x1]
        %v3182 = vlaneseq
        %v3183 = vshrl.u32 %v3182, 7
        %v3184 = vsub.s32 0, %v3183
        %v3185 = vrot.slane %v3180, %v3184
        %v3203 = vunpack.c.l.b16 %v3163
        %v3204 = vunpack.c.l.b16 %v3164
        %v3205 = vunpack.c.l.b16 %v3165
        %v3206 = vunpack.c.l.b16 %v3166
        %v3207 = vunpack.c.l.b16 %v3167
        %v3208 = vunpack.c.l.b16 %v3168
        %v3209 = vunpack.c.l.b16 %v3169
        %v3210 = vunpack.c.l.b16 %v3170
        %v3211 = vunpack.c.l.b16 %v3171
        %v3212 = vunpack.c.l.b16 %v3172
        %v3213 = vunpack.c.l.b16 %v3173
        %v3214 = vunpack.c.l.b16 %v3174
        %v3215 = vunpack.c.l.b16 %v3175
        %v3216 = vunpack.c.l.b16 %v3176
        %v3217 = vunpack.c.l.b16 %v3177
        %v3218 = vunpack.c.l.b16 %v3178
        %v3219 = vpack.c.b16 %v3204, %v3203
        %v3220 = vpack.c.b16 %v3206, %v3205
        %v3221 = vpack.c.b16 %v3208, %v3207
        %v3222 = vpack.c.b16 %v3210, %v3209
        %v3223 = vpack.c.b16 %v3212, %v3211
        %v3224 = vpack.c.b16 %v3214, %v3213
        %v3225 = vpack.c.b16 %v3216, %v3215
        %v3226 = vpack.c.b16 %v3218, %v3217
        %3235 = vmatprep.subr.bf16.mxu0 0
        %3236 = vmatpush1.bf16.msra.mxu0 %v3226
        %3237 = vmatprep.subr.bf16.mxu0 0
        %3238 = vmatpush1.bf16.msra.mxu0 %v3225
        %3239 = vmatprep.subr.bf16.mxu0 0
        %3240 = vmatpush1.bf16.msra.mxu0 %v3224
        %3241 = vmatprep.subr.bf16.mxu0 0
        %3242 = vmatpush1.bf16.msra.mxu0 %v3223
        %3243 = vmatprep.subr.bf16.mxu0 0
        %3244 = vmatpush1.bf16.msra.mxu0 %v3222
        %3245 = vmatprep.subr.bf16.mxu0 0
        %3246 = vmatpush1.bf16.msra.mxu0 %v3221
        %3247 = vmatprep.subr.bf16.mxu0 0
        %3248 = vmatpush1.bf16.msra.mxu0 %v3220
        %3249 = vmatprep.subr.bf16.mxu0 0
        %3250 = vmatpush1.bf16.msra.mxu0 %v3219
        %3251 = vmatprep.subr.bf16.mxu0 0
        %3252 = vmatpush2.bf16.msra.mxu0 0
        %3253 = vmatprep.subr.bf16.mxu0 0
        %3254 = vmatpush2.bf16.msra.mxu0 0
        %3255 = vmatprep.subr.bf16.mxu0 0
        %3256 = vmatpush2.bf16.msra.mxu0 0
        %3257 = vmatprep.subr.bf16.mxu0 0
        %3258 = vmatpush2.bf16.msra.mxu0 0
        %3259 = vmatprep.subr.bf16.mxu0 0
        %3260 = vmatpush2.bf16.msra.mxu0 0
        %3261 = vmatprep.subr.bf16.mxu0 0
        %3262 = vmatpush2.bf16.msra.mxu0 0
        %3263 = vmatprep.subr.bf16.mxu0 0
        %3264 = vmatpush2.bf16.msra.mxu0 0
        %3265 = vmatprep.subr.bf16.mxu0 0
        %3266 = vmatpush2.bf16.msra.mxu0 0
        %3267 = vmatprep.mubr.bf16.mxu0 0
        %3268 = vmatmul.mubr.bf16.gmra.mxu0 %v3157
        %v3269 = vpop.f32.mrf.mxu0
        %v3270 = vadd.f32 %v3185, %v3269
        %v3271 = vpop.f32.mrf.mxu0
        %v3272 = vpop.f32.mrf.mxu0
        %v3273 = vadd.f32 %v3185, %v3272
        %v3274 = vpop.f32.mrf.mxu0
        %3275 = vmatprep.mubr.bf16.mxu0 0
        %3276 = vmatmul.mubr.bf16.gmra.mxu0 %v3158
        %v3277 = vpop.f32.mrf.mxu0
        %v3278 = vadd.f32 %v3185, %v3277
        %v3279 = vpop.f32.mrf.mxu0
        %v3280 = vpop.f32.mrf.mxu0
        %v3281 = vadd.f32 %v3185, %v3280
        %v3282 = vpop.f32.mrf.mxu0
        %3283 = vmatprep.mubr.bf16.mxu0 0
        %3284 = vmatmul.mubr.bf16.gmra.mxu0 %v3159
        %v3285 = vpop.f32.mrf.mxu0
        %v3286 = vadd.f32 %v3185, %v3285
        %v3287 = vpop.f32.mrf.mxu0
        %v3288 = vpop.f32.mrf.mxu0
        %v3289 = vadd.f32 %v3185, %v3288
        %v3290 = vpop.f32.mrf.mxu0
        %3291 = vmatprep.mubr.bf16.mxu0 0
        %3292 = vmatmul.mubr.bf16.gmra.mxu0 %v3160
        %v3293 = vpop.f32.mrf.mxu0
        %v3294 = vadd.f32 %v3185, %v3293
        %v3295 = vpop.f32.mrf.mxu0
        %v3296 = vpop.f32.mrf.mxu0
        %v3297 = vadd.f32 %v3185, %v3296
        %v3298 = vpop.f32.mrf.mxu0
        %3299 = vmatprep.mubr.bf16.mxu0 0
        %3300 = vmatmul.mubr.bf16.gmra.mxu0 %v3161
        %v3301 = vpop.f32.mrf.mxu0
        %v3302 = vadd.f32 %v3185, %v3301
        %v3303 = vpop.f32.mrf.mxu0
        %v3304 = vpop.f32.mrf.mxu0
        %v3305 = vadd.f32 %v3185, %v3304
        %v3306 = vpop.f32.mrf.mxu0
        %3307 = vdwg.mxu0
        %v3308 = vmax.f32 %v3270, 0.0
        %v3309 = vmax.f32 %v3273, 0.0
        %v3310 = vmax.f32 %v3278, 0.0
        %v3311 = vmax.f32 %v3281, 0.0
        %v3312 = vmax.f32 %v3286, 0.0
        %v3313 = vmax.f32 %v3289, 0.0
        %v3314 = vmax.f32 %v3294, 0.0
        %v3315 = vmax.f32 %v3297, 0.0
        %v3316 = vmax.f32 %v3302, 0.0
        %v3317 = vmax.f32 %v3305, 0.0
        %v3318 = vand.u32 2147483647, %v3270
        %v3319 = vand.u32 2147483647, %v3273
        %v3320 = vand.u32 2147483647, %v3278
        %v3321 = vand.u32 2147483647, %v3281
        %v3322 = vand.u32 2147483647, %v3286
        %v3323 = vand.u32 2147483647, %v3289
        %v3324 = vand.u32 2147483647, %v3294
        %v3325 = vand.u32 2147483647, %v3297
        %v3326 = vand.u32 2147483647, %v3302
        %v3327 = vand.u32 2147483647, %v3305
        %v3328 = vsub.f32 0.0, %v3318
        %v3329 = vsub.f32 0.0, %v3319
        %v3330 = vsub.f32 0.0, %v3320
        %v3331 = vsub.f32 0.0, %v3321
        %v3332 = vsub.f32 0.0, %v3322
        %v3333 = vsub.f32 0.0, %v3323
        %v3334 = vsub.f32 0.0, %v3324
        %v3335 = vsub.f32 0.0, %v3325
        %v3336 = vsub.f32 0.0, %v3326
        %v3337 = vsub.f32 0.0, %v3327
        %v3338 = vmul.f32 %v3328, 1.442695
        %v3339 = vpow.pop %v3338
        %v3340 = vmul.f32 %v3329, 1.442695
        %v3341 = vpow.pop %v3340
        %v3342 = vmul.f32 %v3330, 1.442695
        %v3343 = vpow.pop %v3342
        %v3344 = vmul.f32 %v3331, 1.442695
        %v3345 = vpow.pop %v3344
        %v3346 = vmul.f32 %v3332, 1.442695
        %v3347 = vpow.pop %v3346
        %v3348 = vmul.f32 %v3333, 1.442695
        %v3349 = vpow.pop %v3348
        %v3350 = vmul.f32 %v3334, 1.442695
        %v3351 = vpow.pop %v3350
        %v3352 = vmul.f32 %v3335, 1.442695
        %v3353 = vpow.pop %v3352
        %v3354 = vmul.f32 %v3336, 1.442695
        %v3355 = vpow.pop %v3354
        %v3356 = vmul.f32 %v3337, 1.442695
        %v3357 = vpow.pop %v3356
        %v3358 = vadd.f32 %v3339, 1.0
        %v3359 = vlog2.pop %v3358
        %v3360 = vmul.f32 %v3359, 0.6931472
        %v3361 = vmul.f32 -0.5, %v3339
        %v3362 = vadd.f32 %v3361, 1.0
        %v3363 = vmul.f32 %v3362, %v3339
        %v3364 = vand.u32 2147483647, %v3339
        %vm3365 = vcmp.lt.f32.partialorder %v3364, 0.0004427343
        %v3366 = vsel %vm3365, %v3363, %v3360
        %v3367 = vadd.f32 %v3341, 1.0
        %v3368 = vlog2.pop %v3367
        %v3369 = vmul.f32 %v3368, 0.6931472
        %v3370 = vmul.f32 -0.5, %v3341
        %v3371 = vadd.f32 %v3370, 1.0
        %v3372 = vmul.f32 %v3371, %v3341
        %v3373 = vand.u32 2147483647, %v3341
        %vm3374 = vcmp.lt.f32.partialorder %v3373, 0.0004427343
        %v3375 = vsel %vm3374, %v3372, %v3369
        %v3376 = vadd.f32 %v3343, 1.0
        %v3377 = vlog2.pop %v3376
        %v3378 = vmul.f32 %v3377, 0.6931472
        %v3379 = vmul.f32 -0.5, %v3343
        %v3380 = vadd.f32 %v3379, 1.0
        %v3381 = vmul.f32 %v3380, %v3343
        %v3382 = vand.u32 2147483647, %v3343
        %vm3383 = vcmp.lt.f32.partialorder %v3382, 0.0004427343
        %v3384 = vsel %vm3383, %v3381, %v3378
        %v3385 = vadd.f32 %v3345, 1.0
        %v3386 = vlog2.pop %v3385
        %v3387 = vmul.f32 %v3386, 0.6931472
        %v3388 = vmul.f32 -0.5, %v3345
        %v3389 = vadd.f32 %v3388, 1.0
        %v3390 = vmul.f32 %v3389, %v3345
        %v3391 = vand.u32 2147483647, %v3345
        %vm3392 = vcmp.lt.f32.partialorder %v3391, 0.0004427343
        %v3393 = vsel %vm3392, %v3390, %v3387
        %v3394 = vadd.f32 %v3347, 1.0
        %v3395 = vlog2.pop %v3394
        %v3396 = vmul.f32 %v3395, 0.6931472
        %v3397 = vmul.f32 -0.5, %v3347
        %v3398 = vadd.f32 %v3397, 1.0
        %v3399 = vmul.f32 %v3398, %v3347
        %v3400 = vand.u32 2147483647, %v3347
        %vm3401 = vcmp.lt.f32.partialorder %v3400, 0.0004427343
        %v3402 = vsel %vm3401, %v3399, %v3396
        %v3403 = vadd.f32 %v3349, 1.0
        %v3404 = vlog2.pop %v3403
        %v3405 = vmul.f32 %v3404, 0.6931472
        %v3406 = vmul.f32 -0.5, %v3349
        %v3407 = vadd.f32 %v3406, 1.0
        %v3408 = vmul.f32 %v3407, %v3349
        %v3409 = vand.u32 2147483647, %v3349
        %vm3410 = vcmp.lt.f32.partialorder %v3409, 0.0004427343
        %v3411 = vsel %vm3410, %v3408, %v3405
        %v3412 = vadd.f32 %v3351, 1.0
        %v3413 = vlog2.pop %v3412
        %v3414 = vmul.f32 %v3413, 0.6931472
        %v3415 = vmul.f32 -0.5, %v3351
        %v3416 = vadd.f32 %v3415, 1.0
        %v3417 = vmul.f32 %v3416, %v3351
        %v3418 = vand.u32 2147483647, %v3351
        %vm3419 = vcmp.lt.f32.partialorder %v3418, 0.0004427343
        %v3420 = vsel %vm3419, %v3417, %v3414
        %v3421 = vadd.f32 %v3353, 1.0
        %v3422 = vlog2.pop %v3421
        %v3423 = vmul.f32 %v3422, 0.6931472
        %v3424 = vmul.f32 -0.5, %v3353
        %v3425 = vadd.f32 %v3424, 1.0
        %v3426 = vmul.f32 %v3425, %v3353
        %v3427 = vand.u32 2147483647, %v3353
        %vm3428 = vcmp.lt.f32.partialorder %v3427, 0.0004427343
        %v3429 = vsel %vm3428, %v3426, %v3423
        %v3430 = vadd.f32 %v3355, 1.0
        %v3431 = vlog2.pop %v3430
        %v3432 = vmul.f32 %v3431, 0.6931472
        %v3433 = vmul.f32 -0.5, %v3355
        %v3434 = vadd.f32 %v3433, 1.0
        %v3435 = vmul.f32 %v3434, %v3355
        %v3436 = vand.u32 2147483647, %v3355
        %vm3437 = vcmp.lt.f32.partialorder %v3436, 0.0004427343
        %v3438 = vsel %vm3437, %v3435, %v3432
        %v3439 = vadd.f32 %v3357, 1.0
        %v3440 = vlog2.pop %v3439
        %v3441 = vmul.f32 %v3440, 0.6931472
        %v3442 = vmul.f32 -0.5, %v3357
        %v3443 = vadd.f32 %v3442, 1.0
        %v3444 = vmul.f32 %v3443, %v3357
        %v3445 = vand.u32 2147483647, %v3357
        %vm3446 = vcmp.lt.f32.partialorder %v3445, 0.0004427343
        %v3447 = vsel %vm3446, %v3444, %v3441
        %v3448 = vadd.f32 %v3308, %v3366
        %v3449 = vadd.f32 %v3309, %v3375
        %v3450 = vadd.f32 %v3310, %v3384
        %v3451 = vadd.f32 %v3311, %v3393
        %v3452 = vadd.f32 %v3312, %v3402
        %v3453 = vadd.f32 %v3313, %v3411
        %v3454 = vadd.f32 %v3314, %v3420
        %v3455 = vadd.f32 %v3315, %v3429
        %v3456 = vadd.f32 %v3316, %v3438
        %v3457 = vadd.f32 %v3317, %v3447
        %v3458 = vsub.f32 0.0, %v3448
        %v3459 = vsub.f32 0.0, %v3449
        %v3460 = vsub.f32 0.0, %v3450
        %v3461 = vsub.f32 0.0, %v3451
        %v3462 = vsub.f32 0.0, %v3452
        %v3463 = vsub.f32 0.0, %v3453
        %v3464 = vsub.f32 0.0, %v3454
        %v3465 = vsub.f32 0.0, %v3455
        %v3466 = vsub.f32 0.0, %v3456
        %v3467 = vsub.f32 0.0, %v3457
        %v3468 = vsel %vm301, %v3458, %v3270
        %v3469 = vsel %vm301, %v3459, %v3273
        %v3470 = vsel %vm301, %v3460, %v3278
        %v3471 = vsel %vm301, %v3461, %v3281
        %v3472 = vsel %vm301, %v3462, %v3286
        %v3473 = vsel %vm301, %v3463, %v3289
        %v3474 = vsel %vm301, %v3464, %v3294
        %v3475 = vsel %vm301, %v3465, %v3297
        %v3476 = vsel %vm301, %v3466, %v3302
        %v3477 = vsel %vm301, %v3467, %v3305
        %v3478 = vpack.c.bf16 %v3469, %v3468
        %v3479 = vpack.c.bf16 %v3471, %v3470
        %v3480 = vpack.c.bf16 %v3473, %v3472
        %v3481 = vpack.c.bf16 %v3475, %v3474
        %v3482 = vpack.c.bf16 %v3477, %v3476
        %v3483 = vld [vmem:[%s5] sm:$0xf]
        %v3484 = vld [vmem:[%s5 + $0x4] sm:$0xf]
        %v3485 = vld [vmem:[%s5 + $0x8] sm:$0xf]
        %v3486 = vld [vmem:[%s5 + $0xc] sm:$0xf]
        %v3487 = vld [vmem:[%s5 + $0x10] sm:$0xf]
        %v3488 = vld [vmem:[%s5 + $0x14] sm:$0xf]
        %v3489 = vld [vmem:[%s5 + $0x18] sm:$0xf]
        %v3490 = vld [vmem:[%s5 + $0x1c] sm:$0xf]
        %v3491 = vld [vmem:[%s5 + $0x20] sm:$0xf]
        %v3492 = vld [vmem:[%s5 + $0x24] sm:$0xf]
        %v3493 = vld [vmem:[%s5 + $0x28] sm:$0xf]
        %v3494 = vld [vmem:[%s5 + $0x2c] sm:$0xf]
        %v3495 = vld [vmem:[%s5 + $0x30] sm:$0xf]
        %v3496 = vld [vmem:[%s5 + $0x34] sm:$0xf]
        %v3497 = vld [vmem:[%s5 + $0x38] sm:$0xf]
        %v3498 = vld [vmem:[%s5 + $0x3c] sm:$0xf]
        %v3499 = vld [vmem:[%s6] sm:$0x1]
        %v3501 = vlaneseq
        %v3502 = vshrl.u32 %v3501, 7
        %v3503 = vsub.s32 0, %v3502
        %v3504 = vrot.slane %v3499, %v3503
        %v3522 = vunpack.c.l.b16 %v3483
        %v3523 = vunpack.c.l.b16 %v3484
        %v3524 = vunpack.c.l.b16 %v3485
        %v3525 = vunpack.c.l.b16 %v3486
        %v3526 = vunpack.c.l.b16 %v3487
        %v3527 = vunpack.c.l.b16 %v3488
        %v3528 = vunpack.c.l.b16 %v3489
        %v3529 = vunpack.c.l.b16 %v3490
        %v3530 = vunpack.c.l.b16 %v3491
        %v3531 = vunpack.c.l.b16 %v3492
        %v3532 = vunpack.c.l.b16 %v3493
        %v3533 = vunpack.c.l.b16 %v3494
        %v3534 = vunpack.c.l.b16 %v3495
        %v3535 = vunpack.c.l.b16 %v3496
        %v3536 = vunpack.c.l.b16 %v3497
        %v3537 = vunpack.c.l.b16 %v3498
        %v3538 = vpack.c.b16 %v3523, %v3522
        %v3539 = vpack.c.b16 %v3525, %v3524
        %v3540 = vpack.c.b16 %v3527, %v3526
        %v3541 = vpack.c.b16 %v3529, %v3528
        %v3542 = vpack.c.b16 %v3531, %v3530
        %v3543 = vpack.c.b16 %v3533, %v3532
        %v3544 = vpack.c.b16 %v3535, %v3534
        %v3545 = vpack.c.b16 %v3537, %v3536
        %3554 = vmatprep.subr.bf16.mxu0 0
        %3555 = vmatpush1.bf16.msra.mxu0 %v3545
        %3556 = vmatprep.subr.bf16.mxu0 0
        %3557 = vmatpush1.bf16.msra.mxu0 %v3544
        %3558 = vmatprep.subr.bf16.mxu0 0
        %3559 = vmatpush1.bf16.msra.mxu0 %v3543
        %3560 = vmatprep.subr.bf16.mxu0 0
        %3561 = vmatpush1.bf16.msra.mxu0 %v3542
        %3562 = vmatprep.subr.bf16.mxu0 0
        %3563 = vmatpush1.bf16.msra.mxu0 %v3541
        %3564 = vmatprep.subr.bf16.mxu0 0
        %3565 = vmatpush1.bf16.msra.mxu0 %v3540
        %3566 = vmatprep.subr.bf16.mxu0 0
        %3567 = vmatpush1.bf16.msra.mxu0 %v3539
        %3568 = vmatprep.subr.bf16.mxu0 0
        %3569 = vmatpush1.bf16.msra.mxu0 %v3538
        %3570 = vmatprep.subr.bf16.mxu0 0
        %3571 = vmatpush2.bf16.msra.mxu0 0
        %3572 = vmatprep.subr.bf16.mxu0 0
        %3573 = vmatpush2.bf16.msra.mxu0 0
        %3574 = vmatprep.subr.bf16.mxu0 0
        %3575 = vmatpush2.bf16.msra.mxu0 0
        %3576 = vmatprep.subr.bf16.mxu0 0
        %3577 = vmatpush2.bf16.msra.mxu0 0
        %3578 = vmatprep.subr.bf16.mxu0 0
        %3579 = vmatpush2.bf16.msra.mxu0 0
        %3580 = vmatprep.subr.bf16.mxu0 0
        %3581 = vmatpush2.bf16.msra.mxu0 0
        %3582 = vmatprep.subr.bf16.mxu0 0
        %3583 = vmatpush2.bf16.msra.mxu0 0
        %3584 = vmatprep.subr.bf16.mxu0 0
        %3585 = vmatpush2.bf16.msra.mxu0 0
        %3586 = vmatprep.mubr.bf16.mxu0 0
        %3587 = vmatmul.mubr.bf16.gmra.mxu0 %v3478
        %v3588 = vpop.f32.mrf.mxu0
        %v3589 = vadd.f32 %v3504, %v3588
        %v3590 = vpop.f32.mrf.mxu0
        %v3591 = vpop.f32.mrf.mxu0
        %v3592 = vadd.f32 %v3504, %v3591
        %v3593 = vpop.f32.mrf.mxu0
        %3594 = vmatprep.mubr.bf16.mxu0 0
        %3595 = vmatmul.mubr.bf16.gmra.mxu0 %v3479
        %v3596 = vpop.f32.mrf.mxu0
        %v3597 = vadd.f32 %v3504, %v3596
        %v3598 = vpop.f32.mrf.mxu0
        %v3599 = vpop.f32.mrf.mxu0
        %v3600 = vadd.f32 %v3504, %v3599
        %v3601 = vpop.f32.mrf.mxu0
        %3602 = vmatprep.mubr.bf16.mxu0 0
        %3603 = vmatmul.mubr.bf16.gmra.mxu0 %v3480
        %v3604 = vpop.f32.mrf.mxu0
        %v3605 = vadd.f32 %v3504, %v3604
        %v3606 = vpop.f32.mrf.mxu0
        %v3607 = vpop.f32.mrf.mxu0
        %v3608 = vadd.f32 %v3504, %v3607
        %v3609 = vpop.f32.mrf.mxu0
        %3610 = vmatprep.mubr.bf16.mxu0 0
        %3611 = vmatmul.mubr.bf16.gmra.mxu0 %v3481
        %v3612 = vpop.f32.mrf.mxu0
        %v3613 = vadd.f32 %v3504, %v3612
        %v3614 = vpop.f32.mrf.mxu0
        %v3615 = vpop.f32.mrf.mxu0
        %v3616 = vadd.f32 %v3504, %v3615
        %v3617 = vpop.f32.mrf.mxu0
        %3618 = vmatprep.mubr.bf16.mxu0 0
        %3619 = vmatmul.mubr.bf16.gmra.mxu0 %v3482
        %v3620 = vpop.f32.mrf.mxu0
        %v3621 = vadd.f32 %v3504, %v3620
        %v3622 = vpop.f32.mrf.mxu0
        %v3623 = vpop.f32.mrf.mxu0
        %v3624 = vadd.f32 %v3504, %v3623
        %v3625 = vpop.f32.mrf.mxu0
        %3626 = vdwg.mxu0
        %v3627 = vmax.f32 %v3589, 0.0
        %v3628 = vmax.f32 %v3592, 0.0
        %v3629 = vmax.f32 %v3597, 0.0
        %v3630 = vmax.f32 %v3600, 0.0
        %v3631 = vmax.f32 %v3605, 0.0
        %v3632 = vmax.f32 %v3608, 0.0
        %v3633 = vmax.f32 %v3613, 0.0
        %v3634 = vmax.f32 %v3616, 0.0
        %v3635 = vmax.f32 %v3621, 0.0
        %v3636 = vmax.f32 %v3624, 0.0
        %v3637 = vand.u32 2147483647, %v3589
        %v3638 = vand.u32 2147483647, %v3592
        %v3639 = vand.u32 2147483647, %v3597
        %v3640 = vand.u32 2147483647, %v3600
        %v3641 = vand.u32 2147483647, %v3605
        %v3642 = vand.u32 2147483647, %v3608
        %v3643 = vand.u32 2147483647, %v3613
        %v3644 = vand.u32 2147483647, %v3616
        %v3645 = vand.u32 2147483647, %v3621
        %v3646 = vand.u32 2147483647, %v3624
        %v3647 = vsub.f32 0.0, %v3637
        %v3648 = vsub.f32 0.0, %v3638
        %v3649 = vsub.f32 0.0, %v3639
        %v3650 = vsub.f32 0.0, %v3640
        %v3651 = vsub.f32 0.0, %v3641
        %v3652 = vsub.f32 0.0, %v3642
        %v3653 = vsub.f32 0.0, %v3643
        %v3654 = vsub.f32 0.0, %v3644
        %v3655 = vsub.f32 0.0, %v3645
        %v3656 = vsub.f32 0.0, %v3646
        %v3657 = vmul.f32 %v3647, 1.442695
        %v3658 = vpow.pop %v3657
        %v3659 = vmul.f32 %v3648, 1.442695
        %v3660 = vpow.pop %v3659
        %v3661 = vmul.f32 %v3649, 1.442695
        %v3662 = vpow.pop %v3661
        %v3663 = vmul.f32 %v3650, 1.442695
        %v3664 = vpow.pop %v3663
        %v3665 = vmul.f32 %v3651, 1.442695
        %v3666 = vpow.pop %v3665
        %v3667 = vmul.f32 %v3652, 1.442695
        %v3668 = vpow.pop %v3667
        %v3669 = vmul.f32 %v3653, 1.442695
        %v3670 = vpow.pop %v3669
        %v3671 = vmul.f32 %v3654, 1.442695
        %v3672 = vpow.pop %v3671
        %v3673 = vmul.f32 %v3655, 1.442695
        %v3674 = vpow.pop %v3673
        %v3675 = vmul.f32 %v3656, 1.442695
        %v3676 = vpow.pop %v3675
        %v3677 = vadd.f32 %v3658, 1.0
        %v3678 = vlog2.pop %v3677
        %v3679 = vmul.f32 %v3678, 0.6931472
        %v3680 = vmul.f32 -0.5, %v3658
        %v3681 = vadd.f32 %v3680, 1.0
        %v3682 = vmul.f32 %v3681, %v3658
        %v3683 = vand.u32 2147483647, %v3658
        %vm3684 = vcmp.lt.f32.partialorder %v3683, 0.0004427343
        %v3685 = vsel %vm3684, %v3682, %v3679
        %v3686 = vadd.f32 %v3660, 1.0
        %v3687 = vlog2.pop %v3686
        %v3688 = vmul.f32 %v3687, 0.6931472
        %v3689 = vmul.f32 -0.5, %v3660
        %v3690 = vadd.f32 %v3689, 1.0
        %v3691 = vmul.f32 %v3690, %v3660
        %v3692 = vand.u32 2147483647, %v3660
        %vm3693 = vcmp.lt.f32.partialorder %v3692, 0.0004427343
        %v3694 = vsel %vm3693, %v3691, %v3688
        %v3695 = vadd.f32 %v3662, 1.0
        %v3696 = vlog2.pop %v3695
        %v3697 = vmul.f32 %v3696, 0.6931472
        %v3698 = vmul.f32 -0.5, %v3662
        %v3699 = vadd.f32 %v3698, 1.0
        %v3700 = vmul.f32 %v3699, %v3662
        %v3701 = vand.u32 2147483647, %v3662
        %vm3702 = vcmp.lt.f32.partialorder %v3701, 0.0004427343
        %v3703 = vsel %vm3702, %v3700, %v3697
        %v3704 = vadd.f32 %v3664, 1.0
        %v3705 = vlog2.pop %v3704
        %v3706 = vmul.f32 %v3705, 0.6931472
        %v3707 = vmul.f32 -0.5, %v3664
        %v3708 = vadd.f32 %v3707, 1.0
        %v3709 = vmul.f32 %v3708, %v3664
        %v3710 = vand.u32 2147483647, %v3664
        %vm3711 = vcmp.lt.f32.partialorder %v3710, 0.0004427343
        %v3712 = vsel %vm3711, %v3709, %v3706
        %v3713 = vadd.f32 %v3666, 1.0
        %v3714 = vlog2.pop %v3713
        %v3715 = vmul.f32 %v3714, 0.6931472
        %v3716 = vmul.f32 -0.5, %v3666
        %v3717 = vadd.f32 %v3716, 1.0
        %v3718 = vmul.f32 %v3717, %v3666
        %v3719 = vand.u32 2147483647, %v3666
        %vm3720 = vcmp.lt.f32.partialorder %v3719, 0.0004427343
        %v3721 = vsel %vm3720, %v3718, %v3715
        %v3722 = vadd.f32 %v3668, 1.0
        %v3723 = vlog2.pop %v3722
        %v3724 = vmul.f32 %v3723, 0.6931472
        %v3725 = vmul.f32 -0.5, %v3668
        %v3726 = vadd.f32 %v3725, 1.0
        %v3727 = vmul.f32 %v3726, %v3668
        %v3728 = vand.u32 2147483647, %v3668
        %vm3729 = vcmp.lt.f32.partialorder %v3728, 0.0004427343
        %v3730 = vsel %vm3729, %v3727, %v3724
        %v3731 = vadd.f32 %v3670, 1.0
        %v3732 = vlog2.pop %v3731
        %v3733 = vmul.f32 %v3732, 0.6931472
        %v3734 = vmul.f32 -0.5, %v3670
        %v3735 = vadd.f32 %v3734, 1.0
        %v3736 = vmul.f32 %v3735, %v3670
        %v3737 = vand.u32 2147483647, %v3670
        %vm3738 = vcmp.lt.f32.partialorder %v3737, 0.0004427343
        %v3739 = vsel %vm3738, %v3736, %v3733
        %v3740 = vadd.f32 %v3672, 1.0
        %v3741 = vlog2.pop %v3740
        %v3742 = vmul.f32 %v3741, 0.6931472
        %v3743 = vmul.f32 -0.5, %v3672
        %v3744 = vadd.f32 %v3743, 1.0
        %v3745 = vmul.f32 %v3744, %v3672
        %v3746 = vand.u32 2147483647, %v3672
        %vm3747 = vcmp.lt.f32.partialorder %v3746, 0.0004427343
        %v3748 = vsel %vm3747, %v3745, %v3742
        %v3749 = vadd.f32 %v3674, 1.0
        %v3750 = vlog2.pop %v3749
        %v3751 = vmul.f32 %v3750, 0.6931472
        %v3752 = vmul.f32 -0.5, %v3674
        %v3753 = vadd.f32 %v3752, 1.0
        %v3754 = vmul.f32 %v3753, %v3674
        %v3755 = vand.u32 2147483647, %v3674
        %vm3756 = vcmp.lt.f32.partialorder %v3755, 0.0004427343
        %v3757 = vsel %vm3756, %v3754, %v3751
        %v3758 = vadd.f32 %v3676, 1.0
        %v3759 = vlog2.pop %v3758
        %v3760 = vmul.f32 %v3759, 0.6931472
        %v3761 = vmul.f32 -0.5, %v3676
        %v3762 = vadd.f32 %v3761, 1.0
        %v3763 = vmul.f32 %v3762, %v3676
        %v3764 = vand.u32 2147483647, %v3676
        %vm3765 = vcmp.lt.f32.partialorder %v3764, 0.0004427343
        %v3766 = vsel %vm3765, %v3763, %v3760
        %v3767 = vadd.f32 %v3627, %v3685
        %v3768 = vadd.f32 %v3628, %v3694
        %v3769 = vadd.f32 %v3629, %v3703
        %v3770 = vadd.f32 %v3630, %v3712
        %v3771 = vadd.f32 %v3631, %v3721
        %v3772 = vadd.f32 %v3632, %v3730
        %v3773 = vadd.f32 %v3633, %v3739
        %v3774 = vadd.f32 %v3634, %v3748
        %v3775 = vadd.f32 %v3635, %v3757
        %v3776 = vadd.f32 %v3636, %v3766
        %v3777 = vsub.f32 0.0, %v3767
        %v3778 = vsub.f32 0.0, %v3768
        %v3779 = vsub.f32 0.0, %v3769
        %v3780 = vsub.f32 0.0, %v3770
        %v3781 = vsub.f32 0.0, %v3771
        %v3782 = vsub.f32 0.0, %v3772
        %v3783 = vsub.f32 0.0, %v3773
        %v3784 = vsub.f32 0.0, %v3774
        %v3785 = vsub.f32 0.0, %v3775
        %v3786 = vsub.f32 0.0, %v3776
        %vm3787 = vcmask 15360
        %3788 = vst.msk [vmem:[%s295] sm:$0xff] %vm3787, %v3777
        %3789 = vst.msk [vmem:[%s295 + $0x8] sm:$0xff] %vm3787, %v3778
        %3790 = vst.msk [vmem:[%s295 + $0x10] sm:$0xff] %vm3787, %v3779
        %3791 = vst.msk [vmem:[%s295 + $0x18] sm:$0xff] %vm3787, %v3780
        %3792 = vst.msk [vmem:[%s295 + $0x20] sm:$0xff] %vm3787, %v3781
        %3793 = vst.msk [vmem:[%s295 + $0x28] sm:$0xff] %vm3787, %v3782
        %3794 = vst.msk [vmem:[%s295 + $0x30] sm:$0xff] %vm3787, %v3783
        %3795 = vst.msk [vmem:[%s295 + $0x38] sm:$0xff] %vm3787, %v3784
        %3796 = vst.msk [vmem:[%s295 + $0x40] sm:$0xff] %vm3787, %v3785
        %3797 = vst.msk [vmem:[%s295 + $0x48] sm:$0xff] %vm3787, %v3786
        %s3798 = smul.u32 10, %s19
        %p3799 = scmp.lt.s32.totalorder %s3798, 19
        %s3800 = scalar_select %p3799, %s3798, 19
        %s3801 = smul.addr %s3800, 8
        %s3802 = scalar_lea.vmem %s7, %s3801
        // Predicated region
        $region53: #{tpu_custom_call.1} parent=47 // pred_check
          %p3803 = pneg %p189
        $region54: #{tpu_custom_call.1} parent=47 // pred_check_branch
          %3805 = sbr.rel (%p3803) target = $region56
        $region55: #{tpu_custom_call.1} parent=47 // pred_region
          %s3806 = smul.u32 10, %s19
        $region56: #{tpu_custom_call.1} parent=47 // pred_fallthru
          _
      $region48: #{tpu_custom_call.1} parent=5 // pred_fallthru
        _
      %p3807 = scmp.le.s32.totalorder 2, %s14
      // Predicated region
      $region57: #{tpu_custom_call.1} parent=5 // pred_check
        %p3808 = pneg %p3807
      $region58: #{tpu_custom_call.1} parent=5 // pred_check_branch
        %3810 = sbr.rel (%p3808) target = $region60
      $region59: #{tpu_custom_call.1} parent=5 // pred_region
        %s3811 = ssub.s32 %s14, 2
        // Predicated region
        $region61: #{tpu_custom_call.1} parent=59 // pred_check
          %p3812 = pneg %p195
        $region62: #{tpu_custom_call.1} parent=59 // pred_check_branch
          %3814 = sbr.rel (%p3812) target = $region64
        $region63: #{tpu_custom_call.1} parent=59 // pred_region
          %s3815 = smul.u32 10, %s20
          %p3816 = scmp.lt.s32.totalorder %s3815, 19
          %s3817 = scalar_select %p3816, %s3815, 19
          %s3818 = smul.addr %s3817, 8
          %s3819 = scalar_lea.vmem %s7, %s3818
        $region64: #{tpu_custom_call.1} parent=59 // pred_fallthru
          _
      $region60: #{tpu_custom_call.1} parent=5 // pred_fallthru
        _
    $region6: #{tpu_custom_call.1} parent=1 // loop_footer
      %s18 = sadd.s32 1, %s14
    $region7: #{tpu_custom_call.1} parent=1 // loop_footer_branch
      %13 = sbr.rel target = $region3
    $region8: #{tpu_custom_call.1} parent=1 // loop_exit
      _
    %3820 = vsyncpa [#allocation3], 1
    %s3821 = scalar_lea.sflag [#allocation3], 1
    %3822 = vsyncpa %s3821, 1

</llo_original>
